<compile_context>
chip_gen: v7x
topology: tpu7x:2x2x1
jax: 0.10.0
libtpu: 0.0.40
codegen_flags: <defaults>
</compile_context>

<pallas_src>
import numpy as np
import jax
import jax.numpy as jnp
from jax import lax
from jax.experimental import pallas as pl
from jax.experimental.pallas import tpu as pltpu


# ---------------------------------------------------------------------------
# deterministic "parameter" setup (mirrors _fspecial_gauss_1d in __init__)
# ---------------------------------------------------------------------------
def _fspecial_gauss_1d(size: int, sigma: float) -> np.ndarray:
    coords = np.arange(size, dtype=np.float32)
    coords -= size // 2
    g = np.exp(-(coords ** 2) / (2.0 * sigma ** 2))
    g /= g.sum()
    return g.astype(np.float32)


def _divisors(n: int):
    return [d for d in range(1, n + 1) if n % d == 0]


def _tiles(total: int, tile: int):
    out, p = [], 0
    while p < total:
        n = min(tile, total - p)
        out.append((p, n))
        p += n
    return out


def _vmem_capacity_bytes() -> int:
    try:
        return int(pltpu.get_tpu_info().vmem_capacity_bytes)
    except Exception:
        return 64 << 20        # conservative (v7x per-TensorCore)


# ---------------------------------------------------------------------------
# Pallas kernel builder: one SSIM level.
# Grid = (nc // B,), B images per step.  Per step it computes the 5 separable
# Gaussian filters (banded MXU matmuls, W pass fused across components and
# batch), the cs / ssim maps, their spatial means, and (except at the last
# level) the fused 2x2 avg-pooled images for the next level.
# ---------------------------------------------------------------------------
def _build_level_call(nc, h, w, win, c1, c2, *, emit_pool, filter_tile, vmem_cap):
    win = np.asarray(win, np.float32).reshape(-1)
    ws = int(win.shape[0])
    hp, wp = h - ws + 1, w - ws + 1
    assert hp >= 1 and wp >= 1, "spatial dims smaller than Gaussian window"

    # avg_pool2d(kernel=2, stride=2, padding=s%2, count_include_pad=True)
    pad_h, pad_w = h % 2, w % 2
    h2, w2 = (h + 2 * pad_h) // 2, (w + 2 * pad_w) // 2

    # --- banded Toeplitz taps: one small band reused for every output tile --
    tn = max(1, min(int(filter_tile), wp))       # W-pass output-column tile
    tm = max(1, min(int(filter_tile), hp))       # H-pass output-row tile
    bw_mat = np.zeros((tn + ws - 1, tn), np.float32)    # right-multiply band
    for j in range(tn):
        bw_mat[j:j + ws, j] = win
    bh_mat = np.zeros((tm, tm + ws - 1), np.float32)    # left-multiply band
    for i in range(tm):
        bh_mat[i, i:i + ws] = win
    w_tiles = _tiles(wp, tn)
    h_tiles = _tiles(hp, tm)

    # --- 0/1 pooling (sum) matrices for the fused 2x2 avg-pool --------------
    pw_mat = np.zeros((w, w2), np.float32)
    for l in range(w2):
        for k in (2 * l - pad_w, 2 * l + 1 - pad_w):
            if 0 <= k < w:
                pw_mat[k, l] = 1.0
    ph_mat = np.zeros((h2, h), np.float32)
    for j in range(h2):
        for i in (2 * j - pad_h, 2 * j + 1 - pad_h):
            if 0 <= i < h:
                ph_mat[j, i] = 1.0

    # --- per-step image batch B (bigger at the small deep levels) -----------
    map_bytes = 4 * h * w
    per_image = 30 * map_bytes            # slab(5)+W-pass(5)+filtered/epilogue+pool/IO
    budget = max(4 << 20, int(0.35 * vmem_cap))
    B = 1
    for d in _divisors(nc):
        if d > 16:
            break
        if d * per_image <= budget and (nc // d) >= min(2, nc):
            B = d
    nb = nc // B
    inv_area = 1.0 / float(hp * wp)

    def kernel(*refs):
        if emit_pool:
            (x_ref, y_ref, bw_ref, bh_ref, pw_ref, ph_ref,
             res_ref, xp_ref, yp_ref) = refs
        else:
            x_ref, y_ref, bw_ref, bh_ref, res_ref = refs

        x = x_ref[...].reshape(B * h, w)
        y = y_ref[...].reshape(B * h, w)
        # Row-stacked component slab: one fused W-pass matmul feeds all five
        # Gaussian filters (mu1, mu2, E[x^2], E[y^2], E[xy]) of all B images.
        slab = jnp.concatenate([x, y, x * x, y * y, x * y], axis=0)   # (5Bh, w)

        # ---- W pass: banded Toeplitz, tiled over output columns ----------
        bw = bw_ref[...]                               # (tn+ws-1, tn)
        t_parts = []
        for q0, n in w_tiles:
            keff = n + ws - 1
            t_parts.append(jnp.dot(slab[:, q0:q0 + keff], bw[:keff, :n],
                                   preferred_element_type=jnp.float32))
        t = t_parts[0] if len(t_parts) == 1 else jnp.concatenate(t_parts, axis=1)

        # ---- H pass: banded Toeplitz, per (component, image) --------------
        bh = bh_ref[...]                               # (tm, tm+ws-1)

        def hpass(row_off):
            parts = []
            for p0, m in h_tiles:
                keff = m + ws - 1
                parts.append(jnp.dot(bh[:m, :keff],
                                     t[row_off + p0:row_off + p0 + keff, :],
                                     preferred_element_type=jnp.float32))
            return parts[0] if len(parts) == 1 else jnp.concatenate(parts, axis=0)

        res_rows = []
        for b in range(B):
            mu1 = hpass((0 * B + b) * h)
            mu2 = hpass((1 * B + b) * h)
            exx = hpass((2 * B + b) * h)
            eyy = hpass((3 * B + b) * h)
            exy = hpass((4 * B + b) * h)
            mu1_sq = mu1 * mu1
            mu2_sq = mu2 * mu2
            mu12 = mu1 * mu2
            s1 = exx - mu1_sq
            s2 = eyy - mu2_sq
            s12 = exy - mu12
            # EUP reciprocals: the divide slot is otherwise idle here.
            cs_map = (2.0 * s12 + c2) * pl.reciprocal(s1 + s2 + c2, approx=True)
            ssim_map = ((2.0 * mu12 + c1)
                        * pl.reciprocal(mu1_sq + mu2_sq + c1, approx=True)) * cs_map
            s_sum = jnp.sum(jnp.sum(ssim_map, axis=1, keepdims=True),
                            axis=0, keepdims=True)                     # (1, 1)
            c_sum = jnp.sum(jnp.sum(cs_map, axis=1, keepdims=True),
                            axis=0, keepdims=True)                     # (1, 1)
            res_rows.append(jnp.concatenate([s_sum, c_sum], axis=1) * inv_area)
        res = res_rows[0] if B == 1 else jnp.concatenate(res_rows, axis=0)  # (B, 2)
        res_ref[...] = res[None]                                        # (1, B, 2)

        # ---- fused 2x2 avg-pool for the next level (count_include_pad) ----
        if emit_pool:
            pw = pw_ref[...]                           # (w, w2)
            ph = ph_ref[...]                           # (h2, h)
            tp = jnp.dot(slab[:2 * B * h, :], pw,
                         preferred_element_type=jnp.float32)            # (2Bh, w2)
            for b in range(B):
                xp_ref[b] = 0.25 * jnp.dot(ph, tp[b * h:(b + 1) * h, :],
                                           preferred_element_type=jnp.float32)
                yp_ref[b] = 0.25 * jnp.dot(ph, tp[(B + b) * h:(B + b + 1) * h, :],
                                           preferred_element_type=jnp.float32)

    # band/pool matrices are small now (bands are O(tile^2)); their default
    # double-buffering costs almost nothing, so no Buffered(1) override.
    in_specs = [
        pl.BlockSpec((B, h, w), lambda i: (i, 0, 0)),
        pl.BlockSpec((B, h, w), lambda i: (i, 0, 0)),
        pl.BlockSpec((int(tn + ws - 1), int(tn)), lambda i: (0, 0)),
        pl.BlockSpec((int(tm), int(tm + ws - 1)), lambda i: (0, 0)),
    ]
    consts = [jnp.asarray(bw_mat), jnp.asarray(bh_mat)]
    out_specs = [pl.BlockSpec((1, B, 2), lambda i: (i, 0, 0))]
    out_shape = [jax.ShapeDtypeStruct((nb, B, 2), jnp.float32)]
    if emit_pool:
        in_specs += [pl.BlockSpec((w, w2), lambda i: (0, 0)),
                     pl.BlockSpec((h2, h), lambda i: (0, 0))]
        consts += [jnp.asarray(pw_mat), jnp.asarray(ph_mat)]
        out_specs += [pl.BlockSpec((B, h2, w2), lambda i: (i, 0, 0)),
                      pl.BlockSpec((B, h2, w2), lambda i: (i, 0, 0))]
        out_shape += [jax.ShapeDtypeStruct((nc, h2, w2), jnp.float32),
                      jax.ShapeDtypeStruct((nc, h2, w2), jnp.float32)]

    const_bytes = 4 * (bw_mat.size + bh_mat.size
                       + (pw_mat.size + ph_mat.size if emit_pool else 0))
    est = (30 * B * map_bytes                      # slab/W-pass/filtered/epilogue maps
           + 4 * B * map_bytes                     # double-buffered x, y input blocks
           + 2 * const_bytes                       # (double-buffered) constants
           + (16 * B * h2 * w2 if emit_pool else 0))
    vmem_limit = int(min(max(est * 5 // 4, 32 << 20), int(0.9 * vmem_cap)))

    call = pl.pallas_call(
        kernel,
        grid=(nb,),
        in_specs=in_specs,
        out_specs=tuple(out_specs),
        out_shape=tuple(out_shape),
        compiler_params=pltpu.CompilerParams(
            dimension_semantics=("parallel",),
            vmem_limit_bytes=vmem_limit),
    )
    return call, consts


# ---------------------------------------------------------------------------
# MS-SSIM driver: per-level Pallas call + multi-scale combination in JAX.
# ---------------------------------------------------------------------------
def ms_ssim_pallas(X, Y, *, data_range=255.0, size_average=True,
                   win=None, weights=None, K=(0.01, 0.03), filter_tile=None):
    assert X.shape == Y.shape, "Input images should have the same dimensions"
    assert X.ndim == 4, "expecting (N, C, H, W)"
    N, C, H, W = X.shape
    win = np.asarray(win, np.float32).reshape(-1)
    win_size = int(win.shape[0])
    if win_size % 2 != 1:
        raise ValueError("Window size should be odd.")
    smaller_side = min(H, W)
    assert smaller_side > (win_size - 1) * 2 ** 4, \
        "Image size should be larger than %d" % ((win_size - 1) * 2 ** 4)
    if weights is None:
        weights = [0.0448, 0.2856, 0.3001, 0.2363, 0.1333]
    K1, K2 = K
    c1 = float((K1 * data_range) ** 2)
    c2 = float((K2 * data_range) ** 2)
    levels = len(weights)
    if filter_tile is None:
        # contraction of each banded filter matmul == one MXU pass (256 deep on
        # v6e/v7x; a 118-ish tile would suit v5e's 128-deep MXU).
        filter_tile = max(8, 256 - win_size + 1)
    vmem_cap = _vmem_capacity_bytes()

    # NCHW -> (N*C, H, W): the depthwise Gaussian uses identical taps per
    # channel, so the channel dim folds into the batch (= grid) dim.
    # TODO(synk): bf16 transport of X/Y (upcast in-kernel) once level 0 is
    # HBM-bound on v5e; kept f32 here for SSIM precision.
    x = X.reshape(N * C, H, W).astype(jnp.float32)
    y = Y.reshape(N * C, H, W).astype(jnp.float32)

    mcs = []
    ssim_pc = None
    for i in range(levels):
        nc, h, w = x.shape
        emit_pool = i < levels - 1
        level_call, consts = _build_level_call(
            nc, h, w, win, c1, c2, emit_pool=emit_pool,
            filter_tile=filter_tile, vmem_cap=vmem_cap)
        outs = level_call(x, y, *consts)
        res = outs[0].reshape(nc, 2)
        ssim_pc = res[:, 0].reshape(N, C)
        cs = res[:, 1].reshape(N, C)
        if emit_pool:
            mcs.append(jnp.maximum(cs, 0.0))           # torch.relu(cs)
            x, y = outs[1], outs[2]                    # fused avg-pool outputs

    ssim_pc = jnp.maximum(ssim_pc, 0.0)
    mcs_and_ssim = jnp.stack(mcs + [ssim_pc], axis=0)  # (levels, N, C)
    wts = jnp.asarray(weights, jnp.float32).reshape(-1, 1, 1)
    ms_ssim_val = jnp.prod(mcs_and_ssim ** wts, axis=0)  # (N, C)
    if size_average:
        return ms_ssim_val.mean()
    return ms_ssim_val.mean(axis=1)


class MS_SSIM:
    """Pallas/JAX port of voxelmorph_reg/GAN_torch/losses.py::MS_SSIM."""

    def __init__(self, data_range=255.0, size_average=True, win_size=11,
                 win_sigma=1.5, channel=3, spatial_dims=2, weights=None,
                 K=(0.01, 0.03)):
        self.win_size = win_size
        # The torch module repeats this 1-D kernel over `channel` for the
        # depthwise conv; the values are identical per channel so only the
        # 1-D taps matter.
        self.win = _fspecial_gauss_1d(win_size, win_sigma)
        self.size_average = size_average
        self.data_range = data_range
        self.weights = weights
        self.K = K
        self.channel = channel
        self.spatial_dims = spatial_dims

    def __call__(self, X, Y):
        return ms_ssim_pallas(X, Y, data_range=self.data_range,
                              size_average=self.size_average,
                              win=self.win, weights=self.weights, K=self.K)


# ---------------------------------------------------------------------------
# pure-JAX reference (slice-based f32 filtering + reduce_window pooling,
# independent of the Pallas path) for a correctness sanity check.
# ---------------------------------------------------------------------------
def _avg_pool2_ref(x):
    _, h, w = x.shape
    ph, pw = h % 2, w % 2
    s = lax.reduce_window(x, 0.0, lax.add,
                          window_dimensions=(1, 2, 2),
                          window_strides=(1, 2, 2),
                          padding=((0, 0), (ph, ph), (pw, pw)))
    return s * 0.25


def _gfilt_ref(a, win):
    ws = win.shape[0]
    hp = a.shape[1] - ws + 1
    wp = a.shape[2] - ws + 1
    t = sum(float(win[k]) * a[:, k:k + hp, :] for k in range(ws))
    return sum(float(win[k]) * t[:, :, k:k + wp] for k in range(ws))


def _ms_ssim_ref(X, Y, *, data_range, win, weights, K):
    N, C, H, W = X.shape
    if weights is None:
        weights = [0.0448, 0.2856, 0.3001, 0.2363, 0.1333]
    K1, K2 = K
    c1 = (K1 * data_range) ** 2
    c2 = (K2 * data_range) ** 2
    x = X.reshape(N * C, H, W).astype(jnp.float32)
    y = Y.reshape(N * C, H, W).astype(jnp.float32)
    mcs = []
    ssim_pc = None
    for i in range(len(weights)):
        mu1 = _gfilt_ref(x, win)
        mu2 = _gfilt_ref(y, win)
        s1 = _gfilt_ref(x * x, win) - mu1 * mu1
        s2 = _gfilt_ref(y * y, win) - mu2 * mu2
        s12 = _gfilt_ref(x * y, win) - mu1 * mu2
        cs_map = (2 * s12 + c2) / (s1 + s2 + c2)
        ssim_map = (2 * mu1 * mu2 + c1) / (mu1 * mu1 + mu2 * mu2 + c1) * cs_map
        ssim_pc = ssim_map.mean(axis=(1, 2)).reshape(N, C)
        cs = cs_map.mean(axis=(1, 2)).reshape(N, C)
        if i < len(weights) - 1:
            mcs.append(jnp.maximum(cs, 0.0))
            x = _avg_pool2_ref(x)
            y = _avg_pool2_ref(y)
    ssim_pc = jnp.maximum(ssim_pc, 0.0)
    stack = jnp.stack(mcs + [ssim_pc], axis=0)
    wts = jnp.asarray(weights, jnp.float32).reshape(-1, 1, 1)
    return jnp.prod(stack ** wts, axis=0).mean()


if __name__ == "__main__":
    key = jax.random.PRNGKey(0)
    kx, kn = jax.random.split(key)
    # Small shapes: win_size=3 -> required smaller side > (3-1)*16 = 32.
    # Y is a noisy version of X (typical SSIM use case; well-conditioned).
    X = jax.random.uniform(kx, (2, 3, 48, 48), dtype=jnp.float32)
    Y = jnp.clip(X + 0.1 * jax.random.normal(kn, X.shape, dtype=jnp.float32),
                 0.0, 1.0)

    model = MS_SSIM(data_range=1.0, size_average=True, win_size=3,
                    win_sigma=1.5, channel=3, spatial_dims=2)

    out = jax.block_until_ready(model(X, Y))
    ref = jax.block_until_ready(
        _ms_ssim_ref(X, Y, data_range=1.0, win=model.win,
                     weights=model.weights, K=model.K))

    assert np.isfinite(float(out))
    # Tolerance leaves margin for the approx (EUP) reciprocals and any
    # reduced-precision MXU passes the default matmul precision may use.
    assert abs(float(out) - float(ref)) < 2e-2, (float(out), float(ref))

    # Exercise the banded (multi-tile) Toeplitz filter path as well, by forcing
    # a small column/row tile so the 48x48 level uses several band matmuls.
    out_banded = jax.block_until_ready(
        ms_ssim_pallas(X, Y, data_range=1.0, size_average=True,
                       win=model.win, weights=model.weights, K=model.K,
                       filter_tile=16))
    assert abs(float(out_banded) - float(ref)) < 2e-2, \
        (float(out_banded), float(ref))

    print("KERNEL_OK")
</pallas_src>

<mosaic_0001>
module attributes {stable_mosaic.version = 11 : i64} {
  func.func @kernel(%arg0: i32, %arg1: memref<3x48x48xf32, #tpu.memory_space<vmem>>, %arg2: memref<3x48x48xf32, #tpu.memory_space<vmem>>, %arg3: memref<48x46xf32, #tpu.memory_space<vmem>>, %arg4: memref<46x48xf32, #tpu.memory_space<vmem>>, %arg5: memref<48x24xf32, #tpu.memory_space<vmem>>, %arg6: memref<24x48xf32, #tpu.memory_space<vmem>>, %arg7: memref<1x3x2xf32, #tpu.memory_space<vmem>>, %arg8: memref<3x24x24xf32, #tpu.memory_space<vmem>>, %arg9: memref<3x24x24xf32, #tpu.memory_space<vmem>>) attributes {dimension_semantics = [#tpu.dimension_semantics<parallel>], iteration_bounds = array<i64: 2>, scalar_prefetch = 0 : i64, scratch_operands = 0 : i64, tpu.core_type = #tpu.core_type<tc>, window_params = [{transform_indices = @transform_0, window_bounds = array<i64: 3, 48, 48>}, {transform_indices = @transform_1, window_bounds = array<i64: 3, 48, 48>}, {pipeline_mode = #tpu.pipeline_mode<synchronous>, transform_indices = @transform_2, window_bounds = array<i64: 48, 46>}, {pipeline_mode = #tpu.pipeline_mode<synchronous>, transform_indices = @transform_3, window_bounds = array<i64: 46, 48>}, {pipeline_mode = #tpu.pipeline_mode<synchronous>, transform_indices = @transform_4, window_bounds = array<i64: 48, 24>}, {pipeline_mode = #tpu.pipeline_mode<synchronous>, transform_indices = @transform_5, window_bounds = array<i64: 24, 48>}, {transform_indices = @transform_6, window_bounds = array<i64: 1, 3, 2>}, {transform_indices = @transform_7, window_bounds = array<i64: 3, 24, 24>}, {transform_indices = @transform_8, window_bounds = array<i64: 3, 24, 24>}]} {
    %c0 = arith.constant 0 : index
    %c0_0 = arith.constant 0 : index
    %c0_1 = arith.constant 0 : index
    %0 = vector.load %arg1[%c0, %c0_0, %c0_1] : memref<3x48x48xf32, #tpu.memory_space<vmem>>, vector<3x48x48xf32>
    %1 = vector.shape_cast %0 : vector<3x48x48xf32> to vector<144x48xf32>
    %c0_2 = arith.constant 0 : index
    %c0_3 = arith.constant 0 : index
    %c0_4 = arith.constant 0 : index
    %2 = vector.load %arg2[%c0_2, %c0_3, %c0_4] : memref<3x48x48xf32, #tpu.memory_space<vmem>>, vector<3x48x48xf32>
    %3 = vector.shape_cast %2 : vector<3x48x48xf32> to vector<144x48xf32>
    %4 = arith.mulf %1, %1 : vector<144x48xf32>
    %5 = arith.mulf %3, %3 : vector<144x48xf32>
    %6 = arith.mulf %1, %3 : vector<144x48xf32>
    %7 = tpu.concatenate %1, %3, %4, %5, %6 in 0 : vector<144x48xf32>, vector<144x48xf32>, vector<144x48xf32>, vector<144x48xf32>, vector<144x48xf32> -> vector<720x48xf32>
    %c0_5 = arith.constant 0 : index
    %c0_6 = arith.constant 0 : index
    %8 = vector.load %arg3[%c0_5, %c0_6] : memref<48x46xf32, #tpu.memory_space<vmem>>, vector<48x46xf32>
    %cst = arith.constant dense<0.000000e+00> : vector<720x46xf32>
    %9 = tpu.matmul %7, %8, %cst {dimension_numbers = #tpu.dot_dimension_numbers<[1], [0], [0], [1], [0, 0, 1, 1], [], []>} : vector<720x48xf32>, vector<48x46xf32>, vector<720x46xf32> -> vector<720x46xf32>
    %c0_7 = arith.constant 0 : index
    %c0_8 = arith.constant 0 : index
    %10 = vector.load %arg4[%c0_7, %c0_8] : memref<46x48xf32, #tpu.memory_space<vmem>>, vector<46x48xf32>
    %11 = vector.extract_strided_slice %9 {offsets = [0, 0], sizes = [48, 46], strides = [1, 1]} : vector<720x46xf32> to vector<48x46xf32>
    %cst_9 = arith.constant dense<0.000000e+00> : vector<46x46xf32>
    %12 = tpu.matmul %10, %11, %cst_9 {dimension_numbers = #tpu.dot_dimension_numbers<[1], [0], [0], [1], [0, 0, 1, 1], [], []>} : vector<46x48xf32>, vector<48x46xf32>, vector<46x46xf32> -> vector<46x46xf32>
    %13 = vector.extract_strided_slice %9 {offsets = [144, 0], sizes = [48, 46], strides = [1, 1]} : vector<720x46xf32> to vector<48x46xf32>
    %cst_10 = arith.constant dense<0.000000e+00> : vector<46x46xf32>
    %14 = tpu.matmul %10, %13, %cst_10 {dimension_numbers = #tpu.dot_dimension_numbers<[1], [0], [0], [1], [0, 0, 1, 1], [], []>} : vector<46x48xf32>, vector<48x46xf32>, vector<46x46xf32> -> vector<46x46xf32>
    %15 = vector.extract_strided_slice %9 {offsets = [288, 0], sizes = [48, 46], strides = [1, 1]} : vector<720x46xf32> to vector<48x46xf32>
    %cst_11 = arith.constant dense<0.000000e+00> : vector<46x46xf32>
    %16 = tpu.matmul %10, %15, %cst_11 {dimension_numbers = #tpu.dot_dimension_numbers<[1], [0], [0], [1], [0, 0, 1, 1], [], []>} : vector<46x48xf32>, vector<48x46xf32>, vector<46x46xf32> -> vector<46x46xf32>
    %17 = vector.extract_strided_slice %9 {offsets = [432, 0], sizes = [48, 46], strides = [1, 1]} : vector<720x46xf32> to vector<48x46xf32>
    %cst_12 = arith.constant dense<0.000000e+00> : vector<46x46xf32>
    %18 = tpu.matmul %10, %17, %cst_12 {dimension_numbers = #tpu.dot_dimension_numbers<[1], [0], [0], [1], [0, 0, 1, 1], [], []>} : vector<46x48xf32>, vector<48x46xf32>, vector<46x46xf32> -> vector<46x46xf32>
    %19 = vector.extract_strided_slice %9 {offsets = [576, 0], sizes = [48, 46], strides = [1, 1]} : vector<720x46xf32> to vector<48x46xf32>
    %cst_13 = arith.constant dense<0.000000e+00> : vector<46x46xf32>
    %20 = tpu.matmul %10, %19, %cst_13 {dimension_numbers = #tpu.dot_dimension_numbers<[1], [0], [0], [1], [0, 0, 1, 1], [], []>} : vector<46x48xf32>, vector<48x46xf32>, vector<46x46xf32> -> vector<46x46xf32>
    %21 = arith.mulf %12, %12 : vector<46x46xf32>
    %22 = arith.mulf %14, %14 : vector<46x46xf32>
    %23 = arith.mulf %12, %14 : vector<46x46xf32>
    %24 = arith.subf %16, %21 : vector<46x46xf32>
    %25 = arith.subf %18, %22 : vector<46x46xf32>
    %26 = arith.subf %20, %23 : vector<46x46xf32>
    %cst_14 = arith.constant 2.000000e+00 : f32
    %27 = vector.broadcast %cst_14 : f32 to vector<46x46xf32>
    %28 = arith.mulf %27, %26 : vector<46x46xf32>
    %cst_15 = arith.constant 8.99999984E-4 : f32
    %29 = vector.broadcast %cst_15 : f32 to vector<46x46xf32>
    %30 = arith.addf %28, %29 : vector<46x46xf32>
    %31 = arith.addf %24, %25 : vector<46x46xf32>
    %cst_16 = arith.constant 8.99999984E-4 : f32
    %32 = vector.broadcast %cst_16 : f32 to vector<46x46xf32>
    %33 = arith.addf %31, %32 : vector<46x46xf32>
    %34 = tpu.reciprocal %33 {approx = true} : vector<46x46xf32> -> vector<46x46xf32>
    %35 = arith.mulf %30, %34 : vector<46x46xf32>
    %cst_17 = arith.constant 2.000000e+00 : f32
    %36 = vector.broadcast %cst_17 : f32 to vector<46x46xf32>
    %37 = arith.mulf %36, %23 : vector<46x46xf32>
    %cst_18 = arith.constant 9.99999974E-5 : f32
    %38 = vector.broadcast %cst_18 : f32 to vector<46x46xf32>
    %39 = arith.addf %37, %38 : vector<46x46xf32>
    %40 = arith.addf %21, %22 : vector<46x46xf32>
    %cst_19 = arith.constant 9.99999974E-5 : f32
    %41 = vector.broadcast %cst_19 : f32 to vector<46x46xf32>
    %42 = arith.addf %40, %41 : vector<46x46xf32>
    %43 = tpu.reciprocal %42 {approx = true} : vector<46x46xf32> -> vector<46x46xf32>
    %44 = arith.mulf %39, %43 : vector<46x46xf32>
    %45 = arith.mulf %44, %35 : vector<46x46xf32>
    %cst_20 = arith.constant dense<0.000000e+00> : vector<46xf32>
    %46 = vector.multi_reduction <add>, %45, %cst_20 [1] : vector<46x46xf32> to vector<46xf32>
    %47 = vector.shape_cast %46 : vector<46xf32> to vector<46x1xf32>
    %cst_21 = arith.constant dense<0.000000e+00> : vector<1xf32>
    %48 = vector.multi_reduction <add>, %47, %cst_21 [0] : vector<46x1xf32> to vector<1xf32>
    %49 = vector.shape_cast %48 : vector<1xf32> to vector<1x1xf32>
    %cst_22 = arith.constant dense<0.000000e+00> : vector<46xf32>
    %50 = vector.multi_reduction <add>, %35, %cst_22 [1] : vector<46x46xf32> to vector<46xf32>
    %51 = vector.shape_cast %50 : vector<46xf32> to vector<46x1xf32>
    %cst_23 = arith.constant dense<0.000000e+00> : vector<1xf32>
    %52 = vector.multi_reduction <add>, %51, %cst_23 [0] : vector<46x1xf32> to vector<1xf32>
    %53 = vector.shape_cast %52 : vector<1xf32> to vector<1x1xf32>
    %54 = tpu.concatenate %49, %53 in 1 : vector<1x1xf32>, vector<1x1xf32> -> vector<1x2xf32>
    %cst_24 = arith.constant 4.72589803E-4 : f32
    %55 = vector.broadcast %cst_24 : f32 to vector<1x2xf32>
    %56 = arith.mulf %54, %55 : vector<1x2xf32>
    %57 = vector.extract_strided_slice %9 {offsets = [48, 0], sizes = [48, 46], strides = [1, 1]} : vector<720x46xf32> to vector<48x46xf32>
    %cst_25 = arith.constant dense<0.000000e+00> : vector<46x46xf32>
    %58 = tpu.matmul %10, %57, %cst_25 {dimension_numbers = #tpu.dot_dimension_numbers<[1], [0], [0], [1], [0, 0, 1, 1], [], []>} : vector<46x48xf32>, vector<48x46xf32>, vector<46x46xf32> -> vector<46x46xf32>
    %59 = vector.extract_strided_slice %9 {offsets = [192, 0], sizes = [48, 46], strides = [1, 1]} : vector<720x46xf32> to vector<48x46xf32>
    %cst_26 = arith.constant dense<0.000000e+00> : vector<46x46xf32>
    %60 = tpu.matmul %10, %59, %cst_26 {dimension_numbers = #tpu.dot_dimension_numbers<[1], [0], [0], [1], [0, 0, 1, 1], [], []>} : vector<46x48xf32>, vector<48x46xf32>, vector<46x46xf32> -> vector<46x46xf32>
    %61 = vector.extract_strided_slice %9 {offsets = [336, 0], sizes = [48, 46], strides = [1, 1]} : vector<720x46xf32> to vector<48x46xf32>
    %cst_27 = arith.constant dense<0.000000e+00> : vector<46x46xf32>
    %62 = tpu.matmul %10, %61, %cst_27 {dimension_numbers = #tpu.dot_dimension_numbers<[1], [0], [0], [1], [0, 0, 1, 1], [], []>} : vector<46x48xf32>, vector<48x46xf32>, vector<46x46xf32> -> vector<46x46xf32>
    %63 = vector.extract_strided_slice %9 {offsets = [480, 0], sizes = [48, 46], strides = [1, 1]} : vector<720x46xf32> to vector<48x46xf32>
    %cst_28 = arith.constant dense<0.000000e+00> : vector<46x46xf32>
    %64 = tpu.matmul %10, %63, %cst_28 {dimension_numbers = #tpu.dot_dimension_numbers<[1], [0], [0], [1], [0, 0, 1, 1], [], []>} : vector<46x48xf32>, vector<48x46xf32>, vector<46x46xf32> -> vector<46x46xf32>
    %65 = vector.extract_strided_slice %9 {offsets = [624, 0], sizes = [48, 46], strides = [1, 1]} : vector<720x46xf32> to vector<48x46xf32>
    %cst_29 = arith.constant dense<0.000000e+00> : vector<46x46xf32>
    %66 = tpu.matmul %10, %65, %cst_29 {dimension_numbers = #tpu.dot_dimension_numbers<[1], [0], [0], [1], [0, 0, 1, 1], [], []>} : vector<46x48xf32>, vector<48x46xf32>, vector<46x46xf32> -> vector<46x46xf32>
    %67 = arith.mulf %58, %58 : vector<46x46xf32>
    %68 = arith.mulf %60, %60 : vector<46x46xf32>
    %69 = arith.mulf %58, %60 : vector<46x46xf32>
    %70 = arith.subf %62, %67 : vector<46x46xf32>
    %71 = arith.subf %64, %68 : vector<46x46xf32>
    %72 = arith.subf %66, %69 : vector<46x46xf32>
    %cst_30 = arith.constant 2.000000e+00 : f32
    %73 = vector.broadcast %cst_30 : f32 to vector<46x46xf32>
    %74 = arith.mulf %73, %72 : vector<46x46xf32>
    %cst_31 = arith.constant 8.99999984E-4 : f32
    %75 = vector.broadcast %cst_31 : f32 to vector<46x46xf32>
    %76 = arith.addf %74, %75 : vector<46x46xf32>
    %77 = arith.addf %70, %71 : vector<46x46xf32>
    %cst_32 = arith.constant 8.99999984E-4 : f32
    %78 = vector.broadcast %cst_32 : f32 to vector<46x46xf32>
    %79 = arith.addf %77, %78 : vector<46x46xf32>
    %80 = tpu.reciprocal %79 {approx = true} : vector<46x46xf32> -> vector<46x46xf32>
    %81 = arith.mulf %76, %80 : vector<46x46xf32>
    %cst_33 = arith.constant 2.000000e+00 : f32
    %82 = vector.broadcast %cst_33 : f32 to vector<46x46xf32>
    %83 = arith.mulf %82, %69 : vector<46x46xf32>
    %cst_34 = arith.constant 9.99999974E-5 : f32
    %84 = vector.broadcast %cst_34 : f32 to vector<46x46xf32>
    %85 = arith.addf %83, %84 : vector<46x46xf32>
    %86 = arith.addf %67, %68 : vector<46x46xf32>
    %cst_35 = arith.constant 9.99999974E-5 : f32
    %87 = vector.broadcast %cst_35 : f32 to vector<46x46xf32>
    %88 = arith.addf %86, %87 : vector<46x46xf32>
    %89 = tpu.reciprocal %88 {approx = true} : vector<46x46xf32> -> vector<46x46xf32>
    %90 = arith.mulf %85, %89 : vector<46x46xf32>
    %91 = arith.mulf %90, %81 : vector<46x46xf32>
    %cst_36 = arith.constant dense<0.000000e+00> : vector<46xf32>
    %92 = vector.multi_reduction <add>, %91, %cst_36 [1] : vector<46x46xf32> to vector<46xf32>
    %93 = vector.shape_cast %92 : vector<46xf32> to vector<46x1xf32>
    %cst_37 = arith.constant dense<0.000000e+00> : vector<1xf32>
    %94 = vector.multi_reduction <add>, %93, %cst_37 [0] : vector<46x1xf32> to vector<1xf32>
    %95 = vector.shape_cast %94 : vector<1xf32> to vector<1x1xf32>
    %cst_38 = arith.constant dense<0.000000e+00> : vector<46xf32>
    %96 = vector.multi_reduction <add>, %81, %cst_38 [1] : vector<46x46xf32> to vector<46xf32>
    %97 = vector.shape_cast %96 : vector<46xf32> to vector<46x1xf32>
    %cst_39 = arith.constant dense<0.000000e+00> : vector<1xf32>
    %98 = vector.multi_reduction <add>, %97, %cst_39 [0] : vector<46x1xf32> to vector<1xf32>
    %99 = vector.shape_cast %98 : vector<1xf32> to vector<1x1xf32>
    %100 = tpu.concatenate %95, %99 in 1 : vector<1x1xf32>, vector<1x1xf32> -> vector<1x2xf32>
    %cst_40 = arith.constant 4.72589803E-4 : f32
    %101 = vector.broadcast %cst_40 : f32 to vector<1x2xf32>
    %102 = arith.mulf %100, %101 : vector<1x2xf32>
    %103 = vector.extract_strided_slice %9 {offsets = [96, 0], sizes = [48, 46], strides = [1, 1]} : vector<720x46xf32> to vector<48x46xf32>
    %cst_41 = arith.constant dense<0.000000e+00> : vector<46x46xf32>
    %104 = tpu.matmul %10, %103, %cst_41 {dimension_numbers = #tpu.dot_dimension_numbers<[1], [0], [0], [1], [0, 0, 1, 1], [], []>} : vector<46x48xf32>, vector<48x46xf32>, vector<46x46xf32> -> vector<46x46xf32>
    %105 = vector.extract_strided_slice %9 {offsets = [240, 0], sizes = [48, 46], strides = [1, 1]} : vector<720x46xf32> to vector<48x46xf32>
    %cst_42 = arith.constant dense<0.000000e+00> : vector<46x46xf32>
    %106 = tpu.matmul %10, %105, %cst_42 {dimension_numbers = #tpu.dot_dimension_numbers<[1], [0], [0], [1], [0, 0, 1, 1], [], []>} : vector<46x48xf32>, vector<48x46xf32>, vector<46x46xf32> -> vector<46x46xf32>
    %107 = vector.extract_strided_slice %9 {offsets = [384, 0], sizes = [48, 46], strides = [1, 1]} : vector<720x46xf32> to vector<48x46xf32>
    %cst_43 = arith.constant dense<0.000000e+00> : vector<46x46xf32>
    %108 = tpu.matmul %10, %107, %cst_43 {dimension_numbers = #tpu.dot_dimension_numbers<[1], [0], [0], [1], [0, 0, 1, 1], [], []>} : vector<46x48xf32>, vector<48x46xf32>, vector<46x46xf32> -> vector<46x46xf32>
    %109 = vector.extract_strided_slice %9 {offsets = [528, 0], sizes = [48, 46], strides = [1, 1]} : vector<720x46xf32> to vector<48x46xf32>
    %cst_44 = arith.constant dense<0.000000e+00> : vector<46x46xf32>
    %110 = tpu.matmul %10, %109, %cst_44 {dimension_numbers = #tpu.dot_dimension_numbers<[1], [0], [0], [1], [0, 0, 1, 1], [], []>} : vector<46x48xf32>, vector<48x46xf32>, vector<46x46xf32> -> vector<46x46xf32>
    %111 = vector.extract_strided_slice %9 {offsets = [672, 0], sizes = [48, 46], strides = [1, 1]} : vector<720x46xf32> to vector<48x46xf32>
    %cst_45 = arith.constant dense<0.000000e+00> : vector<46x46xf32>
    %112 = tpu.matmul %10, %111, %cst_45 {dimension_numbers = #tpu.dot_dimension_numbers<[1], [0], [0], [1], [0, 0, 1, 1], [], []>} : vector<46x48xf32>, vector<48x46xf32>, vector<46x46xf32> -> vector<46x46xf32>
    %113 = arith.mulf %104, %104 : vector<46x46xf32>
    %114 = arith.mulf %106, %106 : vector<46x46xf32>
    %115 = arith.mulf %104, %106 : vector<46x46xf32>
    %116 = arith.subf %108, %113 : vector<46x46xf32>
    %117 = arith.subf %110, %114 : vector<46x46xf32>
    %118 = arith.subf %112, %115 : vector<46x46xf32>
    %cst_46 = arith.constant 2.000000e+00 : f32
    %119 = vector.broadcast %cst_46 : f32 to vector<46x46xf32>
    %120 = arith.mulf %119, %118 : vector<46x46xf32>
    %cst_47 = arith.constant 8.99999984E-4 : f32
    %121 = vector.broadcast %cst_47 : f32 to vector<46x46xf32>
    %122 = arith.addf %120, %121 : vector<46x46xf32>
    %123 = arith.addf %116, %117 : vector<46x46xf32>
    %cst_48 = arith.constant 8.99999984E-4 : f32
    %124 = vector.broadcast %cst_48 : f32 to vector<46x46xf32>
    %125 = arith.addf %123, %124 : vector<46x46xf32>
    %126 = tpu.reciprocal %125 {approx = true} : vector<46x46xf32> -> vector<46x46xf32>
    %127 = arith.mulf %122, %126 : vector<46x46xf32>
    %cst_49 = arith.constant 2.000000e+00 : f32
    %128 = vector.broadcast %cst_49 : f32 to vector<46x46xf32>
    %129 = arith.mulf %128, %115 : vector<46x46xf32>
    %cst_50 = arith.constant 9.99999974E-5 : f32
    %130 = vector.broadcast %cst_50 : f32 to vector<46x46xf32>
    %131 = arith.addf %129, %130 : vector<46x46xf32>
    %132 = arith.addf %113, %114 : vector<46x46xf32>
    %cst_51 = arith.constant 9.99999974E-5 : f32
    %133 = vector.broadcast %cst_51 : f32 to vector<46x46xf32>
    %134 = arith.addf %132, %133 : vector<46x46xf32>
    %135 = tpu.reciprocal %134 {approx = true} : vector<46x46xf32> -> vector<46x46xf32>
    %136 = arith.mulf %131, %135 : vector<46x46xf32>
    %137 = arith.mulf %136, %127 : vector<46x46xf32>
    %cst_52 = arith.constant dense<0.000000e+00> : vector<46xf32>
    %138 = vector.multi_reduction <add>, %137, %cst_52 [1] : vector<46x46xf32> to vector<46xf32>
    %139 = vector.shape_cast %138 : vector<46xf32> to vector<46x1xf32>
    %cst_53 = arith.constant dense<0.000000e+00> : vector<1xf32>
    %140 = vector.multi_reduction <add>, %139, %cst_53 [0] : vector<46x1xf32> to vector<1xf32>
    %141 = vector.shape_cast %140 : vector<1xf32> to vector<1x1xf32>
    %cst_54 = arith.constant dense<0.000000e+00> : vector<46xf32>
    %142 = vector.multi_reduction <add>, %127, %cst_54 [1] : vector<46x46xf32> to vector<46xf32>
    %143 = vector.shape_cast %142 : vector<46xf32> to vector<46x1xf32>
    %cst_55 = arith.constant dense<0.000000e+00> : vector<1xf32>
    %144 = vector.multi_reduction <add>, %143, %cst_55 [0] : vector<46x1xf32> to vector<1xf32>
    %145 = vector.shape_cast %144 : vector<1xf32> to vector<1x1xf32>
    %146 = tpu.concatenate %141, %145 in 1 : vector<1x1xf32>, vector<1x1xf32> -> vector<1x2xf32>
    %cst_56 = arith.constant 4.72589803E-4 : f32
    %147 = vector.broadcast %cst_56 : f32 to vector<1x2xf32>
    %148 = arith.mulf %146, %147 : vector<1x2xf32>
    %149 = tpu.concatenate %56, %102, %148 in 0 : vector<1x2xf32>, vector<1x2xf32>, vector<1x2xf32> -> vector<3x2xf32>
    %150 = vector.shape_cast %149 : vector<3x2xf32> to vector<1x3x2xf32>
    %c0_57 = arith.constant 0 : index
    %c0_58 = arith.constant 0 : index
    %c0_59 = arith.constant 0 : index
    %151 = vector.load %arg7[%c0_57, %c0_58, %c0_59] : memref<1x3x2xf32, #tpu.memory_space<vmem>>, vector<1x3x2xf32>
    tpu.vector_store %arg7[%c0_57, %c0_58, %c0_59], %150 {strides = array<i32>} : memref<1x3x2xf32, #tpu.memory_space<vmem>>, vector<1x3x2xf32>,
    %c0_60 = arith.constant 0 : index
    %c0_61 = arith.constant 0 : index
    %152 = vector.load %arg5[%c0_60, %c0_61] : memref<48x24xf32, #tpu.memory_space<vmem>>, vector<48x24xf32>
    %c0_62 = arith.constant 0 : index
    %c0_63 = arith.constant 0 : index
    %153 = vector.load %arg6[%c0_62, %c0_63] : memref<24x48xf32, #tpu.memory_space<vmem>>, vector<24x48xf32>
    %154 = vector.extract_strided_slice %7 {offsets = [0, 0], sizes = [288, 48], strides = [1, 1]} : vector<720x48xf32> to vector<288x48xf32>
    %cst_64 = arith.constant dense<0.000000e+00> : vector<288x24xf32>
    %155 = tpu.matmul %154, %152, %cst_64 {dimension_numbers = #tpu.dot_dimension_numbers<[1], [0], [0], [1], [0, 0, 1, 1], [], []>} : vector<288x48xf32>, vector<48x24xf32>, vector<288x24xf32> -> vector<288x24xf32>
    %156 = vector.extract_strided_slice %155 {offsets = [0, 0], sizes = [48, 24], strides = [1, 1]} : vector<288x24xf32> to vector<48x24xf32>
    %cst_65 = arith.constant dense<0.000000e+00> : vector<24x24xf32>
    %157 = tpu.matmul %153, %156, %cst_65 {dimension_numbers = #tpu.dot_dimension_numbers<[1], [0], [0], [1], [0, 0, 1, 1], [], []>} : vector<24x48xf32>, vector<48x24xf32>, vector<24x24xf32> -> vector<24x24xf32>
    %cst_66 = arith.constant 2.500000e-01 : f32
    %158 = vector.broadcast %cst_66 : f32 to vector<24x24xf32>
    %159 = arith.mulf %158, %157 : vector<24x24xf32>
    %c0_67 = arith.constant 0 : index
    %c0_68 = arith.constant 0 : index
    %c0_69 = arith.constant 0 : index
    %160 = vector.load %arg8[%c0_67, %c0_68, %c0_69] : memref<3x24x24xf32, #tpu.memory_space<vmem>>, vector<1x24x24xf32>
    %161 = vector.shape_cast %160 : vector<1x24x24xf32> to vector<24x24xf32>
    %162 = vector.shape_cast %159 : vector<24x24xf32> to vector<1x24x24xf32>
    tpu.vector_store %arg8[%c0_67, %c0_68, %c0_69], %162 {strides = array<i32>} : memref<3x24x24xf32, #tpu.memory_space<vmem>>, vector<1x24x24xf32>,
    %163 = vector.extract_strided_slice %155 {offsets = [144, 0], sizes = [48, 24], strides = [1, 1]} : vector<288x24xf32> to vector<48x24xf32>
    %cst_70 = arith.constant dense<0.000000e+00> : vector<24x24xf32>
    %164 = tpu.matmul %153, %163, %cst_70 {dimension_numbers = #tpu.dot_dimension_numbers<[1], [0], [0], [1], [0, 0, 1, 1], [], []>} : vector<24x48xf32>, vector<48x24xf32>, vector<24x24xf32> -> vector<24x24xf32>
    %cst_71 = arith.constant 2.500000e-01 : f32
    %165 = vector.broadcast %cst_71 : f32 to vector<24x24xf32>
    %166 = arith.mulf %165, %164 : vector<24x24xf32>
    %c0_72 = arith.constant 0 : index
    %c0_73 = arith.constant 0 : index
    %c0_74 = arith.constant 0 : index
    %167 = vector.load %arg9[%c0_72, %c0_73, %c0_74] : memref<3x24x24xf32, #tpu.memory_space<vmem>>, vector<1x24x24xf32>
    %168 = vector.shape_cast %167 : vector<1x24x24xf32> to vector<24x24xf32>
    %169 = vector.shape_cast %166 : vector<24x24xf32> to vector<1x24x24xf32>
    tpu.vector_store %arg9[%c0_72, %c0_73, %c0_74], %169 {strides = array<i32>} : memref<3x24x24xf32, #tpu.memory_space<vmem>>, vector<1x24x24xf32>,
    %170 = vector.extract_strided_slice %155 {offsets = [48, 0], sizes = [48, 24], strides = [1, 1]} : vector<288x24xf32> to vector<48x24xf32>
    %cst_75 = arith.constant dense<0.000000e+00> : vector<24x24xf32>
    %171 = tpu.matmul %153, %170, %cst_75 {dimension_numbers = #tpu.dot_dimension_numbers<[1], [0], [0], [1], [0, 0, 1, 1], [], []>} : vector<24x48xf32>, vector<48x24xf32>, vector<24x24xf32> -> vector<24x24xf32>
    %cst_76 = arith.constant 2.500000e-01 : f32
    %172 = vector.broadcast %cst_76 : f32 to vector<24x24xf32>
    %173 = arith.mulf %172, %171 : vector<24x24xf32>
    %c1 = arith.constant 1 : index
    %c0_77 = arith.constant 0 : index
    %c0_78 = arith.constant 0 : index
    %174 = vector.load %arg8[%c1, %c0_77, %c0_78] : memref<3x24x24xf32, #tpu.memory_space<vmem>>, vector<1x24x24xf32>
    %175 = vector.shape_cast %174 : vector<1x24x24xf32> to vector<24x24xf32>
    %176 = vector.shape_cast %173 : vector<24x24xf32> to vector<1x24x24xf32>
    tpu.vector_store %arg8[%c1, %c0_77, %c0_78], %176 {strides = array<i32>} : memref<3x24x24xf32, #tpu.memory_space<vmem>>, vector<1x24x24xf32>,
    %177 = vector.extract_strided_slice %155 {offsets = [192, 0], sizes = [48, 24], strides = [1, 1]} : vector<288x24xf32> to vector<48x24xf32>
    %cst_79 = arith.constant dense<0.000000e+00> : vector<24x24xf32>
    %178 = tpu.matmul %153, %177, %cst_79 {dimension_numbers = #tpu.dot_dimension_numbers<[1], [0], [0], [1], [0, 0, 1, 1], [], []>} : vector<24x48xf32>, vector<48x24xf32>, vector<24x24xf32> -> vector<24x24xf32>
    %cst_80 = arith.constant 2.500000e-01 : f32
    %179 = vector.broadcast %cst_80 : f32 to vector<24x24xf32>
    %180 = arith.mulf %179, %178 : vector<24x24xf32>
    %c1_81 = arith.constant 1 : index
    %c0_82 = arith.constant 0 : index
    %c0_83 = arith.constant 0 : index
    %181 = vector.load %arg9[%c1_81, %c0_82, %c0_83] : memref<3x24x24xf32, #tpu.memory_space<vmem>>, vector<1x24x24xf32>
    %182 = vector.shape_cast %181 : vector<1x24x24xf32> to vector<24x24xf32>
    %183 = vector.shape_cast %180 : vector<24x24xf32> to vector<1x24x24xf32>
    tpu.vector_store %arg9[%c1_81, %c0_82, %c0_83], %183 {strides = array<i32>} : memref<3x24x24xf32, #tpu.memory_space<vmem>>, vector<1x24x24xf32>,
    %184 = vector.extract_strided_slice %155 {offsets = [96, 0], sizes = [48, 24], strides = [1, 1]} : vector<288x24xf32> to vector<48x24xf32>
    %cst_84 = arith.constant dense<0.000000e+00> : vector<24x24xf32>
    %185 = tpu.matmul %153, %184, %cst_84 {dimension_numbers = #tpu.dot_dimension_numbers<[1], [0], [0], [1], [0, 0, 1, 1], [], []>} : vector<24x48xf32>, vector<48x24xf32>, vector<24x24xf32> -> vector<24x24xf32>
    %cst_85 = arith.constant 2.500000e-01 : f32
    %186 = vector.broadcast %cst_85 : f32 to vector<24x24xf32>
    %187 = arith.mulf %186, %185 : vector<24x24xf32>
    %c2 = arith.constant 2 : index
    %c0_86 = arith.constant 0 : index
    %c0_87 = arith.constant 0 : index
    %188 = vector.load %arg8[%c2, %c0_86, %c0_87] : memref<3x24x24xf32, #tpu.memory_space<vmem>>, vector<1x24x24xf32>
    %189 = vector.shape_cast %188 : vector<1x24x24xf32> to vector<24x24xf32>
    %190 = vector.shape_cast %187 : vector<24x24xf32> to vector<1x24x24xf32>
    tpu.vector_store %arg8[%c2, %c0_86, %c0_87], %190 {strides = array<i32>} : memref<3x24x24xf32, #tpu.memory_space<vmem>>, vector<1x24x24xf32>,
    %191 = vector.extract_strided_slice %155 {offsets = [240, 0], sizes = [48, 24], strides = [1, 1]} : vector<288x24xf32> to vector<48x24xf32>
    %cst_88 = arith.constant dense<0.000000e+00> : vector<24x24xf32>
    %192 = tpu.matmul %153, %191, %cst_88 {dimension_numbers = #tpu.dot_dimension_numbers<[1], [0], [0], [1], [0, 0, 1, 1], [], []>} : vector<24x48xf32>, vector<48x24xf32>, vector<24x24xf32> -> vector<24x24xf32>
    %cst_89 = arith.constant 2.500000e-01 : f32
    %193 = vector.broadcast %cst_89 : f32 to vector<24x24xf32>
    %194 = arith.mulf %193, %192 : vector<24x24xf32>
    %c2_90 = arith.constant 2 : index
    %c0_91 = arith.constant 0 : index
    %c0_92 = arith.constant 0 : index
    %195 = vector.load %arg9[%c2_90, %c0_91, %c0_92] : memref<3x24x24xf32, #tpu.memory_space<vmem>>, vector<1x24x24xf32>
    %196 = vector.shape_cast %195 : vector<1x24x24xf32> to vector<24x24xf32>
    %197 = vector.shape_cast %194 : vector<24x24xf32> to vector<1x24x24xf32>
    tpu.vector_store %arg9[%c2_90, %c0_91, %c0_92], %197 {strides = array<i32>} : memref<3x24x24xf32, #tpu.memory_space<vmem>>, vector<1x24x24xf32>,
    return
  }
  func.func @transform_0(%arg0: i32) -> (i32, i32, i32) {
    %c0_i32 = arith.constant 0 : i32
    %c0_i32_0 = arith.constant 0 : i32
    %c0_i32_1 = arith.constant 0 : i32
    return %arg0, %c0_i32, %c0_i32_0 : i32, i32, i32
  }
  func.func @transform_1(%arg0: i32) -> (i32, i32, i32) {
    %c0_i32 = arith.constant 0 : i32
    %c0_i32_0 = arith.constant 0 : i32
    %c0_i32_1 = arith.constant 0 : i32
    return %arg0, %c0_i32, %c0_i32_0 : i32, i32, i32
  }
  func.func @transform_2(%arg0: i32) -> (i32, i32) {
    %c0_i32 = arith.constant 0 : i32
    %c0_i32_0 = arith.constant 0 : i32
    %c0_i32_1 = arith.constant 0 : i32
    return %c0_i32, %c0_i32_0 : i32, i32
  }
  func.func @transform_3(%arg0: i32) -> (i32, i32) {
    %c0_i32 = arith.constant 0 : i32
    %c0_i32_0 = arith.constant 0 : i32
    %c0_i32_1 = arith.constant 0 : i32
    return %c0_i32, %c0_i32_0 : i32, i32
  }
  func.func @transform_4(%arg0: i32) -> (i32, i32) {
    %c0_i32 = arith.constant 0 : i32
    %c0_i32_0 = arith.constant 0 : i32
    %c0_i32_1 = arith.constant 0 : i32
    return %c0_i32, %c0_i32_0 : i32, i32
  }
  func.func @transform_5(%arg0: i32) -> (i32, i32) {
    %c0_i32 = arith.constant 0 : i32
    %c0_i32_0 = arith.constant 0 : i32
    %c0_i32_1 = arith.constant 0 : i32
    return %c0_i32, %c0_i32_0 : i32, i32
  }
  func.func @transform_6(%arg0: i32) -> (i32, i32, i32) {
    %c0_i32 = arith.constant 0 : i32
    %c0_i32_0 = arith.constant 0 : i32
    %c0_i32_1 = arith.constant 0 : i32
    return %arg0, %c0_i32, %c0_i32_0 : i32, i32, i32
  }
  func.func @transform_7(%arg0: i32) -> (i32, i32, i32) {
    %c0_i32 = arith.constant 0 : i32
    %c0_i32_0 = arith.constant 0 : i32
    %c0_i32_1 = arith.constant 0 : i32
    return %arg0, %c0_i32, %c0_i32_0 : i32, i32, i32
  }
  func.func @transform_8(%arg0: i32) -> (i32, i32, i32) {
    %c0_i32 = arith.constant 0 : i32
    %c0_i32_0 = arith.constant 0 : i32
    %c0_i32_1 = arith.constant 0 : i32
    return %arg0, %c0_i32, %c0_i32_0 : i32, i32, i32
  }
}

</mosaic_0001>

<llo_original>
// kernel: tpu_custom_call.1
$region0: #{tpu_custom_call.1}
  #allocation0 [shape = 'u32[]', space=smem, size = 0x4, offset = 0x4, fixed_abs, tag = 'smem constant byte address 0x4 - core index']
  #allocation1 [shape = 'u32[144,128]{1,0:T(1,128)}', space=vmem, size = 0x12000, scoped, tag = 'internal scratch']
  %s0 = inlined_call_operand.hbm [shape: f32[6,48,48], index: 0, kind: input, shape index: {}]
  %s1 = inlined_call_operand.hbm [shape: f32[6,48,48], index: 1, kind: input, shape index: {}]
  %s2 = inlined_call_operand.vmem [shape: f32[48,46], index: 2, kind: input, shape index: {}]
  %s3 = inlined_call_operand.hbm [shape: f32[46,48], index: 3, kind: input, shape index: {}]
  %s4 = inlined_call_operand.vmem [shape: f32[48,24], index: 4, kind: input, shape index: {}]
  %s5 = inlined_call_operand.vmem [shape: f32[24,48], index: 5, kind: input, shape index: {}]
  %s6 = inlined_call_operand.vmem [shape: f32[2,3,2], index: 6, kind: output, shape index: {0}]
  %s7 = inlined_call_operand.hbm [shape: f32[6,24,24], index: 7, kind: output, shape index: {1}]
  %s8 = inlined_call_operand.hbm [shape: f32[6,24,24], index: 8, kind: output, shape index: {2}]
  %9 = xla_tuple %s6, %s7, %s8
  %s10 = sld [smem:[#allocation0]]
  $region85: #{tpu_custom_call.1} parent=0
    _
  %s12 = ssub.s32 1, %s10
  %s13 = scalar_select 0, %s12, %s10
  $region1: #{tpu_custom_call.1} parent=0
    #allocation2 [shape = 'u8[147456]{0}', space=vmem, size = 0x24000, scoped, tag = 'input window, operand 0']
    #allocation3 [shape = 's32[2]{0}', space=sflag, size = 0x8, scoped, tag = 'scoped memory for tpu_custom_call.1']
    #allocation4 [shape = 's32[2]{0}', space=sflag, size = 0x8, scoped, tag = 'scoped memory for tpu_custom_call.1']
    #allocation5 [shape = 'u8[147456]{0}', space=vmem, size = 0x24000, scoped, tag = 'input window, operand 1']
    #allocation6 [shape = 's32[2]{0}', space=sflag, size = 0x8, scoped, tag = 'scoped memory for tpu_custom_call.1']
    #allocation7 [shape = 'u8[24576]{0}', space=vmem, size = 0x6000, scoped, tag = 'input window, operand 3, single buffered']
    #allocation8 [shape = 'u8[73728]{0}', space=vmem, size = 0x12000, scoped, tag = 'output window, operand 1']
    #allocation9 [shape = 'u8[73728]{0}', space=vmem, size = 0x12000, scoped, tag = 'output window, operand 2']
    #allocation10 [shape = 's32[2]{0}', space=sflag, size = 0x8, scoped, tag = 'scoped memory for tpu_custom_call.1']
    %14 = vsyncpa [#allocation3], 0
    %s15 = scalar_lea.sflag [#allocation3], 1
    %16 = vsyncpa %s15, 0
    %17 = vsyncpa [#allocation6], 0
    %s18 = scalar_lea.sflag [#allocation6], 1
    %19 = vsyncpa %s18, 0
    %20 = vsyncpa [#allocation4], 0
    %s21 = scalar_lea.sflag [#allocation4], 1
    %22 = vsyncpa %s21, 0
    %23 = vsyncpa [#allocation10], 0
    %s24 = scalar_lea.sflag [#allocation10], 1
    %25 = vsyncpa %s24, 0
    loop: start=0, step=1, limit=4
    $region2: #{tpu_custom_call.1} parent=1 // loop_pre_header
      _
    $region3: #{tpu_custom_call.1} parent=1 // loop_header
      %s27 = sphi 0, %s31
      %p28 = scmp.ge.s32.totalorder %s27, 4
      %s37 = sphi 0, %s39
      %s40 = sphi 0, %s37
      %s41 = sphi 0, %s40
      %s57 = sphi 0, %s41
      %s63 = sphi 0, %s65
      %s66 = sphi 0, %s63
      %s67 = sphi 0, %s66
      %s83 = sphi 0, %s67
      %s87 = sphi 0, %s87
      %s89 = sphi 0, %s87
      %s90 = sphi 0, %s89
      %s104 = sphi 0, %s90
      %s108 = sphi 0, %s108
      %s110 = sphi 0, %s108
      %s111 = sphi 0, %s110
      %s125 = sphi 0, %s111
      %s129 = sphi 0, %s129
      %s131 = sphi 0, %s129
      %s132 = sphi 0, %s131
      %s146 = sphi 0, %s132
      %s150 = sphi 0, %s150
      %s152 = sphi 0, %s150
      %s153 = sphi 0, %s152
      %s167 = sphi 0, %s153
      %s173 = sphi 0, %s175
      %s176 = sphi 0, %s173
      %s177 = sphi 0, %s176
      %s193 = sphi 0, %s177
      %s199 = sphi 0, %s201
      %s202 = sphi 0, %s199
      %s203 = sphi 0, %s202
      %s219 = sphi 0, %s203
      %s225 = sphi 0, %s227
      %s228 = sphi 0, %s225
      %s229 = sphi 0, %s228
      %s245 = sphi 0, %s229
    $region4: #{tpu_custom_call.1} parent=1 // loop_header_branch
      %30 = sbr.rel (%p28) target = $region8
    $region5: #{tpu_custom_call.1} parent=1 // loop_body
      %s32 = ssub.s32 %s27, 1
      %s33 = ssub.s32 %s27, 2
      %s34 = sadd.s32 %s27, 1
      %s35 = ssub.s32 %s27, %s34
      %p36 = scmp.eq.s32.totalorder %s35, 0
      %s38 = sadd.s32 %s37, 1
      %s39 = scalar_select %p36, %s37, %s38
      %p42 = pneg %p36
      %p43 = scmp.eq.s32.totalorder %s27, 1
      %p44 = por %p42, %p43
      %p45 = scmp.ne.s32.totalorder %s37, %s40
      %p46 = scmp.eq.s32.totalorder %s27, 0
      %p47 = por %p45, %p46
      %p48 = scmp.ne.s32.totalorder %s37, %s40
      %p49 = scmp.eq.s32.totalorder %s32, 1
      %p50 = por %p48, %p49
      %p51 = scmp.ne.s32.totalorder %s40, %s41
      %p52 = scmp.eq.s32.totalorder %s32, 0
      %p53 = por %p51, %p52
      %p54 = scmp.ne.s32.totalorder %s40, %s41
      %p55 = scmp.eq.s32.totalorder %s33, 1
      %p56 = por %p54, %p55
      %p58 = scmp.ne.s32.totalorder %s41, %s57
      %p59 = scmp.eq.s32.totalorder %s33, 0
      %p60 = por %p58, %p59
      %s61 = ssub.s32 %s27, %s34
      %p62 = scmp.eq.s32.totalorder %s61, 0
      %s64 = sadd.s32 %s63, 1
      %s65 = scalar_select %p62, %s63, %s64
      %p68 = pneg %p62
      %p69 = scmp.eq.s32.totalorder %s27, 1
      %p70 = por %p68, %p69
      %p71 = scmp.ne.s32.totalorder %s63, %s66
      %p72 = scmp.eq.s32.totalorder %s27, 0
      %p73 = por %p71, %p72
      %p74 = scmp.ne.s32.totalorder %s63, %s66
      %p75 = scmp.eq.s32.totalorder %s32, 1
      %p76 = por %p74, %p75
      %p77 = scmp.ne.s32.totalorder %s66, %s67
      %p78 = scmp.eq.s32.totalorder %s32, 0
      %p79 = por %p77, %p78
      %p80 = scmp.ne.s32.totalorder %s66, %s67
      %p81 = scmp.eq.s32.totalorder %s33, 1
      %p82 = por %p80, %p81
      %p84 = scmp.ne.s32.totalorder %s67, %s83
      %p85 = scmp.eq.s32.totalorder %s33, 0
      %p86 = por %p84, %p85
      %s88 = sadd.s32 %s87, 1
      %p91 = scmp.eq.s32.totalorder %s27, 1
      %p92 = scmp.ne.s32.totalorder %s87, %s89
      %p93 = scmp.eq.s32.totalorder %s27, 0
      %p94 = por %p92, %p93
      %p95 = scmp.ne.s32.totalorder %s87, %s89
      %p96 = scmp.eq.s32.totalorder %s32, 1
      %p97 = por %p95, %p96
      %p98 = scmp.ne.s32.totalorder %s89, %s90
      %p99 = scmp.eq.s32.totalorder %s32, 0
      %p100 = por %p98, %p99
      %p101 = scmp.ne.s32.totalorder %s89, %s90
      %p102 = scmp.eq.s32.totalorder %s33, 1
      %p103 = por %p101, %p102
      %p105 = scmp.ne.s32.totalorder %s90, %s104
      %p106 = scmp.eq.s32.totalorder %s33, 0
      %p107 = por %p105, %p106
      %s109 = sadd.s32 %s108, 1
      %p112 = scmp.eq.s32.totalorder %s27, 1
      %p113 = scmp.ne.s32.totalorder %s108, %s110
      %p114 = scmp.eq.s32.totalorder %s27, 0
      %p115 = por %p113, %p114
      %p116 = scmp.ne.s32.totalorder %s108, %s110
      %p117 = scmp.eq.s32.totalorder %s32, 1
      %p118 = por %p116, %p117
      %p119 = scmp.ne.s32.totalorder %s110, %s111
      %p120 = scmp.eq.s32.totalorder %s32, 0
      %p121 = por %p119, %p120
      %p122 = scmp.ne.s32.totalorder %s110, %s111
      %p123 = scmp.eq.s32.totalorder %s33, 1
      %p124 = por %p122, %p123
      %p126 = scmp.ne.s32.totalorder %s111, %s125
      %p127 = scmp.eq.s32.totalorder %s33, 0
      %p128 = por %p126, %p127
      %s130 = sadd.s32 %s129, 1
      %p133 = scmp.eq.s32.totalorder %s27, 1
      %p134 = scmp.ne.s32.totalorder %s129, %s131
      %p135 = scmp.eq.s32.totalorder %s27, 0
      %p136 = por %p134, %p135
      %p137 = scmp.ne.s32.totalorder %s129, %s131
      %p138 = scmp.eq.s32.totalorder %s32, 1
      %p139 = por %p137, %p138
      %p140 = scmp.ne.s32.totalorder %s131, %s132
      %p141 = scmp.eq.s32.totalorder %s32, 0
      %p142 = por %p140, %p141
      %p143 = scmp.ne.s32.totalorder %s131, %s132
      %p144 = scmp.eq.s32.totalorder %s33, 1
      %p145 = por %p143, %p144
      %p147 = scmp.ne.s32.totalorder %s132, %s146
      %p148 = scmp.eq.s32.totalorder %s33, 0
      %p149 = por %p147, %p148
      %s151 = sadd.s32 %s150, 1
      %p154 = scmp.eq.s32.totalorder %s27, 1
      %p155 = scmp.ne.s32.totalorder %s150, %s152
      %p156 = scmp.eq.s32.totalorder %s27, 0
      %p157 = por %p155, %p156
      %p158 = scmp.ne.s32.totalorder %s150, %s152
      %p159 = scmp.eq.s32.totalorder %s32, 1
      %p160 = por %p158, %p159
      %p161 = scmp.ne.s32.totalorder %s152, %s153
      %p162 = scmp.eq.s32.totalorder %s32, 0
      %p163 = por %p161, %p162
      %p164 = scmp.ne.s32.totalorder %s152, %s153
      %p165 = scmp.eq.s32.totalorder %s33, 1
      %p166 = por %p164, %p165
      %p168 = scmp.ne.s32.totalorder %s153, %s167
      %p169 = scmp.eq.s32.totalorder %s33, 0
      %p170 = por %p168, %p169
      %s171 = ssub.s32 %s27, %s34
      %p172 = scmp.eq.s32.totalorder %s171, 0
      %s174 = sadd.s32 %s173, 1
      %s175 = scalar_select %p172, %s173, %s174
      %p178 = pneg %p172
      %p179 = scmp.eq.s32.totalorder %s27, 1
      %p180 = por %p178, %p179
      %p181 = scmp.ne.s32.totalorder %s173, %s176
      %p182 = scmp.eq.s32.totalorder %s27, 0
      %p183 = por %p181, %p182
      %p184 = scmp.ne.s32.totalorder %s173, %s176
      %p185 = scmp.eq.s32.totalorder %s32, 1
      %p186 = por %p184, %p185
      %p187 = scmp.ne.s32.totalorder %s176, %s177
      %p188 = scmp.eq.s32.totalorder %s32, 0
      %p189 = por %p187, %p188
      %p190 = scmp.ne.s32.totalorder %s176, %s177
      %p191 = scmp.eq.s32.totalorder %s33, 1
      %p192 = por %p190, %p191
      %p194 = scmp.ne.s32.totalorder %s177, %s193
      %p195 = scmp.eq.s32.totalorder %s33, 0
      %p196 = por %p194, %p195
      %s197 = ssub.s32 %s27, %s34
      %p198 = scmp.eq.s32.totalorder %s197, 0
      %s200 = sadd.s32 %s199, 1
      %s201 = scalar_select %p198, %s199, %s200
      %p204 = pneg %p198
      %p205 = scmp.eq.s32.totalorder %s27, 1
      %p206 = por %p204, %p205
      %p207 = scmp.ne.s32.totalorder %s199, %s202
      %p208 = scmp.eq.s32.totalorder %s27, 0
      %p209 = por %p207, %p208
      %p210 = scmp.ne.s32.totalorder %s199, %s202
      %p211 = scmp.eq.s32.totalorder %s32, 1
      %p212 = por %p210, %p211
      %p213 = scmp.ne.s32.totalorder %s202, %s203
      %p214 = scmp.eq.s32.totalorder %s32, 0
      %p215 = por %p213, %p214
      %p216 = scmp.ne.s32.totalorder %s202, %s203
      %p217 = scmp.eq.s32.totalorder %s33, 1
      %p218 = por %p216, %p217
      %p220 = scmp.ne.s32.totalorder %s203, %s219
      %p221 = scmp.eq.s32.totalorder %s33, 0
      %p222 = por %p220, %p221
      %s223 = ssub.s32 %s27, %s34
      %p224 = scmp.eq.s32.totalorder %s223, 0
      %s226 = sadd.s32 %s225, 1
      %s227 = scalar_select %p224, %s225, %s226
      %p230 = pneg %p224
      %p231 = scmp.eq.s32.totalorder %s27, 1
      %p232 = por %p230, %p231
      %p233 = scmp.ne.s32.totalorder %s225, %s228
      %p234 = scmp.eq.s32.totalorder %s27, 0
      %p235 = por %p233, %p234
      %p236 = scmp.ne.s32.totalorder %s225, %s228
      %p237 = scmp.eq.s32.totalorder %s32, 1
      %p238 = por %p236, %p237
      %p239 = scmp.ne.s32.totalorder %s228, %s229
      %p240 = scmp.eq.s32.totalorder %s32, 0
      %p241 = por %p239, %p240
      %p242 = scmp.ne.s32.totalorder %s228, %s229
      %p243 = scmp.eq.s32.totalorder %s33, 1
      %p244 = por %p242, %p243
      %p246 = scmp.ne.s32.totalorder %s229, %s245
      %p247 = scmp.eq.s32.totalorder %s33, 0
      %p248 = por %p246, %p247
      %p249 = scmp.le.s32.totalorder 1, %s27
      %p250 = scmp.lt.s32.totalorder %s27, 3
      %p251 = pnand %p249, %p250
      %p252 = pneg %p251
      // Predicated region
      $region9: #{tpu_custom_call.1} parent=5 // pred_check
        _
      $region10: #{tpu_custom_call.1} parent=5 // pred_check_branch
        %254 = sbr.rel (%p251) target = $region12
      $region11: #{tpu_custom_call.1} parent=5 // pred_region
        %s255 = ssub.s32 %s27, 1
        // Predicated region
        $region13: #{tpu_custom_call.1} parent=11 // pred_check
          %p256 = pneg %p100
        $region14: #{tpu_custom_call.1} parent=11 // pred_check_branch
          %258 = sbr.rel (%p256) target = $region16
        $region15: #{tpu_custom_call.1} parent=11 // pred_region
          _
        $region16: #{tpu_custom_call.1} parent=11 // pred_fallthru
          _
        // Predicated region
        $region17: #{tpu_custom_call.1} parent=11 // pred_check
          %p259 = pneg %p121
        $region18: #{tpu_custom_call.1} parent=11 // pred_check_branch
          %261 = sbr.rel (%p259) target = $region20
        $region19: #{tpu_custom_call.1} parent=11 // pred_region
          %s263 = ssub.s32 768, 768
          %264 = vsyncadd [#allocation6], %s263
          %s265 = sshll.u32 [#allocation7], 4
          %s266 = int_to_ptr.vmem [resolvable:$true] %s265
          %271 = dma.hbm_to_vmem [thread:$0]  %s3, 768, %s266, [#allocation6], 128, 128, 8
        $region20: #{tpu_custom_call.1} parent=11 // pred_fallthru
          _
        // Predicated region
        $region21: #{tpu_custom_call.1} parent=11 // pred_check
          %p272 = pneg %p142
        $region22: #{tpu_custom_call.1} parent=11 // pred_check_branch
          %274 = sbr.rel (%p272) target = $region24
        $region23: #{tpu_custom_call.1} parent=11 // pred_region
          _
        $region24: #{tpu_custom_call.1} parent=11 // pred_fallthru
          _
        // Predicated region
        $region25: #{tpu_custom_call.1} parent=11 // pred_check
          %p275 = pneg %p163
        $region26: #{tpu_custom_call.1} parent=11 // pred_check_branch
          %277 = sbr.rel (%p275) target = $region28
        $region27: #{tpu_custom_call.1} parent=11 // pred_region
          _
        $region28: #{tpu_custom_call.1} parent=11 // pred_fallthru
          _
      $region12: #{tpu_custom_call.1} parent=5 // pred_fallthru
        _
      %p278 = scmp.lt.s32.totalorder %s27, 2
      // Predicated region
      $region29: #{tpu_custom_call.1} parent=5 // pred_check
        %p279 = pneg %p278
      $region30: #{tpu_custom_call.1} parent=5 // pred_check_branch
        %281 = sbr.rel (%p279) target = $region32
      $region31: #{tpu_custom_call.1} parent=5 // pred_region
        // Predicated region
        $region33: #{tpu_custom_call.1} parent=31 // pred_check
          %p282 = pneg %p47
        $region34: #{tpu_custom_call.1} parent=31 // pred_check_branch
          %284 = sbr.rel (%p282) target = $region36
        $region35: #{tpu_custom_call.1} parent=31 // pred_region
          %s285 = sand.u32 %s37, 1
          %s286 = scalar_lea.sflag [#allocation3], %s285
          %s287 = sand.u32 %s37, 1
          %s288 = smul.addr %s287, 144
          %s289 = scalar_lea.vmem [#allocation2], %s288
          %s290 = smul.u32 3, %s27
          %s292 = ssub.s32 2304, 2304
          %293 = vsyncadd %s286, %s292
          %s294 = smul.addr %s290, 6
          %s295 = smul.addr %s294, 128
          %s296 = scalar_lea.hbm %s0, %s295
          %s297 = sshll.u32 %s289, 4
          %s298 = int_to_ptr.vmem [resolvable:$true] %s297
          %303 = dma.hbm_to_vmem [thread:$0]  %s296, 2304, %s298, %s286, 128, 128, 8
        $region36: #{tpu_custom_call.1} parent=31 // pred_fallthru
          _
        // Predicated region
        $region37: #{tpu_custom_call.1} parent=31 // pred_check
          %p304 = pneg %p73
        $region38: #{tpu_custom_call.1} parent=31 // pred_check_branch
          %306 = sbr.rel (%p304) target = $region40
        $region39: #{tpu_custom_call.1} parent=31 // pred_region
          %s307 = sand.u32 %s27, 1
          %s308 = scalar_lea.sflag [#allocation6], %s307
          %s309 = sand.u32 %s63, 1
          %s310 = smul.addr %s309, 144
          %s311 = scalar_lea.vmem [#allocation5], %s310
          %s312 = smul.u32 3, %s27
          %s314 = ssub.s32 2304, 2304
          %315 = vsyncadd %s308, %s314
          %s316 = smul.addr %s312, 6
          %s317 = smul.addr %s316, 128
          %s318 = scalar_lea.hbm %s1, %s317
          %s319 = sshll.u32 %s311, 4
          %s320 = int_to_ptr.vmem [resolvable:$true] %s319
          %325 = dma.hbm_to_vmem [thread:$0]  %s318, 2304, %s320, %s308, 128, 128, 8
        $region40: #{tpu_custom_call.1} parent=31 // pred_fallthru
          _
      $region32: #{tpu_custom_call.1} parent=5 // pred_fallthru
        _
      %p326 = scmp.le.s32.totalorder 1, %s27
      %p327 = scmp.lt.s32.totalorder %s27, 3
      %p328 = pnand %p326, %p327
      %p329 = pneg %p328
      // Predicated region
      $region41: #{tpu_custom_call.1} parent=5 // pred_check
        _
      $region42: #{tpu_custom_call.1} parent=5 // pred_check_branch
        %331 = sbr.rel (%p328) target = $region44
      $region43: #{tpu_custom_call.1} parent=5 // pred_region
        %s332 = ssub.s32 %s27, 1
        %s333 = sand.u32 %s40, 1
        %s334 = scalar_lea.sflag [#allocation3], %s333
        %s335 = sand.u32 %s40, 1
        %s336 = smul.addr %s335, 144
        %s337 = scalar_lea.vmem [#allocation2], %s336
        // Predicated region
        $region45: #{tpu_custom_call.1} parent=43 // pred_check
          %p338 = pneg %p53
        $region46: #{tpu_custom_call.1} parent=43 // pred_check_branch
          %340 = sbr.rel (%p338) target = $region48
        $region47: #{tpu_custom_call.1} parent=43 // pred_region
          %341 = dma.done %s334, 2304
        $region48: #{tpu_custom_call.1} parent=43 // pred_fallthru
          _
        %s342 = sand.u32 %s32, 1
        %s343 = scalar_lea.sflag [#allocation6], %s342
        %s344 = sand.u32 %s66, 1
        %s345 = smul.addr %s344, 144
        %s346 = scalar_lea.vmem [#allocation5], %s345
        // Predicated region
        $region49: #{tpu_custom_call.1} parent=43 // pred_check
          %p347 = pneg %p79
        $region50: #{tpu_custom_call.1} parent=43 // pred_check_branch
          %349 = sbr.rel (%p347) target = $region52
        $region51: #{tpu_custom_call.1} parent=43 // pred_region
          %350 = dma.done %s343, 2304
        $region52: #{tpu_custom_call.1} parent=43 // pred_fallthru
          _
        // Predicated region
        $region53: #{tpu_custom_call.1} parent=43 // pred_check
          %p351 = pneg %p121
        $region54: #{tpu_custom_call.1} parent=43 // pred_check_branch
          %353 = sbr.rel (%p351) target = $region56
        $region55: #{tpu_custom_call.1} parent=43 // pred_region
          %354 = dma.done [#allocation6], 768
        $region56: #{tpu_custom_call.1} parent=43 // pred_fallthru
          _
        %s355 = sand.u32 %s40, 1
        %s356 = scalar_lea.sflag [#allocation3], %s355
        %s357 = sand.u32 %s40, 1
        %s358 = smul.addr %s357, 144
        %s359 = scalar_lea.vmem [#allocation2], %s358
        %p360 = pneg %p53
        %p361 = pneg %p50
        %s362 = sand.u32 %s32, 1
        %s363 = scalar_lea.sflag [#allocation6], %s362
        %s364 = sand.u32 %s66, 1
        %s365 = smul.addr %s364, 144
        %s366 = scalar_lea.vmem [#allocation5], %s365
        %p367 = pneg %p79
        %p368 = pneg %p76
        %p369 = pneg %p100
        %p370 = pneg %p97
        %p371 = pneg %p121
        %p372 = pneg %p118
        %p373 = pneg %p142
        %p374 = pneg %p139
        %p375 = pneg %p163
        %p376 = pneg %p160
        %p377 = pneg %p189
        %p378 = pneg %p186
        %p379 = scmp.lt.s32.totalorder %s32, 1
        %s380 = scalar_select %p379, %s32, 1
        %s381 = smul.addr %s380, 4
        %s382 = scalar_lea.vmem %s6, %s381
        %p383 = pneg %p215
        %p384 = pneg %p212
        %s385 = sand.u32 %s202, 1
        %s386 = scalar_lea.sflag [#allocation4], %s385
        %s387 = sand.u32 %s202, 1
        %s388 = smul.addr %s387, 72
        %s389 = scalar_lea.vmem [#allocation8], %s388
        %p390 = pneg %p241
        %p391 = pneg %p238
        %s392 = sand.u32 %s228, 1
        %s393 = scalar_lea.sflag [#allocation10], %s392
        %s394 = sand.u32 %s228, 1
        %s395 = smul.addr %s394, 72
        %s396 = scalar_lea.vmem [#allocation9], %s395
        %s397 = smul.u32 3, %s32
        %s398 = smul.u32 3, %s32
        %p399 = scmp.lt.s32.totalorder %s32, 1
        %s400 = scalar_select %p399, %s32, 1
        %s401 = smul.addr %s400, 4
        %s402 = scalar_lea.vmem %s6, %s401
        %s403 = smul.u32 3, %s32
        %s404 = smul.u32 3, %s32
        %v405 = vld [vmem:[%s337] sm:$0xff]
        %v406 = vld [vmem:[%s337 + $0x8] sm:$0xff]
        %v407 = vld [vmem:[%s337 + $0x10] sm:$0xff]
        %v408 = vld [vmem:[%s337 + $0x18] sm:$0xff]
        %v409 = vld [vmem:[%s337 + $0x20] sm:$0xff]
        %v410 = vld [vmem:[%s337 + $0x28] sm:$0xff]
        %v411 = vld [vmem:[%s337 + $0x30] sm:$0xff]
        %v412 = vld [vmem:[%s337 + $0x38] sm:$0xff]
        %v413 = vld [vmem:[%s337 + $0x40] sm:$0xff]
        %v414 = vld [vmem:[%s337 + $0x48] sm:$0xff]
        %v415 = vld [vmem:[%s337 + $0x50] sm:$0xff]
        %v416 = vld [vmem:[%s337 + $0x58] sm:$0xff]
        %v417 = vld [vmem:[%s337 + $0x60] sm:$0xff]
        %v418 = vld [vmem:[%s337 + $0x68] sm:$0xff]
        %v419 = vld [vmem:[%s337 + $0x70] sm:$0xff]
        %v420 = vld [vmem:[%s337 + $0x78] sm:$0xff]
        %v421 = vld [vmem:[%s337 + $0x80] sm:$0xff]
        %v422 = vld [vmem:[%s337 + $0x88] sm:$0xff]
        %v423 = vld [vmem:[%s346] sm:$0xff]
        %v424 = vld [vmem:[%s346 + $0x8] sm:$0xff]
        %v425 = vld [vmem:[%s346 + $0x10] sm:$0xff]
        %v426 = vld [vmem:[%s346 + $0x18] sm:$0xff]
        %v427 = vld [vmem:[%s346 + $0x20] sm:$0xff]
        %v428 = vld [vmem:[%s346 + $0x28] sm:$0xff]
        %v429 = vld [vmem:[%s346 + $0x30] sm:$0xff]
        %v430 = vld [vmem:[%s346 + $0x38] sm:$0xff]
        %v431 = vld [vmem:[%s346 + $0x40] sm:$0xff]
        %v432 = vld [vmem:[%s346 + $0x48] sm:$0xff]
        %v433 = vld [vmem:[%s346 + $0x50] sm:$0xff]
        %v434 = vld [vmem:[%s346 + $0x58] sm:$0xff]
        %v435 = vld [vmem:[%s346 + $0x60] sm:$0xff]
        %v436 = vld [vmem:[%s346 + $0x68] sm:$0xff]
        %v437 = vld [vmem:[%s346 + $0x70] sm:$0xff]
        %v438 = vld [vmem:[%s346 + $0x78] sm:$0xff]
        %v439 = vld [vmem:[%s346 + $0x80] sm:$0xff]
        %v440 = vld [vmem:[%s346 + $0x88] sm:$0xff]
        %v441 = vmul.f32 %v405, %v405
        %v442 = vmul.f32 %v406, %v406
        %v443 = vmul.f32 %v407, %v407
        %v444 = vmul.f32 %v408, %v408
        %v445 = vmul.f32 %v409, %v409
        %v446 = vmul.f32 %v410, %v410
        %v447 = vmul.f32 %v411, %v411
        %v448 = vmul.f32 %v412, %v412
        %v449 = vmul.f32 %v413, %v413
        %v450 = vmul.f32 %v414, %v414
        %v451 = vmul.f32 %v415, %v415
        %v452 = vmul.f32 %v416, %v416
        %v453 = vmul.f32 %v417, %v417
        %v454 = vmul.f32 %v418, %v418
        %v455 = vmul.f32 %v419, %v419
        %v456 = vmul.f32 %v420, %v420
        %v457 = vmul.f32 %v421, %v421
        %v458 = vmul.f32 %v422, %v422
        %v459 = vmul.f32 %v423, %v423
        %v460 = vmul.f32 %v424, %v424
        %v461 = vmul.f32 %v425, %v425
        %v462 = vmul.f32 %v426, %v426
        %v463 = vmul.f32 %v427, %v427
        %v464 = vmul.f32 %v428, %v428
        %v465 = vmul.f32 %v429, %v429
        %v466 = vmul.f32 %v430, %v430
        %v467 = vmul.f32 %v431, %v431
        %v468 = vmul.f32 %v432, %v432
        %v469 = vmul.f32 %v433, %v433
        %v470 = vmul.f32 %v434, %v434
        %v471 = vmul.f32 %v435, %v435
        %v472 = vmul.f32 %v436, %v436
        %v473 = vmul.f32 %v437, %v437
        %v474 = vmul.f32 %v438, %v438
        %v475 = vmul.f32 %v439, %v439
        %v476 = vmul.f32 %v440, %v440
        %v477 = vmul.f32 %v405, %v423
        %v478 = vmul.f32 %v406, %v424
        %v479 = vmul.f32 %v407, %v425
        %v480 = vmul.f32 %v408, %v426
        %v481 = vmul.f32 %v409, %v427
        %v482 = vmul.f32 %v410, %v428
        %v483 = vmul.f32 %v411, %v429
        %v484 = vmul.f32 %v412, %v430
        %v485 = vmul.f32 %v413, %v431
        %v486 = vmul.f32 %v414, %v432
        %v487 = vmul.f32 %v415, %v433
        %v488 = vmul.f32 %v416, %v434
        %v489 = vmul.f32 %v417, %v435
        %v490 = vmul.f32 %v418, %v436
        %v491 = vmul.f32 %v419, %v437
        %v492 = vmul.f32 %v420, %v438
        %v493 = vmul.f32 %v421, %v439
        %v494 = vmul.f32 %v422, %v440
        %v495 = vld [vmem:[%s2] sm:$0xff]
        %v496 = vld [vmem:[%s2 + $0x8] sm:$0xff]
        %v497 = vld [vmem:[%s2 + $0x10] sm:$0xff]
        %v498 = vld [vmem:[%s2 + $0x18] sm:$0xff]
        %v499 = vld [vmem:[%s2 + $0x20] sm:$0xff]
        %v500 = vld [vmem:[%s2 + $0x28] sm:$0xff]
        %vm501 = vcmask 392192
        %v503 = vsel %vm501, %v405, 0
        %v506 = vsel %vm501, %v406, 0
        %v509 = vsel %vm501, %v407, 0
        %v512 = vsel %vm501, %v408, 0
        %v515 = vsel %vm501, %v409, 0
        %v518 = vsel %vm501, %v410, 0
        %v521 = vsel %vm501, %v411, 0
        %v524 = vsel %vm501, %v412, 0
        %v527 = vsel %vm501, %v413, 0
        %v530 = vsel %vm501, %v414, 0
        %v533 = vsel %vm501, %v415, 0
        %v536 = vsel %vm501, %v416, 0
        %v539 = vsel %vm501, %v417, 0
        %v542 = vsel %vm501, %v418, 0
        %v545 = vsel %vm501, %v419, 0
        %v548 = vsel %vm501, %v420, 0
        %v551 = vsel %vm501, %v421, 0
        %v554 = vsel %vm501, %v422, 0
        %v557 = vsel %vm501, %v423, 0
        %v560 = vsel %vm501, %v424, 0
        %v563 = vsel %vm501, %v425, 0
        %v566 = vsel %vm501, %v426, 0
        %v569 = vsel %vm501, %v427, 0
        %v572 = vsel %vm501, %v428, 0
        %v575 = vsel %vm501, %v429, 0
        %v578 = vsel %vm501, %v430, 0
        %v581 = vsel %vm501, %v431, 0
        %v584 = vsel %vm501, %v432, 0
        %v587 = vsel %vm501, %v433, 0
        %v590 = vsel %vm501, %v434, 0
        %v593 = vsel %vm501, %v435, 0
        %v596 = vsel %vm501, %v436, 0
        %v599 = vsel %vm501, %v437, 0
        %v602 = vsel %vm501, %v438, 0
        %v605 = vsel %vm501, %v439, 0
        %v608 = vsel %vm501, %v440, 0
        %v611 = vsel %vm501, %v441, 0
        %v614 = vsel %vm501, %v442, 0
        %v617 = vsel %vm501, %v443, 0
        %v620 = vsel %vm501, %v444, 0
        %v623 = vsel %vm501, %v445, 0
        %v626 = vsel %vm501, %v446, 0
        %v629 = vsel %vm501, %v447, 0
        %v632 = vsel %vm501, %v448, 0
        %v635 = vsel %vm501, %v449, 0
        %v638 = vsel %vm501, %v450, 0
        %v641 = vsel %vm501, %v451, 0
        %v644 = vsel %vm501, %v452, 0
        %v647 = vsel %vm501, %v453, 0
        %v650 = vsel %vm501, %v454, 0
        %v653 = vsel %vm501, %v455, 0
        %v656 = vsel %vm501, %v456, 0
        %v659 = vsel %vm501, %v457, 0
        %v662 = vsel %vm501, %v458, 0
        %v665 = vsel %vm501, %v459, 0
        %v668 = vsel %vm501, %v460, 0
        %v671 = vsel %vm501, %v461, 0
        %v674 = vsel %vm501, %v462, 0
        %v677 = vsel %vm501, %v463, 0
        %v680 = vsel %vm501, %v464, 0
        %v683 = vsel %vm501, %v465, 0
        %v686 = vsel %vm501, %v466, 0
        %v689 = vsel %vm501, %v467, 0
        %v692 = vsel %vm501, %v468, 0
        %v695 = vsel %vm501, %v469, 0
        %v698 = vsel %vm501, %v470, 0
        %v701 = vsel %vm501, %v471, 0
        %v704 = vsel %vm501, %v472, 0
        %v707 = vsel %vm501, %v473, 0
        %v710 = vsel %vm501, %v474, 0
        %v713 = vsel %vm501, %v475, 0
        %v716 = vsel %vm501, %v476, 0
        %v719 = vsel %vm501, %v477, 0
        %v722 = vsel %vm501, %v478, 0
        %v725 = vsel %vm501, %v479, 0
        %v728 = vsel %vm501, %v480, 0
        %v731 = vsel %vm501, %v481, 0
        %v734 = vsel %vm501, %v482, 0
        %v737 = vsel %vm501, %v483, 0
        %v740 = vsel %vm501, %v484, 0
        %v743 = vsel %vm501, %v485, 0
        %v746 = vsel %vm501, %v486, 0
        %v749 = vsel %vm501, %v487, 0
        %v752 = vsel %vm501, %v488, 0
        %v755 = vsel %vm501, %v489, 0
        %v758 = vsel %vm501, %v490, 0
        %v761 = vsel %vm501, %v491, 0
        %v764 = vsel %vm501, %v492, 0
        %v767 = vsel %vm501, %v493, 0
        %v770 = vsel %vm501, %v494, 0
        %772 = vmatprep.subr.mxu0 0.0
        %773 = vmatpush1.msra.mxu0 %v495
        %774 = vmatprep.subr.mxu0 0.0
        %775 = vmatpush1.msra.mxu0 %v496
        %776 = vmatprep.subr.mxu0 0.0
        %777 = vmatpush1.msra.mxu0 %v497
        %778 = vmatprep.subr.mxu0 0.0
        %779 = vmatpush1.msra.mxu0 %v498
        %780 = vmatprep.subr.mxu0 0.0
        %781 = vmatpush1.msra.mxu0 %v499
        %782 = vmatprep.subr.mxu0 0.0
        %783 = vmatpush1.msra.mxu0 %v500
        %784 = vmatprep.subr.mxu0 0.0
        %785 = vmatpush1.msra.mxu0 0.0
        %786 = vmatprep.subr.mxu0 0.0
        %787 = vmatpush1.msra.mxu0 0.0
        %788 = vmatprep.subr.mxu0 0.0
        %789 = vmatpush1.msra.mxu0 0.0
        %790 = vmatprep.subr.mxu0 0.0
        %791 = vmatpush1.msra.mxu0 0.0
        %792 = vmatprep.subr.mxu0 0.0
        %793 = vmatpush1.msra.mxu0 0.0
        %794 = vmatprep.subr.mxu0 0.0
        %795 = vmatpush1.msra.mxu0 0.0
        %796 = vmatprep.subr.mxu0 0.0
        %797 = vmatpush1.msra.mxu0 0.0
        %798 = vmatprep.subr.mxu0 0.0
        %799 = vmatpush1.msra.mxu0 0.0
        %800 = vmatprep.subr.mxu0 0.0
        %801 = vmatpush1.msra.mxu0 0.0
        %802 = vmatprep.subr.mxu0 0.0
        %803 = vmatpush1.msra.mxu0 0.0
        %804 = vmatprep.subr.mxu0 0.0
        %805 = vmatpush1.msra.mxu0 0.0
        %806 = vmatprep.subr.mxu0 0.0
        %807 = vmatpush1.msra.mxu0 0.0
        %808 = vmatprep.subr.mxu0 0.0
        %809 = vmatpush1.msra.mxu0 0.0
        %810 = vmatprep.subr.mxu0 0.0
        %811 = vmatpush1.msra.mxu0 0.0
        %812 = vmatprep.subr.mxu0 0.0
        %813 = vmatpush1.msra.mxu0 0.0
        %814 = vmatprep.subr.mxu0 0.0
        %815 = vmatpush1.msra.mxu0 0.0
        %816 = vmatprep.subr.mxu0 0.0
        %817 = vmatpush1.msra.mxu0 0.0
        %818 = vmatprep.subr.mxu0 0.0
        %819 = vmatpush1.msra.mxu0 0.0
        %820 = vmatprep.subr.mxu0 0.0
        %821 = vmatpush1.msra.mxu0 0.0
        %822 = vmatprep.subr.mxu0 0.0
        %823 = vmatpush1.msra.mxu0 0.0
        %824 = vmatprep.subr.mxu0 0.0
        %825 = vmatpush1.msra.mxu0 0.0
        %826 = vmatprep.subr.mxu0 0.0
        %827 = vmatpush1.msra.mxu0 0.0
        %828 = vmatprep.subr.mxu0 0.0
        %829 = vmatpush1.msra.mxu0 0.0
        %830 = vmatprep.subr.mxu0 0.0
        %831 = vmatpush1.msra.mxu0 0.0
        %832 = vmatprep.subr.mxu0 0.0
        %833 = vmatpush1.msra.mxu0 0.0
        %834 = vmatprep.subr.mxu0 0.0
        %835 = vmatpush1.msra.mxu0 0.0
        %836 = vmatprep.mubr.f32.mxu0 0.0
        %837 = vmatmul.mubr.f32.gmra.mrb[0].mxu0 %v503
        %v838 = vpop.f32.mrb[0].mxu0
        %v839 = vadd.f32 0.0, %v838
        %v840 = vpop.f32.mrb[0].mxu0
        %841 = vmatprep.mubr.f32.mxu0 0.0
        %842 = vmatmul.mubr.f32.gmra.mrb[0].mxu0 %v506
        %v843 = vpop.f32.mrb[0].mxu0
        %v844 = vadd.f32 0.0, %v843
        %v845 = vpop.f32.mrb[0].mxu0
        %846 = vmatprep.mubr.f32.mxu0 0.0
        %847 = vmatmul.mubr.f32.gmra.mrb[0].mxu0 %v509
        %v848 = vpop.f32.mrb[0].mxu0
        %v849 = vadd.f32 0.0, %v848
        %v850 = vpop.f32.mrb[0].mxu0
        %851 = vmatprep.mubr.f32.mxu0 0.0
        %852 = vmatmul.mubr.f32.gmra.mrb[0].mxu0 %v512
        %v853 = vpop.f32.mrb[0].mxu0
        %v854 = vadd.f32 0.0, %v853
        %v855 = vpop.f32.mrb[0].mxu0
        %856 = vmatprep.mubr.f32.mxu0 0.0
        %857 = vmatmul.mubr.f32.gmra.mrb[0].mxu0 %v515
        %v858 = vpop.f32.mrb[0].mxu0
        %v859 = vadd.f32 0.0, %v858
        %v860 = vpop.f32.mrb[0].mxu0
        %861 = vmatprep.mubr.f32.mxu0 0.0
        %862 = vmatmul.mubr.f32.gmra.mrb[0].mxu0 %v518
        %v863 = vpop.f32.mrb[0].mxu0
        %v864 = vadd.f32 0.0, %v863
        %v865 = vpop.f32.mrb[0].mxu0
        %866 = vmatprep.mubr.f32.mxu0 0.0
        %867 = vmatmul.mubr.f32.gmra.mrb[0].mxu0 %v521
        %v868 = vpop.f32.mrb[0].mxu0
        %v869 = vadd.f32 0.0, %v868
        %v870 = vpop.f32.mrb[0].mxu0
        %871 = vmatprep.mubr.f32.mxu0 0.0
        %872 = vmatmul.mubr.f32.gmra.mrb[0].mxu0 %v524
        %v873 = vpop.f32.mrb[0].mxu0
        %v874 = vadd.f32 0.0, %v873
        %v875 = vpop.f32.mrb[0].mxu0
        %876 = vmatprep.mubr.f32.mxu0 0.0
        %877 = vmatmul.mubr.f32.gmra.mrb[0].mxu0 %v527
        %v878 = vpop.f32.mrb[0].mxu0
        %v879 = vadd.f32 0.0, %v878
        %v880 = vpop.f32.mrb[0].mxu0
        %881 = vmatprep.mubr.f32.mxu0 0.0
        %882 = vmatmul.mubr.f32.gmra.mrb[0].mxu0 %v530
        %v883 = vpop.f32.mrb[0].mxu0
        %v884 = vadd.f32 0.0, %v883
        %v885 = vpop.f32.mrb[0].mxu0
        %886 = vmatprep.mubr.f32.mxu0 0.0
        %887 = vmatmul.mubr.f32.gmra.mrb[0].mxu0 %v533
        %v888 = vpop.f32.mrb[0].mxu0
        %v889 = vadd.f32 0.0, %v888
        %v890 = vpop.f32.mrb[0].mxu0
        %891 = vmatprep.mubr.f32.mxu0 0.0
        %892 = vmatmul.mubr.f32.gmra.mrb[0].mxu0 %v536
        %v893 = vpop.f32.mrb[0].mxu0
        %v894 = vadd.f32 0.0, %v893
        %v895 = vpop.f32.mrb[0].mxu0
        %896 = vmatprep.mubr.f32.mxu0 0.0
        %897 = vmatmul.mubr.f32.gmra.mrb[0].mxu0 %v539
        %v898 = vpop.f32.mrb[0].mxu0
        %v899 = vadd.f32 0.0, %v898
        %v900 = vpop.f32.mrb[0].mxu0
        %901 = vmatprep.mubr.f32.mxu0 0.0
        %902 = vmatmul.mubr.f32.gmra.mrb[0].mxu0 %v542
        %v903 = vpop.f32.mrb[0].mxu0
        %v904 = vadd.f32 0.0, %v903
        %v905 = vpop.f32.mrb[0].mxu0
        %906 = vmatprep.mubr.f32.mxu0 0.0
        %907 = vmatmul.mubr.f32.gmra.mrb[0].mxu0 %v545
        %v908 = vpop.f32.mrb[0].mxu0
        %v909 = vadd.f32 0.0, %v908
        %v910 = vpop.f32.mrb[0].mxu0
        %911 = vmatprep.mubr.f32.mxu0 0.0
        %912 = vmatmul.mubr.f32.gmra.mrb[0].mxu0 %v548
        %v913 = vpop.f32.mrb[0].mxu0
        %v914 = vadd.f32 0.0, %v913
        %v915 = vpop.f32.mrb[0].mxu0
        %916 = vmatprep.mubr.f32.mxu0 0.0
        %917 = vmatmul.mubr.f32.gmra.mrb[0].mxu0 %v551
        %v918 = vpop.f32.mrb[0].mxu0
        %v919 = vadd.f32 0.0, %v918
        %v920 = vpop.f32.mrb[0].mxu0
        %921 = vmatprep.mubr.f32.mxu0 0.0
        %922 = vmatmul.mubr.f32.gmra.mrb[0].mxu0 %v554
        %v923 = vpop.f32.mrb[0].mxu0
        %v924 = vadd.f32 0.0, %v923
        %v925 = vpop.f32.mrb[0].mxu0
        %926 = vmatprep.mubr.f32.mxu0 0.0
        %927 = vmatmul.mubr.f32.gmra.mrb[0].mxu0 %v557
        %v928 = vpop.f32.mrb[0].mxu0
        %v929 = vadd.f32 0.0, %v928
        %v930 = vpop.f32.mrb[0].mxu0
        %931 = vmatprep.mubr.f32.mxu0 0.0
        %932 = vmatmul.mubr.f32.gmra.mrb[0].mxu0 %v560
        %v933 = vpop.f32.mrb[0].mxu0
        %v934 = vadd.f32 0.0, %v933
        %v935 = vpop.f32.mrb[0].mxu0
        %936 = vmatprep.mubr.f32.mxu0 0.0
        %937 = vmatmul.mubr.f32.gmra.mrb[0].mxu0 %v563
        %v938 = vpop.f32.mrb[0].mxu0
        %v939 = vadd.f32 0.0, %v938
        %v940 = vpop.f32.mrb[0].mxu0
        %941 = vmatprep.mubr.f32.mxu0 0.0
        %942 = vmatmul.mubr.f32.gmra.mrb[0].mxu0 %v566
        %v943 = vpop.f32.mrb[0].mxu0
        %v944 = vadd.f32 0.0, %v943
        %v945 = vpop.f32.mrb[0].mxu0
        %946 = vmatprep.mubr.f32.mxu0 0.0
        %947 = vmatmul.mubr.f32.gmra.mrb[0].mxu0 %v569
        %v948 = vpop.f32.mrb[0].mxu0
        %v949 = vadd.f32 0.0, %v948
        %v950 = vpop.f32.mrb[0].mxu0
        %951 = vmatprep.mubr.f32.mxu0 0.0
        %952 = vmatmul.mubr.f32.gmra.mrb[0].mxu0 %v572
        %v953 = vpop.f32.mrb[0].mxu0
        %v954 = vadd.f32 0.0, %v953
        %v955 = vpop.f32.mrb[0].mxu0
        %956 = vmatprep.mubr.f32.mxu0 0.0
        %957 = vmatmul.mubr.f32.gmra.mrb[0].mxu0 %v575
        %v958 = vpop.f32.mrb[0].mxu0
        %v959 = vadd.f32 0.0, %v958
        %v960 = vpop.f32.mrb[0].mxu0
        %961 = vmatprep.mubr.f32.mxu0 0.0
        %962 = vmatmul.mubr.f32.gmra.mrb[0].mxu0 %v578
        %v963 = vpop.f32.mrb[0].mxu0
        %v964 = vadd.f32 0.0, %v963
        %v965 = vpop.f32.mrb[0].mxu0
        %966 = vmatprep.mubr.f32.mxu0 0.0
        %967 = vmatmul.mubr.f32.gmra.mrb[0].mxu0 %v581
        %v968 = vpop.f32.mrb[0].mxu0
        %v969 = vadd.f32 0.0, %v968
        %v970 = vpop.f32.mrb[0].mxu0
        %971 = vmatprep.mubr.f32.mxu0 0.0
        %972 = vmatmul.mubr.f32.gmra.mrb[0].mxu0 %v584
        %v973 = vpop.f32.mrb[0].mxu0
        %v974 = vadd.f32 0.0, %v973
        %v975 = vpop.f32.mrb[0].mxu0
        %976 = vmatprep.mubr.f32.mxu0 0.0
        %977 = vmatmul.mubr.f32.gmra.mrb[0].mxu0 %v587
        %v978 = vpop.f32.mrb[0].mxu0
        %v979 = vadd.f32 0.0, %v978
        %v980 = vpop.f32.mrb[0].mxu0
        %981 = vmatprep.mubr.f32.mxu0 0.0
        %982 = vmatmul.mubr.f32.gmra.mrb[0].mxu0 %v590
        %v983 = vpop.f32.mrb[0].mxu0
        %v984 = vadd.f32 0.0, %v983
        %v985 = vpop.f32.mrb[0].mxu0
        %986 = vmatprep.mubr.f32.mxu0 0.0
        %987 = vmatmul.mubr.f32.gmra.mrb[0].mxu0 %v593
        %v988 = vpop.f32.mrb[0].mxu0
        %v989 = vadd.f32 0.0, %v988
        %v990 = vpop.f32.mrb[0].mxu0
        %991 = vmatprep.mubr.f32.mxu0 0.0
        %992 = vmatmul.mubr.f32.gmra.mrb[0].mxu0 %v596
        %v993 = vpop.f32.mrb[0].mxu0
        %v994 = vadd.f32 0.0, %v993
        %v995 = vpop.f32.mrb[0].mxu0
        %996 = vmatprep.mubr.f32.mxu0 0.0
        %997 = vmatmul.mubr.f32.gmra.mrb[0].mxu0 %v599
        %v998 = vpop.f32.mrb[0].mxu0
        %v999 = vadd.f32 0.0, %v998
        %v1000 = vpop.f32.mrb[0].mxu0
        %1001 = vmatprep.mubr.f32.mxu0 0.0
        %1002 = vmatmul.mubr.f32.gmra.mrb[0].mxu0 %v602
        %v1003 = vpop.f32.mrb[0].mxu0
        %v1004 = vadd.f32 0.0, %v1003
        %v1005 = vpop.f32.mrb[0].mxu0
        %1006 = vmatprep.mubr.f32.mxu0 0.0
        %1007 = vmatmul.mubr.f32.gmra.mrb[0].mxu0 %v605
        %v1008 = vpop.f32.mrb[0].mxu0
        %v1009 = vadd.f32 0.0, %v1008
        %v1010 = vpop.f32.mrb[0].mxu0
        %1011 = vmatprep.mubr.f32.mxu0 0.0
        %1012 = vmatmul.mubr.f32.gmra.mrb[0].mxu0 %v608
        %v1013 = vpop.f32.mrb[0].mxu0
        %v1014 = vadd.f32 0.0, %v1013
        %v1015 = vpop.f32.mrb[0].mxu0
        %1016 = vmatprep.mubr.f32.mxu0 0.0
        %1017 = vmatmul.mubr.f32.gmra.mrb[0].mxu0 %v611
        %v1018 = vpop.f32.mrb[0].mxu0
        %v1019 = vadd.f32 0.0, %v1018
        %v1020 = vpop.f32.mrb[0].mxu0
        %1021 = vmatprep.mubr.f32.mxu0 0.0
        %1022 = vmatmul.mubr.f32.gmra.mrb[0].mxu0 %v614
        %v1023 = vpop.f32.mrb[0].mxu0
        %v1024 = vadd.f32 0.0, %v1023
        %v1025 = vpop.f32.mrb[0].mxu0
        %1026 = vmatprep.mubr.f32.mxu0 0.0
        %1027 = vmatmul.mubr.f32.gmra.mrb[0].mxu0 %v617
        %v1028 = vpop.f32.mrb[0].mxu0
        %v1029 = vadd.f32 0.0, %v1028
        %v1030 = vpop.f32.mrb[0].mxu0
        %1031 = vmatprep.mubr.f32.mxu0 0.0
        %1032 = vmatmul.mubr.f32.gmra.mrb[0].mxu0 %v620
        %v1033 = vpop.f32.mrb[0].mxu0
        %v1034 = vadd.f32 0.0, %v1033
        %v1035 = vpop.f32.mrb[0].mxu0
        %1036 = vmatprep.mubr.f32.mxu0 0.0
        %1037 = vmatmul.mubr.f32.gmra.mrb[0].mxu0 %v623
        %v1038 = vpop.f32.mrb[0].mxu0
        %v1039 = vadd.f32 0.0, %v1038
        %v1040 = vpop.f32.mrb[0].mxu0
        %1041 = vmatprep.mubr.f32.mxu0 0.0
        %1042 = vmatmul.mubr.f32.gmra.mrb[0].mxu0 %v626
        %v1043 = vpop.f32.mrb[0].mxu0
        %v1044 = vadd.f32 0.0, %v1043
        %v1045 = vpop.f32.mrb[0].mxu0
        %1046 = vmatprep.mubr.f32.mxu0 0.0
        %1047 = vmatmul.mubr.f32.gmra.mrb[0].mxu0 %v629
        %v1048 = vpop.f32.mrb[0].mxu0
        %v1049 = vadd.f32 0.0, %v1048
        %v1050 = vpop.f32.mrb[0].mxu0
        %1051 = vmatprep.mubr.f32.mxu0 0.0
        %1052 = vmatmul.mubr.f32.gmra.mrb[0].mxu0 %v632
        %v1053 = vpop.f32.mrb[0].mxu0
        %v1054 = vadd.f32 0.0, %v1053
        %v1055 = vpop.f32.mrb[0].mxu0
        %1056 = vmatprep.mubr.f32.mxu0 0.0
        %1057 = vmatmul.mubr.f32.gmra.mrb[0].mxu0 %v635
        %v1058 = vpop.f32.mrb[0].mxu0
        %v1059 = vadd.f32 0.0, %v1058
        %v1060 = vpop.f32.mrb[0].mxu0
        %1061 = vmatprep.mubr.f32.mxu0 0.0
        %1062 = vmatmul.mubr.f32.gmra.mrb[0].mxu0 %v638
        %v1063 = vpop.f32.mrb[0].mxu0
        %v1064 = vadd.f32 0.0, %v1063
        %v1065 = vpop.f32.mrb[0].mxu0
        %1066 = vmatprep.mubr.f32.mxu0 0.0
        %1067 = vmatmul.mubr.f32.gmra.mrb[0].mxu0 %v641
        %v1068 = vpop.f32.mrb[0].mxu0
        %v1069 = vadd.f32 0.0, %v1068
        %v1070 = vpop.f32.mrb[0].mxu0
        %1071 = vmatprep.mubr.f32.mxu0 0.0
        %1072 = vmatmul.mubr.f32.gmra.mrb[0].mxu0 %v644
        %v1073 = vpop.f32.mrb[0].mxu0
        %v1074 = vadd.f32 0.0, %v1073
        %v1075 = vpop.f32.mrb[0].mxu0
        %1076 = vmatprep.mubr.f32.mxu0 0.0
        %1077 = vmatmul.mubr.f32.gmra.mrb[0].mxu0 %v647
        %v1078 = vpop.f32.mrb[0].mxu0
        %v1079 = vadd.f32 0.0, %v1078
        %v1080 = vpop.f32.mrb[0].mxu0
        %1081 = vmatprep.mubr.f32.mxu0 0.0
        %1082 = vmatmul.mubr.f32.gmra.mrb[0].mxu0 %v650
        %v1083 = vpop.f32.mrb[0].mxu0
        %v1084 = vadd.f32 0.0, %v1083
        %v1085 = vpop.f32.mrb[0].mxu0
        %1086 = vmatprep.mubr.f32.mxu0 0.0
        %1087 = vmatmul.mubr.f32.gmra.mrb[0].mxu0 %v653
        %v1088 = vpop.f32.mrb[0].mxu0
        %v1089 = vadd.f32 0.0, %v1088
        %v1090 = vpop.f32.mrb[0].mxu0
        %1091 = vmatprep.mubr.f32.mxu0 0.0
        %1092 = vmatmul.mubr.f32.gmra.mrb[0].mxu0 %v656
        %v1093 = vpop.f32.mrb[0].mxu0
        %v1094 = vadd.f32 0.0, %v1093
        %v1095 = vpop.f32.mrb[0].mxu0
        %1096 = vmatprep.mubr.f32.mxu0 0.0
        %1097 = vmatmul.mubr.f32.gmra.mrb[0].mxu0 %v659
        %v1098 = vpop.f32.mrb[0].mxu0
        %v1099 = vadd.f32 0.0, %v1098
        %v1100 = vpop.f32.mrb[0].mxu0
        %1101 = vmatprep.mubr.f32.mxu0 0.0
        %1102 = vmatmul.mubr.f32.gmra.mrb[0].mxu0 %v662
        %v1103 = vpop.f32.mrb[0].mxu0
        %v1104 = vadd.f32 0.0, %v1103
        %v1105 = vpop.f32.mrb[0].mxu0
        %1106 = vmatprep.mubr.f32.mxu0 0.0
        %1107 = vmatmul.mubr.f32.gmra.mrb[0].mxu0 %v665
        %v1108 = vpop.f32.mrb[0].mxu0
        %v1109 = vadd.f32 0.0, %v1108
        %v1110 = vpop.f32.mrb[0].mxu0
        %1111 = vmatprep.mubr.f32.mxu0 0.0
        %1112 = vmatmul.mubr.f32.gmra.mrb[0].mxu0 %v668
        %v1113 = vpop.f32.mrb[0].mxu0
        %v1114 = vadd.f32 0.0, %v1113
        %v1115 = vpop.f32.mrb[0].mxu0
        %1116 = vmatprep.mubr.f32.mxu0 0.0
        %1117 = vmatmul.mubr.f32.gmra.mrb[0].mxu0 %v671
        %v1118 = vpop.f32.mrb[0].mxu0
        %v1119 = vadd.f32 0.0, %v1118
        %v1120 = vpop.f32.mrb[0].mxu0
        %1121 = vmatprep.mubr.f32.mxu0 0.0
        %1122 = vmatmul.mubr.f32.gmra.mrb[0].mxu0 %v674
        %v1123 = vpop.f32.mrb[0].mxu0
        %v1124 = vadd.f32 0.0, %v1123
        %v1125 = vpop.f32.mrb[0].mxu0
        %1126 = vmatprep.mubr.f32.mxu0 0.0
        %1127 = vmatmul.mubr.f32.gmra.mrb[0].mxu0 %v677
        %v1128 = vpop.f32.mrb[0].mxu0
        %v1129 = vadd.f32 0.0, %v1128
        %v1130 = vpop.f32.mrb[0].mxu0
        %1131 = vmatprep.mubr.f32.mxu0 0.0
        %1132 = vmatmul.mubr.f32.gmra.mrb[0].mxu0 %v680
        %v1133 = vpop.f32.mrb[0].mxu0
        %v1134 = vadd.f32 0.0, %v1133
        %v1135 = vpop.f32.mrb[0].mxu0
        %1136 = vmatprep.mubr.f32.mxu0 0.0
        %1137 = vmatmul.mubr.f32.gmra.mrb[0].mxu0 %v683
        %v1138 = vpop.f32.mrb[0].mxu0
        %v1139 = vadd.f32 0.0, %v1138
        %v1140 = vpop.f32.mrb[0].mxu0
        %1141 = vmatprep.mubr.f32.mxu0 0.0
        %1142 = vmatmul.mubr.f32.gmra.mrb[0].mxu0 %v686
        %v1143 = vpop.f32.mrb[0].mxu0
        %v1144 = vadd.f32 0.0, %v1143
        %v1145 = vpop.f32.mrb[0].mxu0
        %1146 = vmatprep.mubr.f32.mxu0 0.0
        %1147 = vmatmul.mubr.f32.gmra.mrb[0].mxu0 %v689
        %v1148 = vpop.f32.mrb[0].mxu0
        %v1149 = vadd.f32 0.0, %v1148
        %v1150 = vpop.f32.mrb[0].mxu0
        %1151 = vmatprep.mubr.f32.mxu0 0.0
        %1152 = vmatmul.mubr.f32.gmra.mrb[0].mxu0 %v692
        %v1153 = vpop.f32.mrb[0].mxu0
        %v1154 = vadd.f32 0.0, %v1153
        %v1155 = vpop.f32.mrb[0].mxu0
        %1156 = vmatprep.mubr.f32.mxu0 0.0
        %1157 = vmatmul.mubr.f32.gmra.mrb[0].mxu0 %v695
        %v1158 = vpop.f32.mrb[0].mxu0
        %v1159 = vadd.f32 0.0, %v1158
        %v1160 = vpop.f32.mrb[0].mxu0
        %1161 = vmatprep.mubr.f32.mxu0 0.0
        %1162 = vmatmul.mubr.f32.gmra.mrb[0].mxu0 %v698
        %v1163 = vpop.f32.mrb[0].mxu0
        %v1164 = vadd.f32 0.0, %v1163
        %v1165 = vpop.f32.mrb[0].mxu0
        %1166 = vmatprep.mubr.f32.mxu0 0.0
        %1167 = vmatmul.mubr.f32.gmra.mrb[0].mxu0 %v701
        %v1168 = vpop.f32.mrb[0].mxu0
        %v1169 = vadd.f32 0.0, %v1168
        %v1170 = vpop.f32.mrb[0].mxu0
        %1171 = vmatprep.mubr.f32.mxu0 0.0
        %1172 = vmatmul.mubr.f32.gmra.mrb[0].mxu0 %v704
        %v1173 = vpop.f32.mrb[0].mxu0
        %v1174 = vadd.f32 0.0, %v1173
        %v1175 = vpop.f32.mrb[0].mxu0
        %1176 = vmatprep.mubr.f32.mxu0 0.0
        %1177 = vmatmul.mubr.f32.gmra.mrb[0].mxu0 %v707
        %v1178 = vpop.f32.mrb[0].mxu0
        %v1179 = vadd.f32 0.0, %v1178
        %v1180 = vpop.f32.mrb[0].mxu0
        %1181 = vmatprep.mubr.f32.mxu0 0.0
        %1182 = vmatmul.mubr.f32.gmra.mrb[0].mxu0 %v710
        %v1183 = vpop.f32.mrb[0].mxu0
        %v1184 = vadd.f32 0.0, %v1183
        %v1185 = vpop.f32.mrb[0].mxu0
        %1186 = vmatprep.mubr.f32.mxu0 0.0
        %1187 = vmatmul.mubr.f32.gmra.mrb[0].mxu0 %v713
        %v1188 = vpop.f32.mrb[0].mxu0
        %v1189 = vadd.f32 0.0, %v1188
        %v1190 = vpop.f32.mrb[0].mxu0
        %1191 = vmatprep.mubr.f32.mxu0 0.0
        %1192 = vmatmul.mubr.f32.gmra.mrb[0].mxu0 %v716
        %v1193 = vpop.f32.mrb[0].mxu0
        %v1194 = vadd.f32 0.0, %v1193
        %v1195 = vpop.f32.mrb[0].mxu0
        %1196 = vmatprep.mubr.f32.mxu0 0.0
        %1197 = vmatmul.mubr.f32.gmra.mrb[0].mxu0 %v719
        %v1198 = vpop.f32.mrb[0].mxu0
        %v1199 = vadd.f32 0.0, %v1198
        %v1200 = vpop.f32.mrb[0].mxu0
        %1201 = vmatprep.mubr.f32.mxu0 0.0
        %1202 = vmatmul.mubr.f32.gmra.mrb[0].mxu0 %v722
        %v1203 = vpop.f32.mrb[0].mxu0
        %v1204 = vadd.f32 0.0, %v1203
        %v1205 = vpop.f32.mrb[0].mxu0
        %1206 = vmatprep.mubr.f32.mxu0 0.0
        %1207 = vmatmul.mubr.f32.gmra.mrb[0].mxu0 %v725
        %v1208 = vpop.f32.mrb[0].mxu0
        %v1209 = vadd.f32 0.0, %v1208
        %v1210 = vpop.f32.mrb[0].mxu0
        %1211 = vmatprep.mubr.f32.mxu0 0.0
        %1212 = vmatmul.mubr.f32.gmra.mrb[0].mxu0 %v728
        %v1213 = vpop.f32.mrb[0].mxu0
        %v1214 = vadd.f32 0.0, %v1213
        %v1215 = vpop.f32.mrb[0].mxu0
        %1216 = vmatprep.mubr.f32.mxu0 0.0
        %1217 = vmatmul.mubr.f32.gmra.mrb[0].mxu0 %v731
        %v1218 = vpop.f32.mrb[0].mxu0
        %v1219 = vadd.f32 0.0, %v1218
        %v1220 = vpop.f32.mrb[0].mxu0
        %1221 = vmatprep.mubr.f32.mxu0 0.0
        %1222 = vmatmul.mubr.f32.gmra.mrb[0].mxu0 %v734
        %v1223 = vpop.f32.mrb[0].mxu0
        %v1224 = vadd.f32 0.0, %v1223
        %v1225 = vpop.f32.mrb[0].mxu0
        %1226 = vmatprep.mubr.f32.mxu0 0.0
        %1227 = vmatmul.mubr.f32.gmra.mrb[0].mxu0 %v737
        %v1228 = vpop.f32.mrb[0].mxu0
        %v1229 = vadd.f32 0.0, %v1228
        %v1230 = vpop.f32.mrb[0].mxu0
        %1231 = vmatprep.mubr.f32.mxu0 0.0
        %1232 = vmatmul.mubr.f32.gmra.mrb[0].mxu0 %v740
        %v1233 = vpop.f32.mrb[0].mxu0
        %v1234 = vadd.f32 0.0, %v1233
        %v1235 = vpop.f32.mrb[0].mxu0
        %1236 = vmatprep.mubr.f32.mxu0 0.0
        %1237 = vmatmul.mubr.f32.gmra.mrb[0].mxu0 %v743
        %v1238 = vpop.f32.mrb[0].mxu0
        %v1239 = vadd.f32 0.0, %v1238
        %v1240 = vpop.f32.mrb[0].mxu0
        %1241 = vmatprep.mubr.f32.mxu0 0.0
        %1242 = vmatmul.mubr.f32.gmra.mrb[0].mxu0 %v746
        %v1243 = vpop.f32.mrb[0].mxu0
        %v1244 = vadd.f32 0.0, %v1243
        %v1245 = vpop.f32.mrb[0].mxu0
        %1246 = vmatprep.mubr.f32.mxu0 0.0
        %1247 = vmatmul.mubr.f32.gmra.mrb[0].mxu0 %v749
        %v1248 = vpop.f32.mrb[0].mxu0
        %v1249 = vadd.f32 0.0, %v1248
        %v1250 = vpop.f32.mrb[0].mxu0
        %1251 = vmatprep.mubr.f32.mxu0 0.0
        %1252 = vmatmul.mubr.f32.gmra.mrb[0].mxu0 %v752
        %v1253 = vpop.f32.mrb[0].mxu0
        %v1254 = vadd.f32 0.0, %v1253
        %v1255 = vpop.f32.mrb[0].mxu0
        %1256 = vmatprep.mubr.f32.mxu0 0.0
        %1257 = vmatmul.mubr.f32.gmra.mrb[0].mxu0 %v755
        %v1258 = vpop.f32.mrb[0].mxu0
        %v1259 = vadd.f32 0.0, %v1258
        %v1260 = vpop.f32.mrb[0].mxu0
        %1261 = vmatprep.mubr.f32.mxu0 0.0
        %1262 = vmatmul.mubr.f32.gmra.mrb[0].mxu0 %v758
        %v1263 = vpop.f32.mrb[0].mxu0
        %v1264 = vadd.f32 0.0, %v1263
        %v1265 = vpop.f32.mrb[0].mxu0
        %1266 = vmatprep.mubr.f32.mxu0 0.0
        %1267 = vmatmul.mubr.f32.gmra.mrb[0].mxu0 %v761
        %v1268 = vpop.f32.mrb[0].mxu0
        %v1269 = vadd.f32 0.0, %v1268
        %v1270 = vpop.f32.mrb[0].mxu0
        %1271 = vmatprep.mubr.f32.mxu0 0.0
        %1272 = vmatmul.mubr.f32.gmra.mrb[0].mxu0 %v764
        %v1273 = vpop.f32.mrb[0].mxu0
        %v1274 = vadd.f32 0.0, %v1273
        %v1275 = vpop.f32.mrb[0].mxu0
        %1276 = vmatprep.mubr.f32.mxu0 0.0
        %1277 = vmatmul.mubr.f32.gmra.mrb[0].mxu0 %v767
        %v1278 = vpop.f32.mrb[0].mxu0
        %v1279 = vadd.f32 0.0, %v1278
        %v1280 = vpop.f32.mrb[0].mxu0
        %1281 = vmatprep.mubr.f32.mxu0 0.0
        %1282 = vmatmul.mubr.f32.gmra.mrb[0].mxu0 %v770
        %v1283 = vpop.f32.mrb[0].mxu0
        %v1284 = vadd.f32 0.0, %v1283
        %v1285 = vpop.f32.mrb[0].mxu0
        %1286 = vdwg.mxu0
        %v1287 = vld [vmem:[#allocation7] sm:$0xff]
        %v1288 = vld [vmem:[#allocation7 + $0x8] sm:$0xff]
        %v1289 = vld [vmem:[#allocation7 + $0x10] sm:$0xff]
        %v1290 = vld [vmem:[#allocation7 + $0x18] sm:$0xff]
        %v1291 = vld [vmem:[#allocation7 + $0x20] sm:$0xff]
        %v1292 = vld [vmem:[#allocation7 + $0x28] sm:$0x3f]
        %v1294 = vsel %vm501, %v1287, 0
        %v1297 = vsel %vm501, %v1288, 0
        %v1300 = vsel %vm501, %v1289, 0
        %v1303 = vsel %vm501, %v1290, 0
        %v1306 = vsel %vm501, %v1291, 0
        %v1309 = vsel %vm501, %v1292, 0
        %1311 = vmatprep.subr.mxu0 0.0
        %1312 = vmatpush1.msra.mxu0 %v839
        %1313 = vmatprep.subr.mxu0 0.0
        %1314 = vmatpush1.msra.mxu0 %v844
        %1315 = vmatprep.subr.mxu0 0.0
        %1316 = vmatpush1.msra.mxu0 %v849
        %1317 = vmatprep.subr.mxu0 0.0
        %1318 = vmatpush1.msra.mxu0 %v854
        %1319 = vmatprep.subr.mxu0 0.0
        %1320 = vmatpush1.msra.mxu0 %v859
        %1321 = vmatprep.subr.mxu0 0.0
        %1322 = vmatpush1.msra.mxu0 %v864
        %1323 = vmatprep.subr.mxu0 0.0
        %1324 = vmatpush1.msra.mxu0 0.0
        %1325 = vmatprep.subr.mxu0 0.0
        %1326 = vmatpush1.msra.mxu0 0.0
        %1327 = vmatprep.subr.mxu0 0.0
        %1328 = vmatpush1.msra.mxu0 0.0
        %1329 = vmatprep.subr.mxu0 0.0
        %1330 = vmatpush1.msra.mxu0 0.0
        %1331 = vmatprep.subr.mxu0 0.0
        %1332 = vmatpush1.msra.mxu0 0.0
        %1333 = vmatprep.subr.mxu0 0.0
        %1334 = vmatpush1.msra.mxu0 0.0
        %1335 = vmatprep.subr.mxu0 0.0
        %1336 = vmatpush1.msra.mxu0 0.0
        %1337 = vmatprep.subr.mxu0 0.0
        %1338 = vmatpush1.msra.mxu0 0.0
        %1339 = vmatprep.subr.mxu0 0.0
        %1340 = vmatpush1.msra.mxu0 0.0
        %1341 = vmatprep.subr.mxu0 0.0
        %1342 = vmatpush1.msra.mxu0 0.0
        %1343 = vmatprep.subr.mxu0 0.0
        %1344 = vmatpush1.msra.mxu0 0.0
        %1345 = vmatprep.subr.mxu0 0.0
        %1346 = vmatpush1.msra.mxu0 0.0
        %1347 = vmatprep.subr.mxu0 0.0
        %1348 = vmatpush1.msra.mxu0 0.0
        %1349 = vmatprep.subr.mxu0 0.0
        %1350 = vmatpush1.msra.mxu0 0.0
        %1351 = vmatprep.subr.mxu0 0.0
        %1352 = vmatpush1.msra.mxu0 0.0
        %1353 = vmatprep.subr.mxu0 0.0
        %1354 = vmatpush1.msra.mxu0 0.0
        %1355 = vmatprep.subr.mxu0 0.0
        %1356 = vmatpush1.msra.mxu0 0.0
        %1357 = vmatprep.subr.mxu0 0.0
        %1358 = vmatpush1.msra.mxu0 0.0
        %1359 = vmatprep.subr.mxu0 0.0
        %1360 = vmatpush1.msra.mxu0 0.0
        %1361 = vmatprep.subr.mxu0 0.0
        %1362 = vmatpush1.msra.mxu0 0.0
        %1363 = vmatprep.subr.mxu0 0.0
        %1364 = vmatpush1.msra.mxu0 0.0
        %1365 = vmatprep.subr.mxu0 0.0
        %1366 = vmatpush1.msra.mxu0 0.0
        %1367 = vmatprep.subr.mxu0 0.0
        %1368 = vmatpush1.msra.mxu0 0.0
        %1369 = vmatprep.subr.mxu0 0.0
        %1370 = vmatpush1.msra.mxu0 0.0
        %1371 = vmatprep.subr.mxu0 0.0
        %1372 = vmatpush1.msra.mxu0 0.0
        %1373 = vmatprep.subr.mxu0 0.0
        %1374 = vmatpush1.msra.mxu0 0.0
        %1375 = vmatprep.mubr.f32.mxu0 0.0
        %1376 = vmatmul.mubr.f32.gmra.mrb[0].mxu0 %v1294
        %v1377 = vpop.f32.mrb[0].mxu0
        %v1378 = vadd.f32 0.0, %v1377
        %v1379 = vpop.f32.mrb[0].mxu0
        %1380 = vmatprep.mubr.f32.mxu0 0.0
        %1381 = vmatmul.mubr.f32.gmra.mrb[0].mxu0 %v1297
        %v1382 = vpop.f32.mrb[0].mxu0
        %v1383 = vadd.f32 0.0, %v1382
        %v1384 = vpop.f32.mrb[0].mxu0
        %1385 = vmatprep.mubr.f32.mxu0 0.0
        %1386 = vmatmul.mubr.f32.gmra.mrb[0].mxu0 %v1300
        %v1387 = vpop.f32.mrb[0].mxu0
        %v1388 = vadd.f32 0.0, %v1387
        %v1389 = vpop.f32.mrb[0].mxu0
        %1390 = vmatprep.mubr.f32.mxu0 0.0
        %1391 = vmatmul.mubr.f32.gmra.mrb[0].mxu0 %v1303
        %v1392 = vpop.f32.mrb[0].mxu0
        %v1393 = vadd.f32 0.0, %v1392
        %v1394 = vpop.f32.mrb[0].mxu0
        %1395 = vmatprep.mubr.f32.mxu0 0.0
        %1396 = vmatmul.mubr.f32.gmra.mrb[0].mxu0 %v1306
        %v1397 = vpop.f32.mrb[0].mxu0
        %v1398 = vadd.f32 0.0, %v1397
        %v1399 = vpop.f32.mrb[0].mxu0
        %1400 = vmatprep.mubr.f32.mxu0 0.0
        %1401 = vmatmul.mubr.f32.gmra.mrb[0].mxu0 %v1309
        %v1402 = vpop.f32.mrb[0].mxu0
        %v1403 = vadd.f32 0.0, %v1402
        %v1404 = vpop.f32.mrb[0].mxu0
        %1405 = vdwg.mxu0
        %1406 = vmatprep.subr.mxu0 0.0
        %1407 = vmatpush1.msra.mxu0 %v929
        %1408 = vmatprep.subr.mxu0 0.0
        %1409 = vmatpush1.msra.mxu0 %v934
        %1410 = vmatprep.subr.mxu0 0.0
        %1411 = vmatpush1.msra.mxu0 %v939
        %1412 = vmatprep.subr.mxu0 0.0
        %1413 = vmatpush1.msra.mxu0 %v944
        %1414 = vmatprep.subr.mxu0 0.0
        %1415 = vmatpush1.msra.mxu0 %v949
        %1416 = vmatprep.subr.mxu0 0.0
        %1417 = vmatpush1.msra.mxu0 %v954
        %1418 = vmatprep.subr.mxu0 0.0
        %1419 = vmatpush1.msra.mxu0 0.0
        %1420 = vmatprep.subr.mxu0 0.0
        %1421 = vmatpush1.msra.mxu0 0.0
        %1422 = vmatprep.subr.mxu0 0.0
        %1423 = vmatpush1.msra.mxu0 0.0
        %1424 = vmatprep.subr.mxu0 0.0
        %1425 = vmatpush1.msra.mxu0 0.0
        %1426 = vmatprep.subr.mxu0 0.0
        %1427 = vmatpush1.msra.mxu0 0.0
        %1428 = vmatprep.subr.mxu0 0.0
        %1429 = vmatpush1.msra.mxu0 0.0
        %1430 = vmatprep.subr.mxu0 0.0
        %1431 = vmatpush1.msra.mxu0 0.0
        %1432 = vmatprep.subr.mxu0 0.0
        %1433 = vmatpush1.msra.mxu0 0.0
        %1434 = vmatprep.subr.mxu0 0.0
        %1435 = vmatpush1.msra.mxu0 0.0
        %1436 = vmatprep.subr.mxu0 0.0
        %1437 = vmatpush1.msra.mxu0 0.0
        %1438 = vmatprep.subr.mxu0 0.0
        %1439 = vmatpush1.msra.mxu0 0.0
        %1440 = vmatprep.subr.mxu0 0.0
        %1441 = vmatpush1.msra.mxu0 0.0
        %1442 = vmatprep.subr.mxu0 0.0
        %1443 = vmatpush1.msra.mxu0 0.0
        %1444 = vmatprep.subr.mxu0 0.0
        %1445 = vmatpush1.msra.mxu0 0.0
        %1446 = vmatprep.subr.mxu0 0.0
        %1447 = vmatpush1.msra.mxu0 0.0
        %1448 = vmatprep.subr.mxu0 0.0
        %1449 = vmatpush1.msra.mxu0 0.0
        %1450 = vmatprep.subr.mxu0 0.0
        %1451 = vmatpush1.msra.mxu0 0.0
        %1452 = vmatprep.subr.mxu0 0.0
        %1453 = vmatpush1.msra.mxu0 0.0
        %1454 = vmatprep.subr.mxu0 0.0
        %1455 = vmatpush1.msra.mxu0 0.0
        %1456 = vmatprep.subr.mxu0 0.0
        %1457 = vmatpush1.msra.mxu0 0.0
        %1458 = vmatprep.subr.mxu0 0.0
        %1459 = vmatpush1.msra.mxu0 0.0
        %1460 = vmatprep.subr.mxu0 0.0
        %1461 = vmatpush1.msra.mxu0 0.0
        %1462 = vmatprep.subr.mxu0 0.0
        %1463 = vmatpush1.msra.mxu0 0.0
        %1464 = vmatprep.subr.mxu0 0.0
        %1465 = vmatpush1.msra.mxu0 0.0
        %1466 = vmatprep.subr.mxu0 0.0
        %1467 = vmatpush1.msra.mxu0 0.0
        %1468 = vmatprep.subr.mxu0 0.0
        %1469 = vmatpush1.msra.mxu0 0.0
        %1470 = vmatprep.mubr.f32.mxu0 0.0
        %1471 = vmatmul.mubr.f32.gmra.mrb[0].mxu0 %v1294
        %v1472 = vpop.f32.mrb[0].mxu0
        %v1473 = vadd.f32 0.0, %v1472
        %v1474 = vpop.f32.mrb[0].mxu0
        %1475 = vmatprep.mubr.f32.mxu0 0.0
        %1476 = vmatmul.mubr.f32.gmra.mrb[0].mxu0 %v1297
        %v1477 = vpop.f32.mrb[0].mxu0
        %v1478 = vadd.f32 0.0, %v1477
        %v1479 = vpop.f32.mrb[0].mxu0
        %1480 = vmatprep.mubr.f32.mxu0 0.0
        %1481 = vmatmul.mubr.f32.gmra.mrb[0].mxu0 %v1300
        %v1482 = vpop.f32.mrb[0].mxu0
        %v1483 = vadd.f32 0.0, %v1482
        %v1484 = vpop.f32.mrb[0].mxu0
        %1485 = vmatprep.mubr.f32.mxu0 0.0
        %1486 = vmatmul.mubr.f32.gmra.mrb[0].mxu0 %v1303
        %v1487 = vpop.f32.mrb[0].mxu0
        %v1488 = vadd.f32 0.0, %v1487
        %v1489 = vpop.f32.mrb[0].mxu0
        %1490 = vmatprep.mubr.f32.mxu0 0.0
        %1491 = vmatmul.mubr.f32.gmra.mrb[0].mxu0 %v1306
        %v1492 = vpop.f32.mrb[0].mxu0
        %v1493 = vadd.f32 0.0, %v1492
        %v1494 = vpop.f32.mrb[0].mxu0
        %1495 = vmatprep.mubr.f32.mxu0 0.0
        %1496 = vmatmul.mubr.f32.gmra.mrb[0].mxu0 %v1309
        %v1497 = vpop.f32.mrb[0].mxu0
        %v1498 = vadd.f32 0.0, %v1497
        %v1499 = vpop.f32.mrb[0].mxu0
        %1500 = vdwg.mxu0
        %1501 = vmatprep.subr.mxu0 0.0
        %1502 = vmatpush1.msra.mxu0 %v1019
        %1503 = vmatprep.subr.mxu0 0.0
        %1504 = vmatpush1.msra.mxu0 %v1024
        %1505 = vmatprep.subr.mxu0 0.0
        %1506 = vmatpush1.msra.mxu0 %v1029
        %1507 = vmatprep.subr.mxu0 0.0
        %1508 = vmatpush1.msra.mxu0 %v1034
        %1509 = vmatprep.subr.mxu0 0.0
        %1510 = vmatpush1.msra.mxu0 %v1039
        %1511 = vmatprep.subr.mxu0 0.0
        %1512 = vmatpush1.msra.mxu0 %v1044
        %1513 = vmatprep.subr.mxu0 0.0
        %1514 = vmatpush1.msra.mxu0 0.0
        %1515 = vmatprep.subr.mxu0 0.0
        %1516 = vmatpush1.msra.mxu0 0.0
        %1517 = vmatprep.subr.mxu0 0.0
        %1518 = vmatpush1.msra.mxu0 0.0
        %1519 = vmatprep.subr.mxu0 0.0
        %1520 = vmatpush1.msra.mxu0 0.0
        %1521 = vmatprep.subr.mxu0 0.0
        %1522 = vmatpush1.msra.mxu0 0.0
        %1523 = vmatprep.subr.mxu0 0.0
        %1524 = vmatpush1.msra.mxu0 0.0
        %1525 = vmatprep.subr.mxu0 0.0
        %1526 = vmatpush1.msra.mxu0 0.0
        %1527 = vmatprep.subr.mxu0 0.0
        %1528 = vmatpush1.msra.mxu0 0.0
        %1529 = vmatprep.subr.mxu0 0.0
        %1530 = vmatpush1.msra.mxu0 0.0
        %1531 = vmatprep.subr.mxu0 0.0
        %1532 = vmatpush1.msra.mxu0 0.0
        %1533 = vmatprep.subr.mxu0 0.0
        %1534 = vmatpush1.msra.mxu0 0.0
        %1535 = vmatprep.subr.mxu0 0.0
        %1536 = vmatpush1.msra.mxu0 0.0
        %1537 = vmatprep.subr.mxu0 0.0
        %1538 = vmatpush1.msra.mxu0 0.0
        %1539 = vmatprep.subr.mxu0 0.0
        %1540 = vmatpush1.msra.mxu0 0.0
        %1541 = vmatprep.subr.mxu0 0.0
        %1542 = vmatpush1.msra.mxu0 0.0
        %1543 = vmatprep.subr.mxu0 0.0
        %1544 = vmatpush1.msra.mxu0 0.0
        %1545 = vmatprep.subr.mxu0 0.0
        %1546 = vmatpush1.msra.mxu0 0.0
        %1547 = vmatprep.subr.mxu0 0.0
        %1548 = vmatpush1.msra.mxu0 0.0
        %1549 = vmatprep.subr.mxu0 0.0
        %1550 = vmatpush1.msra.mxu0 0.0
        %1551 = vmatprep.subr.mxu0 0.0
        %1552 = vmatpush1.msra.mxu0 0.0
        %1553 = vmatprep.subr.mxu0 0.0
        %1554 = vmatpush1.msra.mxu0 0.0
        %1555 = vmatprep.subr.mxu0 0.0
        %1556 = vmatpush1.msra.mxu0 0.0
        %1557 = vmatprep.subr.mxu0 0.0
        %1558 = vmatpush1.msra.mxu0 0.0
        %1559 = vmatprep.subr.mxu0 0.0
        %1560 = vmatpush1.msra.mxu0 0.0
        %1561 = vmatprep.subr.mxu0 0.0
        %1562 = vmatpush1.msra.mxu0 0.0
        %1563 = vmatprep.subr.mxu0 0.0
        %1564 = vmatpush1.msra.mxu0 0.0
        %1565 = vmatprep.mubr.f32.mxu0 0.0
        %1566 = vmatmul.mubr.f32.gmra.mrb[0].mxu0 %v1294
        %v1567 = vpop.f32.mrb[0].mxu0
        %v1568 = vadd.f32 0.0, %v1567
        %v1569 = vpop.f32.mrb[0].mxu0
        %1570 = vmatprep.mubr.f32.mxu0 0.0
        %1571 = vmatmul.mubr.f32.gmra.mrb[0].mxu0 %v1297
        %v1572 = vpop.f32.mrb[0].mxu0
        %v1573 = vadd.f32 0.0, %v1572
        %v1574 = vpop.f32.mrb[0].mxu0
        %1575 = vmatprep.mubr.f32.mxu0 0.0
        %1576 = vmatmul.mubr.f32.gmra.mrb[0].mxu0 %v1300
        %v1577 = vpop.f32.mrb[0].mxu0
        %v1578 = vadd.f32 0.0, %v1577
        %v1579 = vpop.f32.mrb[0].mxu0
        %1580 = vmatprep.mubr.f32.mxu0 0.0
        %1581 = vmatmul.mubr.f32.gmra.mrb[0].mxu0 %v1303
        %v1582 = vpop.f32.mrb[0].mxu0
        %v1583 = vadd.f32 0.0, %v1582
        %v1584 = vpop.f32.mrb[0].mxu0
        %1585 = vmatprep.mubr.f32.mxu0 0.0
        %1586 = vmatmul.mubr.f32.gmra.mrb[0].mxu0 %v1306
        %v1587 = vpop.f32.mrb[0].mxu0
        %v1588 = vadd.f32 0.0, %v1587
        %v1589 = vpop.f32.mrb[0].mxu0
        %1590 = vmatprep.mubr.f32.mxu0 0.0
        %1591 = vmatmul.mubr.f32.gmra.mrb[0].mxu0 %v1309
        %v1592 = vpop.f32.mrb[0].mxu0
        %v1593 = vadd.f32 0.0, %v1592
        %v1594 = vpop.f32.mrb[0].mxu0
        %1595 = vdwg.mxu0
        %1596 = vmatprep.subr.mxu0 0.0
        %1597 = vmatpush1.msra.mxu0 %v1109
        %1598 = vmatprep.subr.mxu0 0.0
        %1599 = vmatpush1.msra.mxu0 %v1114
        %1600 = vmatprep.subr.mxu0 0.0
        %1601 = vmatpush1.msra.mxu0 %v1119
        %1602 = vmatprep.subr.mxu0 0.0
        %1603 = vmatpush1.msra.mxu0 %v1124
        %1604 = vmatprep.subr.mxu0 0.0
        %1605 = vmatpush1.msra.mxu0 %v1129
        %1606 = vmatprep.subr.mxu0 0.0
        %1607 = vmatpush1.msra.mxu0 %v1134
        %1608 = vmatprep.subr.mxu0 0.0
        %1609 = vmatpush1.msra.mxu0 0.0
        %1610 = vmatprep.subr.mxu0 0.0
        %1611 = vmatpush1.msra.mxu0 0.0
        %1612 = vmatprep.subr.mxu0 0.0
        %1613 = vmatpush1.msra.mxu0 0.0
        %1614 = vmatprep.subr.mxu0 0.0
        %1615 = vmatpush1.msra.mxu0 0.0
        %1616 = vmatprep.subr.mxu0 0.0
        %1617 = vmatpush1.msra.mxu0 0.0
        %1618 = vmatprep.subr.mxu0 0.0
        %1619 = vmatpush1.msra.mxu0 0.0
        %1620 = vmatprep.subr.mxu0 0.0
        %1621 = vmatpush1.msra.mxu0 0.0
        %1622 = vmatprep.subr.mxu0 0.0
        %1623 = vmatpush1.msra.mxu0 0.0
        %1624 = vmatprep.subr.mxu0 0.0
        %1625 = vmatpush1.msra.mxu0 0.0
        %1626 = vmatprep.subr.mxu0 0.0
        %1627 = vmatpush1.msra.mxu0 0.0
        %1628 = vmatprep.subr.mxu0 0.0
        %1629 = vmatpush1.msra.mxu0 0.0
        %1630 = vmatprep.subr.mxu0 0.0
        %1631 = vmatpush1.msra.mxu0 0.0
        %1632 = vmatprep.subr.mxu0 0.0
        %1633 = vmatpush1.msra.mxu0 0.0
        %1634 = vmatprep.subr.mxu0 0.0
        %1635 = vmatpush1.msra.mxu0 0.0
        %1636 = vmatprep.subr.mxu0 0.0
        %1637 = vmatpush1.msra.mxu0 0.0
        %1638 = vmatprep.subr.mxu0 0.0
        %1639 = vmatpush1.msra.mxu0 0.0
        %1640 = vmatprep.subr.mxu0 0.0
        %1641 = vmatpush1.msra.mxu0 0.0
        %1642 = vmatprep.subr.mxu0 0.0
        %1643 = vmatpush1.msra.mxu0 0.0
        %1644 = vmatprep.subr.mxu0 0.0
        %1645 = vmatpush1.msra.mxu0 0.0
        %1646 = vmatprep.subr.mxu0 0.0
        %1647 = vmatpush1.msra.mxu0 0.0
        %1648 = vmatprep.subr.mxu0 0.0
        %1649 = vmatpush1.msra.mxu0 0.0
        %1650 = vmatprep.subr.mxu0 0.0
        %1651 = vmatpush1.msra.mxu0 0.0
        %1652 = vmatprep.subr.mxu0 0.0
        %1653 = vmatpush1.msra.mxu0 0.0
        %1654 = vmatprep.subr.mxu0 0.0
        %1655 = vmatpush1.msra.mxu0 0.0
        %1656 = vmatprep.subr.mxu0 0.0
        %1657 = vmatpush1.msra.mxu0 0.0
        %1658 = vmatprep.subr.mxu0 0.0
        %1659 = vmatpush1.msra.mxu0 0.0
        %1660 = vmatprep.mubr.f32.mxu0 0.0
        %1661 = vmatmul.mubr.f32.gmra.mrb[0].mxu0 %v1294
        %v1662 = vpop.f32.mrb[0].mxu0
        %v1663 = vadd.f32 0.0, %v1662
        %v1664 = vpop.f32.mrb[0].mxu0
        %1665 = vmatprep.mubr.f32.mxu0 0.0
        %1666 = vmatmul.mubr.f32.gmra.mrb[0].mxu0 %v1297
        %v1667 = vpop.f32.mrb[0].mxu0
        %v1668 = vadd.f32 0.0, %v1667
        %v1669 = vpop.f32.mrb[0].mxu0
        %1670 = vmatprep.mubr.f32.mxu0 0.0
        %1671 = vmatmul.mubr.f32.gmra.mrb[0].mxu0 %v1300
        %v1672 = vpop.f32.mrb[0].mxu0
        %v1673 = vadd.f32 0.0, %v1672
        %v1674 = vpop.f32.mrb[0].mxu0
        %1675 = vmatprep.mubr.f32.mxu0 0.0
        %1676 = vmatmul.mubr.f32.gmra.mrb[0].mxu0 %v1303
        %v1677 = vpop.f32.mrb[0].mxu0
        %v1678 = vadd.f32 0.0, %v1677
        %v1679 = vpop.f32.mrb[0].mxu0
        %1680 = vmatprep.mubr.f32.mxu0 0.0
        %1681 = vmatmul.mubr.f32.gmra.mrb[0].mxu0 %v1306
        %v1682 = vpop.f32.mrb[0].mxu0
        %v1683 = vadd.f32 0.0, %v1682
        %v1684 = vpop.f32.mrb[0].mxu0
        %1685 = vmatprep.mubr.f32.mxu0 0.0
        %1686 = vmatmul.mubr.f32.gmra.mrb[0].mxu0 %v1309
        %v1687 = vpop.f32.mrb[0].mxu0
        %v1688 = vadd.f32 0.0, %v1687
        %v1689 = vpop.f32.mrb[0].mxu0
        %1690 = vdwg.mxu0
        %1691 = vmatprep.subr.mxu0 0.0
        %1692 = vmatpush1.msra.mxu0 %v1199
        %1693 = vmatprep.subr.mxu0 0.0
        %1694 = vmatpush1.msra.mxu0 %v1204
        %1695 = vmatprep.subr.mxu0 0.0
        %1696 = vmatpush1.msra.mxu0 %v1209
        %1697 = vmatprep.subr.mxu0 0.0
        %1698 = vmatpush1.msra.mxu0 %v1214
        %1699 = vmatprep.subr.mxu0 0.0
        %1700 = vmatpush1.msra.mxu0 %v1219
        %1701 = vmatprep.subr.mxu0 0.0
        %1702 = vmatpush1.msra.mxu0 %v1224
        %1703 = vmatprep.subr.mxu0 0.0
        %1704 = vmatpush1.msra.mxu0 0.0
        %1705 = vmatprep.subr.mxu0 0.0
        %1706 = vmatpush1.msra.mxu0 0.0
        %1707 = vmatprep.subr.mxu0 0.0
        %1708 = vmatpush1.msra.mxu0 0.0
        %1709 = vmatprep.subr.mxu0 0.0
        %1710 = vmatpush1.msra.mxu0 0.0
        %1711 = vmatprep.subr.mxu0 0.0
        %1712 = vmatpush1.msra.mxu0 0.0
        %1713 = vmatprep.subr.mxu0 0.0
        %1714 = vmatpush1.msra.mxu0 0.0
        %1715 = vmatprep.subr.mxu0 0.0
        %1716 = vmatpush1.msra.mxu0 0.0
        %1717 = vmatprep.subr.mxu0 0.0
        %1718 = vmatpush1.msra.mxu0 0.0
        %1719 = vmatprep.subr.mxu0 0.0
        %1720 = vmatpush1.msra.mxu0 0.0
        %1721 = vmatprep.subr.mxu0 0.0
        %1722 = vmatpush1.msra.mxu0 0.0
        %1723 = vmatprep.subr.mxu0 0.0
        %1724 = vmatpush1.msra.mxu0 0.0
        %1725 = vmatprep.subr.mxu0 0.0
        %1726 = vmatpush1.msra.mxu0 0.0
        %1727 = vmatprep.subr.mxu0 0.0
        %1728 = vmatpush1.msra.mxu0 0.0
        %1729 = vmatprep.subr.mxu0 0.0
        %1730 = vmatpush1.msra.mxu0 0.0
        %1731 = vmatprep.subr.mxu0 0.0
        %1732 = vmatpush1.msra.mxu0 0.0
        %1733 = vmatprep.subr.mxu0 0.0
        %1734 = vmatpush1.msra.mxu0 0.0
        %1735 = vmatprep.subr.mxu0 0.0
        %1736 = vmatpush1.msra.mxu0 0.0
        %1737 = vmatprep.subr.mxu0 0.0
        %1738 = vmatpush1.msra.mxu0 0.0
        %1739 = vmatprep.subr.mxu0 0.0
        %1740 = vmatpush1.msra.mxu0 0.0
        %1741 = vmatprep.subr.mxu0 0.0
        %1742 = vmatpush1.msra.mxu0 0.0
        %1743 = vmatprep.subr.mxu0 0.0
        %1744 = vmatpush1.msra.mxu0 0.0
        %1745 = vmatprep.subr.mxu0 0.0
        %1746 = vmatpush1.msra.mxu0 0.0
        %1747 = vmatprep.subr.mxu0 0.0
        %1748 = vmatpush1.msra.mxu0 0.0
        %1749 = vmatprep.subr.mxu0 0.0
        %1750 = vmatpush1.msra.mxu0 0.0
        %1751 = vmatprep.subr.mxu0 0.0
        %1752 = vmatpush1.msra.mxu0 0.0
        %1753 = vmatprep.subr.mxu0 0.0
        %1754 = vmatpush1.msra.mxu0 0.0
        %1755 = vmatprep.mubr.f32.mxu0 0.0
        %1756 = vmatmul.mubr.f32.gmra.mrb[0].mxu0 %v1294
        %v1757 = vpop.f32.mrb[0].mxu0
        %v1758 = vadd.f32 0.0, %v1757
        %v1759 = vpop.f32.mrb[0].mxu0
        %1760 = vmatprep.mubr.f32.mxu0 0.0
        %1761 = vmatmul.mubr.f32.gmra.mrb[0].mxu0 %v1297
        %v1762 = vpop.f32.mrb[0].mxu0
        %v1763 = vadd.f32 0.0, %v1762
        %v1764 = vpop.f32.mrb[0].mxu0
        %1765 = vmatprep.mubr.f32.mxu0 0.0
        %1766 = vmatmul.mubr.f32.gmra.mrb[0].mxu0 %v1300
        %v1767 = vpop.f32.mrb[0].mxu0
        %v1768 = vadd.f32 0.0, %v1767
        %v1769 = vpop.f32.mrb[0].mxu0
        %1770 = vmatprep.mubr.f32.mxu0 0.0
        %1771 = vmatmul.mubr.f32.gmra.mrb[0].mxu0 %v1303
        %v1772 = vpop.f32.mrb[0].mxu0
        %v1773 = vadd.f32 0.0, %v1772
        %v1774 = vpop.f32.mrb[0].mxu0
        %1775 = vmatprep.mubr.f32.mxu0 0.0
        %1776 = vmatmul.mubr.f32.gmra.mrb[0].mxu0 %v1306
        %v1777 = vpop.f32.mrb[0].mxu0
        %v1778 = vadd.f32 0.0, %v1777
        %v1779 = vpop.f32.mrb[0].mxu0
        %1780 = vmatprep.mubr.f32.mxu0 0.0
        %1781 = vmatmul.mubr.f32.gmra.mrb[0].mxu0 %v1309
        %v1782 = vpop.f32.mrb[0].mxu0
        %v1783 = vadd.f32 0.0, %v1782
        %v1784 = vpop.f32.mrb[0].mxu0
        %1785 = vdwg.mxu0
        %v1786 = vmul.f32 %v1378, %v1378
        %v1787 = vmul.f32 %v1383, %v1383
        %v1788 = vmul.f32 %v1388, %v1388
        %v1789 = vmul.f32 %v1393, %v1393
        %v1790 = vmul.f32 %v1398, %v1398
        %v1791 = vmul.f32 %v1403, %v1403
        %v1792 = vmul.f32 %v1473, %v1473
        %v1793 = vmul.f32 %v1478, %v1478
        %v1794 = vmul.f32 %v1483, %v1483
        %v1795 = vmul.f32 %v1488, %v1488
        %v1796 = vmul.f32 %v1493, %v1493
        %v1797 = vmul.f32 %v1498, %v1498
        %v1798 = vmul.f32 %v1378, %v1473
        %v1799 = vmul.f32 %v1383, %v1478
        %v1800 = vmul.f32 %v1388, %v1483
        %v1801 = vmul.f32 %v1393, %v1488
        %v1802 = vmul.f32 %v1398, %v1493
        %v1803 = vmul.f32 %v1403, %v1498
        %v1804 = vsub.f32 %v1568, %v1786
        %v1805 = vsub.f32 %v1573, %v1787
        %v1806 = vsub.f32 %v1578, %v1788
        %v1807 = vsub.f32 %v1583, %v1789
        %v1808 = vsub.f32 %v1588, %v1790
        %v1809 = vsub.f32 %v1593, %v1791
        %v1810 = vsub.f32 %v1663, %v1792
        %v1811 = vsub.f32 %v1668, %v1793
        %v1812 = vsub.f32 %v1673, %v1794
        %v1813 = vsub.f32 %v1678, %v1795
        %v1814 = vsub.f32 %v1683, %v1796
        %v1815 = vsub.f32 %v1688, %v1797
        %v1816 = vsub.f32 %v1758, %v1798
        %v1817 = vsub.f32 %v1763, %v1799
        %v1818 = vsub.f32 %v1768, %v1800
        %v1819 = vsub.f32 %v1773, %v1801
        %v1820 = vsub.f32 %v1778, %v1802
        %v1821 = vsub.f32 %v1783, %v1803
        %v1822 = vmul.f32 %v1816, 2.0
        %v1823 = vmul.f32 %v1817, 2.0
        %v1824 = vmul.f32 %v1818, 2.0
        %v1825 = vmul.f32 %v1819, 2.0
        %v1826 = vmul.f32 %v1820, 2.0
        %v1827 = vmul.f32 %v1821, 2.0
        %v1828 = vadd.f32 %v1822, 0.0009
        %v1829 = vadd.f32 %v1823, 0.0009
        %v1830 = vadd.f32 %v1824, 0.0009
        %v1831 = vadd.f32 %v1825, 0.0009
        %v1832 = vadd.f32 %v1826, 0.0009
        %v1833 = vadd.f32 %v1827, 0.0009
        %v1834 = vadd.f32 %v1804, %v1810
        %v1835 = vadd.f32 %v1805, %v1811
        %v1836 = vadd.f32 %v1806, %v1812
        %v1837 = vadd.f32 %v1807, %v1813
        %v1838 = vadd.f32 %v1808, %v1814
        %v1839 = vadd.f32 %v1809, %v1815
        %v1840 = vadd.f32 %v1834, 0.0009
        %v1841 = vadd.f32 %v1835, 0.0009
        %v1842 = vadd.f32 %v1836, 0.0009
        %v1843 = vadd.f32 %v1837, 0.0009
        %v1844 = vadd.f32 %v1838, 0.0009
        %v1845 = vadd.f32 %v1839, 0.0009
        %v1846 = vrcp.pop %v1840
        %v1847 = vrcp.pop %v1841
        %v1848 = vrcp.pop %v1842
        %v1849 = vrcp.pop %v1843
        %v1850 = vrcp.pop %v1844
        %v1851 = vrcp.pop %v1845
        %v1852 = vmul.f32 %v1828, %v1846
        %v1853 = vmul.f32 %v1829, %v1847
        %v1854 = vmul.f32 %v1830, %v1848
        %v1855 = vmul.f32 %v1831, %v1849
        %v1856 = vmul.f32 %v1832, %v1850
        %v1857 = vmul.f32 %v1833, %v1851
        %v1858 = vmul.f32 %v1798, 2.0
        %v1859 = vmul.f32 %v1799, 2.0
        %v1860 = vmul.f32 %v1800, 2.0
        %v1861 = vmul.f32 %v1801, 2.0
        %v1862 = vmul.f32 %v1802, 2.0
        %v1863 = vmul.f32 %v1803, 2.0
        %v1864 = vadd.f32 %v1858, 0.0001
        %v1865 = vadd.f32 %v1859, 0.0001
        %v1866 = vadd.f32 %v1860, 0.0001
        %v1867 = vadd.f32 %v1861, 0.0001
        %v1868 = vadd.f32 %v1862, 0.0001
        %v1869 = vadd.f32 %v1863, 0.0001
        %v1870 = vadd.f32 %v1786, %v1792
        %v1871 = vadd.f32 %v1787, %v1793
        %v1872 = vadd.f32 %v1788, %v1794
        %v1873 = vadd.f32 %v1789, %v1795
        %v1874 = vadd.f32 %v1790, %v1796
        %v1875 = vadd.f32 %v1791, %v1797
        %v1876 = vadd.f32 %v1870, 0.0001
        %v1877 = vadd.f32 %v1871, 0.0001
        %v1878 = vadd.f32 %v1872, 0.0001
        %v1879 = vadd.f32 %v1873, 0.0001
        %v1880 = vadd.f32 %v1874, 0.0001
        %v1881 = vadd.f32 %v1875, 0.0001
        %v1882 = vrcp.pop %v1876
        %v1883 = vrcp.pop %v1877
        %v1884 = vrcp.pop %v1878
        %v1885 = vrcp.pop %v1879
        %v1886 = vrcp.pop %v1880
        %v1887 = vrcp.pop %v1881
        %v1888 = vmul.f32 %v1864, %v1882
        %v1889 = vmul.f32 %v1865, %v1883
        %v1890 = vmul.f32 %v1866, %v1884
        %v1891 = vmul.f32 %v1867, %v1885
        %v1892 = vmul.f32 %v1868, %v1886
        %v1893 = vmul.f32 %v1869, %v1887
        %v1894 = vmul.f32 %v1888, %v1852
        %v1895 = vmul.f32 %v1889, %v1853
        %v1896 = vmul.f32 %v1890, %v1854
        %v1897 = vmul.f32 %v1891, %v1855
        %v1898 = vmul.f32 %v1892, %v1856
        %v1899 = vmul.f32 %v1893, %v1857
        %vm1900 = vcmask 375808
        %v1901 = vsel %vm1900, %v1894, 0.0
        %1902 = vadd.xlane.f32.xlu0 %v1901
        %v1903 = vpop.xlane.xlu0 %1902
        %v1904 = vsel %vm1900, %v1895, 0.0
        %1905 = vadd.xlane.f32.xlu0 %v1904
        %v1906 = vpop.xlane.xlu0 %1905
        %v1907 = vsel %vm1900, %v1896, 0.0
        %1908 = vadd.xlane.f32.xlu0 %v1907
        %v1909 = vpop.xlane.xlu0 %1908
        %v1910 = vsel %vm1900, %v1897, 0.0
        %1911 = vadd.xlane.f32.xlu0 %v1910
        %v1912 = vpop.xlane.xlu0 %1911
        %v1913 = vsel %vm1900, %v1898, 0.0
        %1914 = vadd.xlane.f32.xlu0 %v1913
        %v1915 = vpop.xlane.xlu0 %1914
        %vm1916 = vcmask 373760
        %v1917 = vsel %vm1916, %v1899, 0.0
        %1918 = vadd.xlane.f32.xlu0 %v1917
        %v1919 = vpop.xlane.xlu0 %1918
        %v1920 = vadd.f32 %v1903, %v1906
        %v1921 = vadd.f32 %v1920, %v1909
        %v1922 = vadd.f32 %v1921, %v1912
        %v1923 = vadd.f32 %v1922, %v1915
        %vm1924 = vcmask 1045504
        %v1925 = vsel %vm1924, %v1919, 0.0
        %v1926 = vadd.f32 %v1923, %v1925
        %v1927 = vrot.slane %v1926, 4
        %v1928 = vadd.f32 %v1926, %v1927
        %v1929 = vrot.slane %v1928, 2
        %v1930 = vadd.f32 %v1928, %v1929
        %v1931 = vrot.slane %v1930, 1
        %v1932 = vadd.f32 %v1930, %v1931
        %v1933 = vsel %vm1900, %v1852, 0.0
        %1934 = vadd.xlane.f32.xlu0 %v1933
        %v1935 = vpop.xlane.xlu0 %1934
        %v1936 = vsel %vm1900, %v1853, 0.0
        %1937 = vadd.xlane.f32.xlu0 %v1936
        %v1938 = vpop.xlane.xlu0 %1937
        %v1939 = vsel %vm1900, %v1854, 0.0
        %1940 = vadd.xlane.f32.xlu0 %v1939
        %v1941 = vpop.xlane.xlu0 %1940
        %v1942 = vsel %vm1900, %v1855, 0.0
        %1943 = vadd.xlane.f32.xlu0 %v1942
        %v1944 = vpop.xlane.xlu0 %1943
        %v1945 = vsel %vm1900, %v1856, 0.0
        %1946 = vadd.xlane.f32.xlu0 %v1945
        %v1947 = vpop.xlane.xlu0 %1946
        %v1948 = vsel %vm1916, %v1857, 0.0
        %1949 = vadd.xlane.f32.xlu0 %v1948
        %v1950 = vpop.xlane.xlu0 %1949
        %v1951 = vadd.f32 %v1935, %v1938
        %v1952 = vadd.f32 %v1951, %v1941
        %v1953 = vadd.f32 %v1952, %v1944
        %v1954 = vadd.f32 %v1953, %v1947
        %v1955 = vsel %vm1924, %v1950, 0.0
        %v1956 = vadd.f32 %v1954, %v1955
        %v1957 = vrot.slane %v1956, 4
        %v1958 = vadd.f32 %v1956, %v1957
        %v1959 = vrot.slane %v1958, 2
        %v1960 = vadd.f32 %v1958, %v1959
        %v1961 = vrot.slane %v1960, 1
        %v1962 = vadd.f32 %v1960, %v1961
        %vm1963 = vcmask 7168
        %v1964 = vsel %vm1963, %v1932, %v1962
        %v1965 = vmul.f32 %v1964, 0.0004725898
        %1966 = vmatprep.subr.mxu0 0.0
        %1967 = vmatpush1.msra.mxu0 %v869
        %1968 = vmatprep.subr.mxu0 0.0
        %1969 = vmatpush1.msra.mxu0 %v874
        %1970 = vmatprep.subr.mxu0 0.0
        %1971 = vmatpush1.msra.mxu0 %v879
        %1972 = vmatprep.subr.mxu0 0.0
        %1973 = vmatpush1.msra.mxu0 %v884
        %1974 = vmatprep.subr.mxu0 0.0
        %1975 = vmatpush1.msra.mxu0 %v889
        %1976 = vmatprep.subr.mxu0 0.0
        %1977 = vmatpush1.msra.mxu0 %v894
        %1978 = vmatprep.subr.mxu0 0.0
        %1979 = vmatpush1.msra.mxu0 0.0
        %1980 = vmatprep.subr.mxu0 0.0
        %1981 = vmatpush1.msra.mxu0 0.0
        %1982 = vmatprep.subr.mxu0 0.0
        %1983 = vmatpush1.msra.mxu0 0.0
        %1984 = vmatprep.subr.mxu0 0.0
        %1985 = vmatpush1.msra.mxu0 0.0
        %1986 = vmatprep.subr.mxu0 0.0
        %1987 = vmatpush1.msra.mxu0 0.0
        %1988 = vmatprep.subr.mxu0 0.0
        %1989 = vmatpush1.msra.mxu0 0.0
        %1990 = vmatprep.subr.mxu0 0.0
        %1991 = vmatpush1.msra.mxu0 0.0
        %1992 = vmatprep.subr.mxu0 0.0
        %1993 = vmatpush1.msra.mxu0 0.0
        %1994 = vmatprep.subr.mxu0 0.0
        %1995 = vmatpush1.msra.mxu0 0.0
        %1996 = vmatprep.subr.mxu0 0.0
        %1997 = vmatpush1.msra.mxu0 0.0
        %1998 = vmatprep.subr.mxu0 0.0
        %1999 = vmatpush1.msra.mxu0 0.0
        %2000 = vmatprep.subr.mxu0 0.0
        %2001 = vmatpush1.msra.mxu0 0.0
        %2002 = vmatprep.subr.mxu0 0.0
        %2003 = vmatpush1.msra.mxu0 0.0
        %2004 = vmatprep.subr.mxu0 0.0
        %2005 = vmatpush1.msra.mxu0 0.0
        %2006 = vmatprep.subr.mxu0 0.0
        %2007 = vmatpush1.msra.mxu0 0.0
        %2008 = vmatprep.subr.mxu0 0.0
        %2009 = vmatpush1.msra.mxu0 0.0
        %2010 = vmatprep.subr.mxu0 0.0
        %2011 = vmatpush1.msra.mxu0 0.0
        %2012 = vmatprep.subr.mxu0 0.0
        %2013 = vmatpush1.msra.mxu0 0.0
        %2014 = vmatprep.subr.mxu0 0.0
        %2015 = vmatpush1.msra.mxu0 0.0
        %2016 = vmatprep.subr.mxu0 0.0
        %2017 = vmatpush1.msra.mxu0 0.0
        %2018 = vmatprep.subr.mxu0 0.0
        %2019 = vmatpush1.msra.mxu0 0.0
        %2020 = vmatprep.subr.mxu0 0.0
        %2021 = vmatpush1.msra.mxu0 0.0
        %2022 = vmatprep.subr.mxu0 0.0
        %2023 = vmatpush1.msra.mxu0 0.0
        %2024 = vmatprep.subr.mxu0 0.0
        %2025 = vmatpush1.msra.mxu0 0.0
        %2026 = vmatprep.subr.mxu0 0.0
        %2027 = vmatpush1.msra.mxu0 0.0
        %2028 = vmatprep.subr.mxu0 0.0
        %2029 = vmatpush1.msra.mxu0 0.0
        %2030 = vmatprep.mubr.f32.mxu0 0.0
        %2031 = vmatmul.mubr.f32.gmra.mrb[0].mxu0 %v1294
        %v2032 = vpop.f32.mrb[0].mxu0
        %v2033 = vadd.f32 0.0, %v2032
        %v2034 = vpop.f32.mrb[0].mxu0
        %2035 = vmatprep.mubr.f32.mxu0 0.0
        %2036 = vmatmul.mubr.f32.gmra.mrb[0].mxu0 %v1297
        %v2037 = vpop.f32.mrb[0].mxu0
        %v2038 = vadd.f32 0.0, %v2037
        %v2039 = vpop.f32.mrb[0].mxu0
        %2040 = vmatprep.mubr.f32.mxu0 0.0
        %2041 = vmatmul.mubr.f32.gmra.mrb[0].mxu0 %v1300
        %v2042 = vpop.f32.mrb[0].mxu0
        %v2043 = vadd.f32 0.0, %v2042
        %v2044 = vpop.f32.mrb[0].mxu0
        %2045 = vmatprep.mubr.f32.mxu0 0.0
        %2046 = vmatmul.mubr.f32.gmra.mrb[0].mxu0 %v1303
        %v2047 = vpop.f32.mrb[0].mxu0
        %v2048 = vadd.f32 0.0, %v2047
        %v2049 = vpop.f32.mrb[0].mxu0
        %2050 = vmatprep.mubr.f32.mxu0 0.0
        %2051 = vmatmul.mubr.f32.gmra.mrb[0].mxu0 %v1306
        %v2052 = vpop.f32.mrb[0].mxu0
        %v2053 = vadd.f32 0.0, %v2052
        %v2054 = vpop.f32.mrb[0].mxu0
        %2055 = vmatprep.mubr.f32.mxu0 0.0
        %2056 = vmatmul.mubr.f32.gmra.mrb[0].mxu0 %v1309
        %v2057 = vpop.f32.mrb[0].mxu0
        %v2058 = vadd.f32 0.0, %v2057
        %v2059 = vpop.f32.mrb[0].mxu0
        %2060 = vdwg.mxu0
        %2061 = vmatprep.subr.mxu0 0.0
        %2062 = vmatpush1.msra.mxu0 %v959
        %2063 = vmatprep.subr.mxu0 0.0
        %2064 = vmatpush1.msra.mxu0 %v964
        %2065 = vmatprep.subr.mxu0 0.0
        %2066 = vmatpush1.msra.mxu0 %v969
        %2067 = vmatprep.subr.mxu0 0.0
        %2068 = vmatpush1.msra.mxu0 %v974
        %2069 = vmatprep.subr.mxu0 0.0
        %2070 = vmatpush1.msra.mxu0 %v979
        %2071 = vmatprep.subr.mxu0 0.0
        %2072 = vmatpush1.msra.mxu0 %v984
        %2073 = vmatprep.subr.mxu0 0.0
        %2074 = vmatpush1.msra.mxu0 0.0
        %2075 = vmatprep.subr.mxu0 0.0
        %2076 = vmatpush1.msra.mxu0 0.0
        %2077 = vmatprep.subr.mxu0 0.0
        %2078 = vmatpush1.msra.mxu0 0.0
        %2079 = vmatprep.subr.mxu0 0.0
        %2080 = vmatpush1.msra.mxu0 0.0
        %2081 = vmatprep.subr.mxu0 0.0
        %2082 = vmatpush1.msra.mxu0 0.0
        %2083 = vmatprep.subr.mxu0 0.0
        %2084 = vmatpush1.msra.mxu0 0.0
        %2085 = vmatprep.subr.mxu0 0.0
        %2086 = vmatpush1.msra.mxu0 0.0
        %2087 = vmatprep.subr.mxu0 0.0
        %2088 = vmatpush1.msra.mxu0 0.0
        %2089 = vmatprep.subr.mxu0 0.0
        %2090 = vmatpush1.msra.mxu0 0.0
        %2091 = vmatprep.subr.mxu0 0.0
        %2092 = vmatpush1.msra.mxu0 0.0
        %2093 = vmatprep.subr.mxu0 0.0
        %2094 = vmatpush1.msra.mxu0 0.0
        %2095 = vmatprep.subr.mxu0 0.0
        %2096 = vmatpush1.msra.mxu0 0.0
        %2097 = vmatprep.subr.mxu0 0.0
        %2098 = vmatpush1.msra.mxu0 0.0
        %2099 = vmatprep.subr.mxu0 0.0
        %2100 = vmatpush1.msra.mxu0 0.0
        %2101 = vmatprep.subr.mxu0 0.0
        %2102 = vmatpush1.msra.mxu0 0.0
        %2103 = vmatprep.subr.mxu0 0.0
        %2104 = vmatpush1.msra.mxu0 0.0
        %2105 = vmatprep.subr.mxu0 0.0
        %2106 = vmatpush1.msra.mxu0 0.0
        %2107 = vmatprep.subr.mxu0 0.0
        %2108 = vmatpush1.msra.mxu0 0.0
        %2109 = vmatprep.subr.mxu0 0.0
        %2110 = vmatpush1.msra.mxu0 0.0
        %2111 = vmatprep.subr.mxu0 0.0
        %2112 = vmatpush1.msra.mxu0 0.0
        %2113 = vmatprep.subr.mxu0 0.0
        %2114 = vmatpush1.msra.mxu0 0.0
        %2115 = vmatprep.subr.mxu0 0.0
        %2116 = vmatpush1.msra.mxu0 0.0
        %2117 = vmatprep.subr.mxu0 0.0
        %2118 = vmatpush1.msra.mxu0 0.0
        %2119 = vmatprep.subr.mxu0 0.0
        %2120 = vmatpush1.msra.mxu0 0.0
        %2121 = vmatprep.subr.mxu0 0.0
        %2122 = vmatpush1.msra.mxu0 0.0
        %2123 = vmatprep.subr.mxu0 0.0
        %2124 = vmatpush1.msra.mxu0 0.0
        %2125 = vmatprep.mubr.f32.mxu0 0.0
        %2126 = vmatmul.mubr.f32.gmra.mrb[0].mxu0 %v1294
        %v2127 = vpop.f32.mrb[0].mxu0
        %v2128 = vadd.f32 0.0, %v2127
        %v2129 = vpop.f32.mrb[0].mxu0
        %2130 = vmatprep.mubr.f32.mxu0 0.0
        %2131 = vmatmul.mubr.f32.gmra.mrb[0].mxu0 %v1297
        %v2132 = vpop.f32.mrb[0].mxu0
        %v2133 = vadd.f32 0.0, %v2132
        %v2134 = vpop.f32.mrb[0].mxu0
        %2135 = vmatprep.mubr.f32.mxu0 0.0
        %2136 = vmatmul.mubr.f32.gmra.mrb[0].mxu0 %v1300
        %v2137 = vpop.f32.mrb[0].mxu0
        %v2138 = vadd.f32 0.0, %v2137
        %v2139 = vpop.f32.mrb[0].mxu0
        %2140 = vmatprep.mubr.f32.mxu0 0.0
        %2141 = vmatmul.mubr.f32.gmra.mrb[0].mxu0 %v1303
        %v2142 = vpop.f32.mrb[0].mxu0
        %v2143 = vadd.f32 0.0, %v2142
        %v2144 = vpop.f32.mrb[0].mxu0
        %2145 = vmatprep.mubr.f32.mxu0 0.0
        %2146 = vmatmul.mubr.f32.gmra.mrb[0].mxu0 %v1306
        %v2147 = vpop.f32.mrb[0].mxu0
        %v2148 = vadd.f32 0.0, %v2147
        %v2149 = vpop.f32.mrb[0].mxu0
        %2150 = vmatprep.mubr.f32.mxu0 0.0
        %2151 = vmatmul.mubr.f32.gmra.mrb[0].mxu0 %v1309
        %v2152 = vpop.f32.mrb[0].mxu0
        %v2153 = vadd.f32 0.0, %v2152
        %v2154 = vpop.f32.mrb[0].mxu0
        %2155 = vdwg.mxu0
        %2156 = vmatprep.subr.mxu0 0.0
        %2157 = vmatpush1.msra.mxu0 %v1049
        %2158 = vmatprep.subr.mxu0 0.0
        %2159 = vmatpush1.msra.mxu0 %v1054
        %2160 = vmatprep.subr.mxu0 0.0
        %2161 = vmatpush1.msra.mxu0 %v1059
        %2162 = vmatprep.subr.mxu0 0.0
        %2163 = vmatpush1.msra.mxu0 %v1064
        %2164 = vmatprep.subr.mxu0 0.0
        %2165 = vmatpush1.msra.mxu0 %v1069
        %2166 = vmatprep.subr.mxu0 0.0
        %2167 = vmatpush1.msra.mxu0 %v1074
        %2168 = vmatprep.subr.mxu0 0.0
        %2169 = vmatpush1.msra.mxu0 0.0
        %2170 = vmatprep.subr.mxu0 0.0
        %2171 = vmatpush1.msra.mxu0 0.0
        %2172 = vmatprep.subr.mxu0 0.0
        %2173 = vmatpush1.msra.mxu0 0.0
        %2174 = vmatprep.subr.mxu0 0.0
        %2175 = vmatpush1.msra.mxu0 0.0
        %2176 = vmatprep.subr.mxu0 0.0
        %2177 = vmatpush1.msra.mxu0 0.0
        %2178 = vmatprep.subr.mxu0 0.0
        %2179 = vmatpush1.msra.mxu0 0.0
        %2180 = vmatprep.subr.mxu0 0.0
        %2181 = vmatpush1.msra.mxu0 0.0
        %2182 = vmatprep.subr.mxu0 0.0
        %2183 = vmatpush1.msra.mxu0 0.0
        %2184 = vmatprep.subr.mxu0 0.0
        %2185 = vmatpush1.msra.mxu0 0.0
        %2186 = vmatprep.subr.mxu0 0.0
        %2187 = vmatpush1.msra.mxu0 0.0
        %2188 = vmatprep.subr.mxu0 0.0
        %2189 = vmatpush1.msra.mxu0 0.0
        %2190 = vmatprep.subr.mxu0 0.0
        %2191 = vmatpush1.msra.mxu0 0.0
        %2192 = vmatprep.subr.mxu0 0.0
        %2193 = vmatpush1.msra.mxu0 0.0
        %2194 = vmatprep.subr.mxu0 0.0
        %2195 = vmatpush1.msra.mxu0 0.0
        %2196 = vmatprep.subr.mxu0 0.0
        %2197 = vmatpush1.msra.mxu0 0.0
        %2198 = vmatprep.subr.mxu0 0.0
        %2199 = vmatpush1.msra.mxu0 0.0
        %2200 = vmatprep.subr.mxu0 0.0
        %2201 = vmatpush1.msra.mxu0 0.0
        %2202 = vmatprep.subr.mxu0 0.0
        %2203 = vmatpush1.msra.mxu0 0.0
        %2204 = vmatprep.subr.mxu0 0.0
        %2205 = vmatpush1.msra.mxu0 0.0
        %2206 = vmatprep.subr.mxu0 0.0
        %2207 = vmatpush1.msra.mxu0 0.0
        %2208 = vmatprep.subr.mxu0 0.0
        %2209 = vmatpush1.msra.mxu0 0.0
        %2210 = vmatprep.subr.mxu0 0.0
        %2211 = vmatpush1.msra.mxu0 0.0
        %2212 = vmatprep.subr.mxu0 0.0
        %2213 = vmatpush1.msra.mxu0 0.0
        %2214 = vmatprep.subr.mxu0 0.0
        %2215 = vmatpush1.msra.mxu0 0.0
        %2216 = vmatprep.subr.mxu0 0.0
        %2217 = vmatpush1.msra.mxu0 0.0
        %2218 = vmatprep.subr.mxu0 0.0
        %2219 = vmatpush1.msra.mxu0 0.0
        %2220 = vmatprep.mubr.f32.mxu0 0.0
        %2221 = vmatmul.mubr.f32.gmra.mrb[0].mxu0 %v1294
        %v2222 = vpop.f32.mrb[0].mxu0
        %v2223 = vadd.f32 0.0, %v2222
        %v2224 = vpop.f32.mrb[0].mxu0
        %2225 = vmatprep.mubr.f32.mxu0 0.0
        %2226 = vmatmul.mubr.f32.gmra.mrb[0].mxu0 %v1297
        %v2227 = vpop.f32.mrb[0].mxu0
        %v2228 = vadd.f32 0.0, %v2227
        %v2229 = vpop.f32.mrb[0].mxu0
        %2230 = vmatprep.mubr.f32.mxu0 0.0
        %2231 = vmatmul.mubr.f32.gmra.mrb[0].mxu0 %v1300
        %v2232 = vpop.f32.mrb[0].mxu0
        %v2233 = vadd.f32 0.0, %v2232
        %v2234 = vpop.f32.mrb[0].mxu0
        %2235 = vmatprep.mubr.f32.mxu0 0.0
        %2236 = vmatmul.mubr.f32.gmra.mrb[0].mxu0 %v1303
        %v2237 = vpop.f32.mrb[0].mxu0
        %v2238 = vadd.f32 0.0, %v2237
        %v2239 = vpop.f32.mrb[0].mxu0
        %2240 = vmatprep.mubr.f32.mxu0 0.0
        %2241 = vmatmul.mubr.f32.gmra.mrb[0].mxu0 %v1306
        %v2242 = vpop.f32.mrb[0].mxu0
        %v2243 = vadd.f32 0.0, %v2242
        %v2244 = vpop.f32.mrb[0].mxu0
        %2245 = vmatprep.mubr.f32.mxu0 0.0
        %2246 = vmatmul.mubr.f32.gmra.mrb[0].mxu0 %v1309
        %v2247 = vpop.f32.mrb[0].mxu0
        %v2248 = vadd.f32 0.0, %v2247
        %v2249 = vpop.f32.mrb[0].mxu0
        %2250 = vdwg.mxu0
        %2251 = vmatprep.subr.mxu0 0.0
        %2252 = vmatpush1.msra.mxu0 %v1139
        %2253 = vmatprep.subr.mxu0 0.0
        %2254 = vmatpush1.msra.mxu0 %v1144
        %2255 = vmatprep.subr.mxu0 0.0
        %2256 = vmatpush1.msra.mxu0 %v1149
        %2257 = vmatprep.subr.mxu0 0.0
        %2258 = vmatpush1.msra.mxu0 %v1154
        %2259 = vmatprep.subr.mxu0 0.0
        %2260 = vmatpush1.msra.mxu0 %v1159
        %2261 = vmatprep.subr.mxu0 0.0
        %2262 = vmatpush1.msra.mxu0 %v1164
        %2263 = vmatprep.subr.mxu0 0.0
        %2264 = vmatpush1.msra.mxu0 0.0
        %2265 = vmatprep.subr.mxu0 0.0
        %2266 = vmatpush1.msra.mxu0 0.0
        %2267 = vmatprep.subr.mxu0 0.0
        %2268 = vmatpush1.msra.mxu0 0.0
        %2269 = vmatprep.subr.mxu0 0.0
        %2270 = vmatpush1.msra.mxu0 0.0
        %2271 = vmatprep.subr.mxu0 0.0
        %2272 = vmatpush1.msra.mxu0 0.0
        %2273 = vmatprep.subr.mxu0 0.0
        %2274 = vmatpush1.msra.mxu0 0.0
        %2275 = vmatprep.subr.mxu0 0.0
        %2276 = vmatpush1.msra.mxu0 0.0
        %2277 = vmatprep.subr.mxu0 0.0
        %2278 = vmatpush1.msra.mxu0 0.0
        %2279 = vmatprep.subr.mxu0 0.0
        %2280 = vmatpush1.msra.mxu0 0.0
        %2281 = vmatprep.subr.mxu0 0.0
        %2282 = vmatpush1.msra.mxu0 0.0
        %2283 = vmatprep.subr.mxu0 0.0
        %2284 = vmatpush1.msra.mxu0 0.0
        %2285 = vmatprep.subr.mxu0 0.0
        %2286 = vmatpush1.msra.mxu0 0.0
        %2287 = vmatprep.subr.mxu0 0.0
        %2288 = vmatpush1.msra.mxu0 0.0
        %2289 = vmatprep.subr.mxu0 0.0
        %2290 = vmatpush1.msra.mxu0 0.0
        %2291 = vmatprep.subr.mxu0 0.0
        %2292 = vmatpush1.msra.mxu0 0.0
        %2293 = vmatprep.subr.mxu0 0.0
        %2294 = vmatpush1.msra.mxu0 0.0
        %2295 = vmatprep.subr.mxu0 0.0
        %2296 = vmatpush1.msra.mxu0 0.0
        %2297 = vmatprep.subr.mxu0 0.0
        %2298 = vmatpush1.msra.mxu0 0.0
        %2299 = vmatprep.subr.mxu0 0.0
        %2300 = vmatpush1.msra.mxu0 0.0
        %2301 = vmatprep.subr.mxu0 0.0
        %2302 = vmatpush1.msra.mxu0 0.0
        %2303 = vmatprep.subr.mxu0 0.0
        %2304 = vmatpush1.msra.mxu0 0.0
        %2305 = vmatprep.subr.mxu0 0.0
        %2306 = vmatpush1.msra.mxu0 0.0
        %2307 = vmatprep.subr.mxu0 0.0
        %2308 = vmatpush1.msra.mxu0 0.0
        %2309 = vmatprep.subr.mxu0 0.0
        %2310 = vmatpush1.msra.mxu0 0.0
        %2311 = vmatprep.subr.mxu0 0.0
        %2312 = vmatpush1.msra.mxu0 0.0
        %2313 = vmatprep.subr.mxu0 0.0
        %2314 = vmatpush1.msra.mxu0 0.0
        %2315 = vmatprep.mubr.f32.mxu0 0.0
        %2316 = vmatmul.mubr.f32.gmra.mrb[0].mxu0 %v1294
        %v2317 = vpop.f32.mrb[0].mxu0
        %v2318 = vadd.f32 0.0, %v2317
        %v2319 = vpop.f32.mrb[0].mxu0
        %2320 = vmatprep.mubr.f32.mxu0 0.0
        %2321 = vmatmul.mubr.f32.gmra.mrb[0].mxu0 %v1297
        %v2322 = vpop.f32.mrb[0].mxu0
        %v2323 = vadd.f32 0.0, %v2322
        %v2324 = vpop.f32.mrb[0].mxu0
        %2325 = vmatprep.mubr.f32.mxu0 0.0
        %2326 = vmatmul.mubr.f32.gmra.mrb[0].mxu0 %v1300
        %v2327 = vpop.f32.mrb[0].mxu0
        %v2328 = vadd.f32 0.0, %v2327
        %v2329 = vpop.f32.mrb[0].mxu0
        %2330 = vmatprep.mubr.f32.mxu0 0.0
        %2331 = vmatmul.mubr.f32.gmra.mrb[0].mxu0 %v1303
        %v2332 = vpop.f32.mrb[0].mxu0
        %v2333 = vadd.f32 0.0, %v2332
        %v2334 = vpop.f32.mrb[0].mxu0
        %2335 = vmatprep.mubr.f32.mxu0 0.0
        %2336 = vmatmul.mubr.f32.gmra.mrb[0].mxu0 %v1306
        %v2337 = vpop.f32.mrb[0].mxu0
        %v2338 = vadd.f32 0.0, %v2337
        %v2339 = vpop.f32.mrb[0].mxu0
        %2340 = vmatprep.mubr.f32.mxu0 0.0
        %2341 = vmatmul.mubr.f32.gmra.mrb[0].mxu0 %v1309
        %v2342 = vpop.f32.mrb[0].mxu0
        %v2343 = vadd.f32 0.0, %v2342
        %v2344 = vpop.f32.mrb[0].mxu0
        %2345 = vdwg.mxu0
        %2346 = vmatprep.subr.mxu0 0.0
        %2347 = vmatpush1.msra.mxu0 %v1229
        %2348 = vmatprep.subr.mxu0 0.0
        %2349 = vmatpush1.msra.mxu0 %v1234
        %2350 = vmatprep.subr.mxu0 0.0
        %2351 = vmatpush1.msra.mxu0 %v1239
        %2352 = vmatprep.subr.mxu0 0.0
        %2353 = vmatpush1.msra.mxu0 %v1244
        %2354 = vmatprep.subr.mxu0 0.0
        %2355 = vmatpush1.msra.mxu0 %v1249
        %2356 = vmatprep.subr.mxu0 0.0
        %2357 = vmatpush1.msra.mxu0 %v1254
        %2358 = vmatprep.subr.mxu0 0.0
        %2359 = vmatpush1.msra.mxu0 0.0
        %2360 = vmatprep.subr.mxu0 0.0
        %2361 = vmatpush1.msra.mxu0 0.0
        %2362 = vmatprep.subr.mxu0 0.0
        %2363 = vmatpush1.msra.mxu0 0.0
        %2364 = vmatprep.subr.mxu0 0.0
        %2365 = vmatpush1.msra.mxu0 0.0
        %2366 = vmatprep.subr.mxu0 0.0
        %2367 = vmatpush1.msra.mxu0 0.0
        %2368 = vmatprep.subr.mxu0 0.0
        %2369 = vmatpush1.msra.mxu0 0.0
        %2370 = vmatprep.subr.mxu0 0.0
        %2371 = vmatpush1.msra.mxu0 0.0
        %2372 = vmatprep.subr.mxu0 0.0
        %2373 = vmatpush1.msra.mxu0 0.0
        %2374 = vmatprep.subr.mxu0 0.0
        %2375 = vmatpush1.msra.mxu0 0.0
        %2376 = vmatprep.subr.mxu0 0.0
        %2377 = vmatpush1.msra.mxu0 0.0
        %2378 = vmatprep.subr.mxu0 0.0
        %2379 = vmatpush1.msra.mxu0 0.0
        %2380 = vmatprep.subr.mxu0 0.0
        %2381 = vmatpush1.msra.mxu0 0.0
        %2382 = vmatprep.subr.mxu0 0.0
        %2383 = vmatpush1.msra.mxu0 0.0
        %2384 = vmatprep.subr.mxu0 0.0
        %2385 = vmatpush1.msra.mxu0 0.0
        %2386 = vmatprep.subr.mxu0 0.0
        %2387 = vmatpush1.msra.mxu0 0.0
        %2388 = vmatprep.subr.mxu0 0.0
        %2389 = vmatpush1.msra.mxu0 0.0
        %2390 = vmatprep.subr.mxu0 0.0
        %2391 = vmatpush1.msra.mxu0 0.0
        %2392 = vmatprep.subr.mxu0 0.0
        %2393 = vmatpush1.msra.mxu0 0.0
        %2394 = vmatprep.subr.mxu0 0.0
        %2395 = vmatpush1.msra.mxu0 0.0
        %2396 = vmatprep.subr.mxu0 0.0
        %2397 = vmatpush1.msra.mxu0 0.0
        %2398 = vmatprep.subr.mxu0 0.0
        %2399 = vmatpush1.msra.mxu0 0.0
        %2400 = vmatprep.subr.mxu0 0.0
        %2401 = vmatpush1.msra.mxu0 0.0
        %2402 = vmatprep.subr.mxu0 0.0
        %2403 = vmatpush1.msra.mxu0 0.0
        %2404 = vmatprep.subr.mxu0 0.0
        %2405 = vmatpush1.msra.mxu0 0.0
        %2406 = vmatprep.subr.mxu0 0.0
        %2407 = vmatpush1.msra.mxu0 0.0
        %2408 = vmatprep.subr.mxu0 0.0
        %2409 = vmatpush1.msra.mxu0 0.0
        %2410 = vmatprep.mubr.f32.mxu0 0.0
        %2411 = vmatmul.mubr.f32.gmra.mrb[0].mxu0 %v1294
        %v2412 = vpop.f32.mrb[0].mxu0
        %v2413 = vadd.f32 0.0, %v2412
        %v2414 = vpop.f32.mrb[0].mxu0
        %2415 = vmatprep.mubr.f32.mxu0 0.0
        %2416 = vmatmul.mubr.f32.gmra.mrb[0].mxu0 %v1297
        %v2417 = vpop.f32.mrb[0].mxu0
        %v2418 = vadd.f32 0.0, %v2417
        %v2419 = vpop.f32.mrb[0].mxu0
        %2420 = vmatprep.mubr.f32.mxu0 0.0
        %2421 = vmatmul.mubr.f32.gmra.mrb[0].mxu0 %v1300
        %v2422 = vpop.f32.mrb[0].mxu0
        %v2423 = vadd.f32 0.0, %v2422
        %v2424 = vpop.f32.mrb[0].mxu0
        %2425 = vmatprep.mubr.f32.mxu0 0.0
        %2426 = vmatmul.mubr.f32.gmra.mrb[0].mxu0 %v1303
        %v2427 = vpop.f32.mrb[0].mxu0
        %v2428 = vadd.f32 0.0, %v2427
        %v2429 = vpop.f32.mrb[0].mxu0
        %2430 = vmatprep.mubr.f32.mxu0 0.0
        %2431 = vmatmul.mubr.f32.gmra.mrb[0].mxu0 %v1306
        %v2432 = vpop.f32.mrb[0].mxu0
        %v2433 = vadd.f32 0.0, %v2432
        %v2434 = vpop.f32.mrb[0].mxu0
        %2435 = vmatprep.mubr.f32.mxu0 0.0
        %2436 = vmatmul.mubr.f32.gmra.mrb[0].mxu0 %v1309
        %v2437 = vpop.f32.mrb[0].mxu0
        %v2438 = vadd.f32 0.0, %v2437
        %v2439 = vpop.f32.mrb[0].mxu0
        %2440 = vdwg.mxu0
        %v2441 = vmul.f32 %v2033, %v2033
        %v2442 = vmul.f32 %v2038, %v2038
        %v2443 = vmul.f32 %v2043, %v2043
        %v2444 = vmul.f32 %v2048, %v2048
        %v2445 = vmul.f32 %v2053, %v2053
        %v2446 = vmul.f32 %v2058, %v2058
        %v2447 = vmul.f32 %v2128, %v2128
        %v2448 = vmul.f32 %v2133, %v2133
        %v2449 = vmul.f32 %v2138, %v2138
        %v2450 = vmul.f32 %v2143, %v2143
        %v2451 = vmul.f32 %v2148, %v2148
        %v2452 = vmul.f32 %v2153, %v2153
        %v2453 = vmul.f32 %v2033, %v2128
        %v2454 = vmul.f32 %v2038, %v2133
        %v2455 = vmul.f32 %v2043, %v2138
        %v2456 = vmul.f32 %v2048, %v2143
        %v2457 = vmul.f32 %v2053, %v2148
        %v2458 = vmul.f32 %v2058, %v2153
        %v2459 = vsub.f32 %v2223, %v2441
        %v2460 = vsub.f32 %v2228, %v2442
        %v2461 = vsub.f32 %v2233, %v2443
        %v2462 = vsub.f32 %v2238, %v2444
        %v2463 = vsub.f32 %v2243, %v2445
        %v2464 = vsub.f32 %v2248, %v2446
        %v2465 = vsub.f32 %v2318, %v2447
        %v2466 = vsub.f32 %v2323, %v2448
        %v2467 = vsub.f32 %v2328, %v2449
        %v2468 = vsub.f32 %v2333, %v2450
        %v2469 = vsub.f32 %v2338, %v2451
        %v2470 = vsub.f32 %v2343, %v2452
        %v2471 = vsub.f32 %v2413, %v2453
        %v2472 = vsub.f32 %v2418, %v2454
        %v2473 = vsub.f32 %v2423, %v2455
        %v2474 = vsub.f32 %v2428, %v2456
        %v2475 = vsub.f32 %v2433, %v2457
        %v2476 = vsub.f32 %v2438, %v2458
        %v2477 = vmul.f32 %v2471, 2.0
        %v2478 = vmul.f32 %v2472, 2.0
        %v2479 = vmul.f32 %v2473, 2.0
        %v2480 = vmul.f32 %v2474, 2.0
        %v2481 = vmul.f32 %v2475, 2.0
        %v2482 = vmul.f32 %v2476, 2.0
        %v2483 = vadd.f32 %v2477, 0.0009
        %v2484 = vadd.f32 %v2478, 0.0009
        %v2485 = vadd.f32 %v2479, 0.0009
        %v2486 = vadd.f32 %v2480, 0.0009
        %v2487 = vadd.f32 %v2481, 0.0009
        %v2488 = vadd.f32 %v2482, 0.0009
        %v2489 = vadd.f32 %v2459, %v2465
        %v2490 = vadd.f32 %v2460, %v2466
        %v2491 = vadd.f32 %v2461, %v2467
        %v2492 = vadd.f32 %v2462, %v2468
        %v2493 = vadd.f32 %v2463, %v2469
        %v2494 = vadd.f32 %v2464, %v2470
        %v2495 = vadd.f32 %v2489, 0.0009
        %v2496 = vadd.f32 %v2490, 0.0009
        %v2497 = vadd.f32 %v2491, 0.0009
        %v2498 = vadd.f32 %v2492, 0.0009
        %v2499 = vadd.f32 %v2493, 0.0009
        %v2500 = vadd.f32 %v2494, 0.0009
        %v2501 = vrcp.pop %v2495
        %v2502 = vrcp.pop %v2496
        %v2503 = vrcp.pop %v2497
        %v2504 = vrcp.pop %v2498
        %v2505 = vrcp.pop %v2499
        %v2506 = vrcp.pop %v2500
        %v2507 = vmul.f32 %v2483, %v2501
        %v2508 = vmul.f32 %v2484, %v2502
        %v2509 = vmul.f32 %v2485, %v2503
        %v2510 = vmul.f32 %v2486, %v2504
        %v2511 = vmul.f32 %v2487, %v2505
        %v2512 = vmul.f32 %v2488, %v2506
        %v2513 = vmul.f32 %v2453, 2.0
        %v2514 = vmul.f32 %v2454, 2.0
        %v2515 = vmul.f32 %v2455, 2.0
        %v2516 = vmul.f32 %v2456, 2.0
        %v2517 = vmul.f32 %v2457, 2.0
        %v2518 = vmul.f32 %v2458, 2.0
        %v2519 = vadd.f32 %v2513, 0.0001
        %v2520 = vadd.f32 %v2514, 0.0001
        %v2521 = vadd.f32 %v2515, 0.0001
        %v2522 = vadd.f32 %v2516, 0.0001
        %v2523 = vadd.f32 %v2517, 0.0001
        %v2524 = vadd.f32 %v2518, 0.0001
        %v2525 = vadd.f32 %v2441, %v2447
        %v2526 = vadd.f32 %v2442, %v2448
        %v2527 = vadd.f32 %v2443, %v2449
        %v2528 = vadd.f32 %v2444, %v2450
        %v2529 = vadd.f32 %v2445, %v2451
        %v2530 = vadd.f32 %v2446, %v2452
        %v2531 = vadd.f32 %v2525, 0.0001
        %v2532 = vadd.f32 %v2526, 0.0001
        %v2533 = vadd.f32 %v2527, 0.0001
        %v2534 = vadd.f32 %v2528, 0.0001
        %v2535 = vadd.f32 %v2529, 0.0001
        %v2536 = vadd.f32 %v2530, 0.0001
        %v2537 = vrcp.pop %v2531
        %v2538 = vrcp.pop %v2532
        %v2539 = vrcp.pop %v2533
        %v2540 = vrcp.pop %v2534
        %v2541 = vrcp.pop %v2535
        %v2542 = vrcp.pop %v2536
        %v2543 = vmul.f32 %v2519, %v2537
        %v2544 = vmul.f32 %v2520, %v2538
        %v2545 = vmul.f32 %v2521, %v2539
        %v2546 = vmul.f32 %v2522, %v2540
        %v2547 = vmul.f32 %v2523, %v2541
        %v2548 = vmul.f32 %v2524, %v2542
        %v2549 = vmul.f32 %v2543, %v2507
        %v2550 = vmul.f32 %v2544, %v2508
        %v2551 = vmul.f32 %v2545, %v2509
        %v2552 = vmul.f32 %v2546, %v2510
        %v2553 = vmul.f32 %v2547, %v2511
        %v2554 = vmul.f32 %v2548, %v2512
        %v2555 = vsel %vm1900, %v2549, 0.0
        %2556 = vadd.xlane.f32.xlu0 %v2555
        %v2557 = vpop.xlane.xlu0 %2556
        %v2558 = vsel %vm1900, %v2550, 0.0
        %2559 = vadd.xlane.f32.xlu0 %v2558
        %v2560 = vpop.xlane.xlu0 %2559
        %v2561 = vsel %vm1900, %v2551, 0.0
        %2562 = vadd.xlane.f32.xlu0 %v2561
        %v2563 = vpop.xlane.xlu0 %2562
        %v2564 = vsel %vm1900, %v2552, 0.0
        %2565 = vadd.xlane.f32.xlu0 %v2564
        %v2566 = vpop.xlane.xlu0 %2565
        %v2567 = vsel %vm1900, %v2553, 0.0
        %2568 = vadd.xlane.f32.xlu0 %v2567
        %v2569 = vpop.xlane.xlu0 %2568
        %v2570 = vsel %vm1916, %v2554, 0.0
        %2571 = vadd.xlane.f32.xlu0 %v2570
        %v2572 = vpop.xlane.xlu0 %2571
        %v2573 = vadd.f32 %v2557, %v2560
        %v2574 = vadd.f32 %v2573, %v2563
        %v2575 = vadd.f32 %v2574, %v2566
        %v2576 = vadd.f32 %v2575, %v2569
        %v2577 = vsel %vm1924, %v2572, 0.0
        %v2578 = vadd.f32 %v2576, %v2577
        %v2579 = vrot.slane %v2578, 4
        %v2580 = vadd.f32 %v2578, %v2579
        %v2581 = vrot.slane %v2580, 2
        %v2582 = vadd.f32 %v2580, %v2581
        %v2583 = vrot.slane %v2582, 1
        %v2584 = vadd.f32 %v2582, %v2583
        %v2585 = vsel %vm1900, %v2507, 0.0
        %2586 = vadd.xlane.f32.xlu0 %v2585
        %v2587 = vpop.xlane.xlu0 %2586
        %v2588 = vsel %vm1900, %v2508, 0.0
        %2589 = vadd.xlane.f32.xlu0 %v2588
        %v2590 = vpop.xlane.xlu0 %2589
        %v2591 = vsel %vm1900, %v2509, 0.0
        %2592 = vadd.xlane.f32.xlu0 %v2591
        %v2593 = vpop.xlane.xlu0 %2592
        %v2594 = vsel %vm1900, %v2510, 0.0
        %2595 = vadd.xlane.f32.xlu0 %v2594
        %v2596 = vpop.xlane.xlu0 %2595
        %v2597 = vsel %vm1900, %v2511, 0.0
        %2598 = vadd.xlane.f32.xlu0 %v2597
        %v2599 = vpop.xlane.xlu0 %2598
        %v2600 = vsel %vm1916, %v2512, 0.0
        %2601 = vadd.xlane.f32.xlu0 %v2600
        %v2602 = vpop.xlane.xlu0 %2601
        %v2603 = vadd.f32 %v2587, %v2590
        %v2604 = vadd.f32 %v2603, %v2593
        %v2605 = vadd.f32 %v2604, %v2596
        %v2606 = vadd.f32 %v2605, %v2599
        %v2607 = vsel %vm1924, %v2602, 0.0
        %v2608 = vadd.f32 %v2606, %v2607
        %v2609 = vrot.slane %v2608, 4
        %v2610 = vadd.f32 %v2608, %v2609
        %v2611 = vrot.slane %v2610, 2
        %v2612 = vadd.f32 %v2610, %v2611
        %v2613 = vrot.slane %v2612, 1
        %v2614 = vadd.f32 %v2612, %v2613
        %v2615 = vsel %vm1963, %v2584, %v2614
        %v2616 = vmul.f32 %v2615, 0.0004725898
        %2617 = vmatprep.subr.mxu0 0.0
        %2618 = vmatpush1.msra.mxu0 %v899
        %2619 = vmatprep.subr.mxu0 0.0
        %2620 = vmatpush1.msra.mxu0 %v904
        %2621 = vmatprep.subr.mxu0 0.0
        %2622 = vmatpush1.msra.mxu0 %v909
        %2623 = vmatprep.subr.mxu0 0.0
        %2624 = vmatpush1.msra.mxu0 %v914
        %2625 = vmatprep.subr.mxu0 0.0
        %2626 = vmatpush1.msra.mxu0 %v919
        %2627 = vmatprep.subr.mxu0 0.0
        %2628 = vmatpush1.msra.mxu0 %v924
        %2629 = vmatprep.subr.mxu0 0.0
        %2630 = vmatpush1.msra.mxu0 0.0
        %2631 = vmatprep.subr.mxu0 0.0
        %2632 = vmatpush1.msra.mxu0 0.0
        %2633 = vmatprep.subr.mxu0 0.0
        %2634 = vmatpush1.msra.mxu0 0.0
        %2635 = vmatprep.subr.mxu0 0.0
        %2636 = vmatpush1.msra.mxu0 0.0
        %2637 = vmatprep.subr.mxu0 0.0
        %2638 = vmatpush1.msra.mxu0 0.0
        %2639 = vmatprep.subr.mxu0 0.0
        %2640 = vmatpush1.msra.mxu0 0.0
        %2641 = vmatprep.subr.mxu0 0.0
        %2642 = vmatpush1.msra.mxu0 0.0
        %2643 = vmatprep.subr.mxu0 0.0
        %2644 = vmatpush1.msra.mxu0 0.0
        %2645 = vmatprep.subr.mxu0 0.0
        %2646 = vmatpush1.msra.mxu0 0.0
        %2647 = vmatprep.subr.mxu0 0.0
        %2648 = vmatpush1.msra.mxu0 0.0
        %2649 = vmatprep.subr.mxu0 0.0
        %2650 = vmatpush1.msra.mxu0 0.0
        %2651 = vmatprep.subr.mxu0 0.0
        %2652 = vmatpush1.msra.mxu0 0.0
        %2653 = vmatprep.subr.mxu0 0.0
        %2654 = vmatpush1.msra.mxu0 0.0
        %2655 = vmatprep.subr.mxu0 0.0
        %2656 = vmatpush1.msra.mxu0 0.0
        %2657 = vmatprep.subr.mxu0 0.0
        %2658 = vmatpush1.msra.mxu0 0.0
        %2659 = vmatprep.subr.mxu0 0.0
        %2660 = vmatpush1.msra.mxu0 0.0
        %2661 = vmatprep.subr.mxu0 0.0
        %2662 = vmatpush1.msra.mxu0 0.0
        %2663 = vmatprep.subr.mxu0 0.0
        %2664 = vmatpush1.msra.mxu0 0.0
        %2665 = vmatprep.subr.mxu0 0.0
        %2666 = vmatpush1.msra.mxu0 0.0
        %2667 = vmatprep.subr.mxu0 0.0
        %2668 = vmatpush1.msra.mxu0 0.0
        %2669 = vmatprep.subr.mxu0 0.0
        %2670 = vmatpush1.msra.mxu0 0.0
        %2671 = vmatprep.subr.mxu0 0.0
        %2672 = vmatpush1.msra.mxu0 0.0
        %2673 = vmatprep.subr.mxu0 0.0
        %2674 = vmatpush1.msra.mxu0 0.0
        %2675 = vmatprep.subr.mxu0 0.0
        %2676 = vmatpush1.msra.mxu0 0.0
        %2677 = vmatprep.subr.mxu0 0.0
        %2678 = vmatpush1.msra.mxu0 0.0
        %2679 = vmatprep.subr.mxu0 0.0
        %2680 = vmatpush1.msra.mxu0 0.0
        %2681 = vmatprep.mubr.f32.mxu0 0.0
        %2682 = vmatmul.mubr.f32.gmra.mrb[0].mxu0 %v1294
        %v2683 = vpop.f32.mrb[0].mxu0
        %v2684 = vadd.f32 0.0, %v2683
        %v2685 = vpop.f32.mrb[0].mxu0
        %2686 = vmatprep.mubr.f32.mxu0 0.0
        %2687 = vmatmul.mubr.f32.gmra.mrb[0].mxu0 %v1297
        %v2688 = vpop.f32.mrb[0].mxu0
        %v2689 = vadd.f32 0.0, %v2688
        %v2690 = vpop.f32.mrb[0].mxu0
        %2691 = vmatprep.mubr.f32.mxu0 0.0
        %2692 = vmatmul.mubr.f32.gmra.mrb[0].mxu0 %v1300
        %v2693 = vpop.f32.mrb[0].mxu0
        %v2694 = vadd.f32 0.0, %v2693
        %v2695 = vpop.f32.mrb[0].mxu0
        %2696 = vmatprep.mubr.f32.mxu0 0.0
        %2697 = vmatmul.mubr.f32.gmra.mrb[0].mxu0 %v1303
        %v2698 = vpop.f32.mrb[0].mxu0
        %v2699 = vadd.f32 0.0, %v2698
        %v2700 = vpop.f32.mrb[0].mxu0
        %2701 = vmatprep.mubr.f32.mxu0 0.0
        %2702 = vmatmul.mubr.f32.gmra.mrb[0].mxu0 %v1306
        %v2703 = vpop.f32.mrb[0].mxu0
        %v2704 = vadd.f32 0.0, %v2703
        %v2705 = vpop.f32.mrb[0].mxu0
        %2706 = vmatprep.mubr.f32.mxu0 0.0
        %2707 = vmatmul.mubr.f32.gmra.mrb[0].mxu0 %v1309
        %v2708 = vpop.f32.mrb[0].mxu0
        %v2709 = vadd.f32 0.0, %v2708
        %v2710 = vpop.f32.mrb[0].mxu0
        %2711 = vdwg.mxu0
        %2712 = vmatprep.subr.mxu0 0.0
        %2713 = vmatpush1.msra.mxu0 %v989
        %2714 = vmatprep.subr.mxu0 0.0
        %2715 = vmatpush1.msra.mxu0 %v994
        %2716 = vmatprep.subr.mxu0 0.0
        %2717 = vmatpush1.msra.mxu0 %v999
        %2718 = vmatprep.subr.mxu0 0.0
        %2719 = vmatpush1.msra.mxu0 %v1004
        %2720 = vmatprep.subr.mxu0 0.0
        %2721 = vmatpush1.msra.mxu0 %v1009
        %2722 = vmatprep.subr.mxu0 0.0
        %2723 = vmatpush1.msra.mxu0 %v1014
        %2724 = vmatprep.subr.mxu0 0.0
        %2725 = vmatpush1.msra.mxu0 0.0
        %2726 = vmatprep.subr.mxu0 0.0
        %2727 = vmatpush1.msra.mxu0 0.0
        %2728 = vmatprep.subr.mxu0 0.0
        %2729 = vmatpush1.msra.mxu0 0.0
        %2730 = vmatprep.subr.mxu0 0.0
        %2731 = vmatpush1.msra.mxu0 0.0
        %2732 = vmatprep.subr.mxu0 0.0
        %2733 = vmatpush1.msra.mxu0 0.0
        %2734 = vmatprep.subr.mxu0 0.0
        %2735 = vmatpush1.msra.mxu0 0.0
        %2736 = vmatprep.subr.mxu0 0.0
        %2737 = vmatpush1.msra.mxu0 0.0
        %2738 = vmatprep.subr.mxu0 0.0
        %2739 = vmatpush1.msra.mxu0 0.0
        %2740 = vmatprep.subr.mxu0 0.0
        %2741 = vmatpush1.msra.mxu0 0.0
        %2742 = vmatprep.subr.mxu0 0.0
        %2743 = vmatpush1.msra.mxu0 0.0
        %2744 = vmatprep.subr.mxu0 0.0
        %2745 = vmatpush1.msra.mxu0 0.0
        %2746 = vmatprep.subr.mxu0 0.0
        %2747 = vmatpush1.msra.mxu0 0.0
        %2748 = vmatprep.subr.mxu0 0.0
        %2749 = vmatpush1.msra.mxu0 0.0
        %2750 = vmatprep.subr.mxu0 0.0
        %2751 = vmatpush1.msra.mxu0 0.0
        %2752 = vmatprep.subr.mxu0 0.0
        %2753 = vmatpush1.msra.mxu0 0.0
        %2754 = vmatprep.subr.mxu0 0.0
        %2755 = vmatpush1.msra.mxu0 0.0
        %2756 = vmatprep.subr.mxu0 0.0
        %2757 = vmatpush1.msra.mxu0 0.0
        %2758 = vmatprep.subr.mxu0 0.0
        %2759 = vmatpush1.msra.mxu0 0.0
        %2760 = vmatprep.subr.mxu0 0.0
        %2761 = vmatpush1.msra.mxu0 0.0
        %2762 = vmatprep.subr.mxu0 0.0
        %2763 = vmatpush1.msra.mxu0 0.0
        %2764 = vmatprep.subr.mxu0 0.0
        %2765 = vmatpush1.msra.mxu0 0.0
        %2766 = vmatprep.subr.mxu0 0.0
        %2767 = vmatpush1.msra.mxu0 0.0
        %2768 = vmatprep.subr.mxu0 0.0
        %2769 = vmatpush1.msra.mxu0 0.0
        %2770 = vmatprep.subr.mxu0 0.0
        %2771 = vmatpush1.msra.mxu0 0.0
        %2772 = vmatprep.subr.mxu0 0.0
        %2773 = vmatpush1.msra.mxu0 0.0
        %2774 = vmatprep.subr.mxu0 0.0
        %2775 = vmatpush1.msra.mxu0 0.0
        %2776 = vmatprep.mubr.f32.mxu0 0.0
        %2777 = vmatmul.mubr.f32.gmra.mrb[0].mxu0 %v1294
        %v2778 = vpop.f32.mrb[0].mxu0
        %v2779 = vadd.f32 0.0, %v2778
        %v2780 = vpop.f32.mrb[0].mxu0
        %2781 = vmatprep.mubr.f32.mxu0 0.0
        %2782 = vmatmul.mubr.f32.gmra.mrb[0].mxu0 %v1297
        %v2783 = vpop.f32.mrb[0].mxu0
        %v2784 = vadd.f32 0.0, %v2783
        %v2785 = vpop.f32.mrb[0].mxu0
        %2786 = vmatprep.mubr.f32.mxu0 0.0
        %2787 = vmatmul.mubr.f32.gmra.mrb[0].mxu0 %v1300
        %v2788 = vpop.f32.mrb[0].mxu0
        %v2789 = vadd.f32 0.0, %v2788
        %v2790 = vpop.f32.mrb[0].mxu0
        %2791 = vmatprep.mubr.f32.mxu0 0.0
        %2792 = vmatmul.mubr.f32.gmra.mrb[0].mxu0 %v1303
        %v2793 = vpop.f32.mrb[0].mxu0
        %v2794 = vadd.f32 0.0, %v2793
        %v2795 = vpop.f32.mrb[0].mxu0
        %2796 = vmatprep.mubr.f32.mxu0 0.0
        %2797 = vmatmul.mubr.f32.gmra.mrb[0].mxu0 %v1306
        %v2798 = vpop.f32.mrb[0].mxu0
        %v2799 = vadd.f32 0.0, %v2798
        %v2800 = vpop.f32.mrb[0].mxu0
        %2801 = vmatprep.mubr.f32.mxu0 0.0
        %2802 = vmatmul.mubr.f32.gmra.mrb[0].mxu0 %v1309
        %v2803 = vpop.f32.mrb[0].mxu0
        %v2804 = vadd.f32 0.0, %v2803
        %v2805 = vpop.f32.mrb[0].mxu0
        %2806 = vdwg.mxu0
        %2807 = vmatprep.subr.mxu0 0.0
        %2808 = vmatpush1.msra.mxu0 %v1079
        %2809 = vmatprep.subr.mxu0 0.0
        %2810 = vmatpush1.msra.mxu0 %v1084
        %2811 = vmatprep.subr.mxu0 0.0
        %2812 = vmatpush1.msra.mxu0 %v1089
        %2813 = vmatprep.subr.mxu0 0.0
        %2814 = vmatpush1.msra.mxu0 %v1094
        %2815 = vmatprep.subr.mxu0 0.0
        %2816 = vmatpush1.msra.mxu0 %v1099
        %2817 = vmatprep.subr.mxu0 0.0
        %2818 = vmatpush1.msra.mxu0 %v1104
        %2819 = vmatprep.subr.mxu0 0.0
        %2820 = vmatpush1.msra.mxu0 0.0
        %2821 = vmatprep.subr.mxu0 0.0
        %2822 = vmatpush1.msra.mxu0 0.0
        %2823 = vmatprep.subr.mxu0 0.0
        %2824 = vmatpush1.msra.mxu0 0.0
        %2825 = vmatprep.subr.mxu0 0.0
        %2826 = vmatpush1.msra.mxu0 0.0
        %2827 = vmatprep.subr.mxu0 0.0
        %2828 = vmatpush1.msra.mxu0 0.0
        %2829 = vmatprep.subr.mxu0 0.0
        %2830 = vmatpush1.msra.mxu0 0.0
        %2831 = vmatprep.subr.mxu0 0.0
        %2832 = vmatpush1.msra.mxu0 0.0
        %2833 = vmatprep.subr.mxu0 0.0
        %2834 = vmatpush1.msra.mxu0 0.0
        %2835 = vmatprep.subr.mxu0 0.0
        %2836 = vmatpush1.msra.mxu0 0.0
        %2837 = vmatprep.subr.mxu0 0.0
        %2838 = vmatpush1.msra.mxu0 0.0
        %2839 = vmatprep.subr.mxu0 0.0
        %2840 = vmatpush1.msra.mxu0 0.0
        %2841 = vmatprep.subr.mxu0 0.0
        %2842 = vmatpush1.msra.mxu0 0.0
        %2843 = vmatprep.subr.mxu0 0.0
        %2844 = vmatpush1.msra.mxu0 0.0
        %2845 = vmatprep.subr.mxu0 0.0
        %2846 = vmatpush1.msra.mxu0 0.0
        %2847 = vmatprep.subr.mxu0 0.0
        %2848 = vmatpush1.msra.mxu0 0.0
        %2849 = vmatprep.subr.mxu0 0.0
        %2850 = vmatpush1.msra.mxu0 0.0
        %2851 = vmatprep.subr.mxu0 0.0
        %2852 = vmatpush1.msra.mxu0 0.0
        %2853 = vmatprep.subr.mxu0 0.0
        %2854 = vmatpush1.msra.mxu0 0.0
        %2855 = vmatprep.subr.mxu0 0.0
        %2856 = vmatpush1.msra.mxu0 0.0
        %2857 = vmatprep.subr.mxu0 0.0
        %2858 = vmatpush1.msra.mxu0 0.0
        %2859 = vmatprep.subr.mxu0 0.0
        %2860 = vmatpush1.msra.mxu0 0.0
        %2861 = vmatprep.subr.mxu0 0.0
        %2862 = vmatpush1.msra.mxu0 0.0
        %2863 = vmatprep.subr.mxu0 0.0
        %2864 = vmatpush1.msra.mxu0 0.0
        %2865 = vmatprep.subr.mxu0 0.0
        %2866 = vmatpush1.msra.mxu0 0.0
        %2867 = vmatprep.subr.mxu0 0.0
        %2868 = vmatpush1.msra.mxu0 0.0
        %2869 = vmatprep.subr.mxu0 0.0
        %2870 = vmatpush1.msra.mxu0 0.0
        %2871 = vmatprep.mubr.f32.mxu0 0.0
        %2872 = vmatmul.mubr.f32.gmra.mrb[0].mxu0 %v1294
        %v2873 = vpop.f32.mrb[0].mxu0
        %v2874 = vadd.f32 0.0, %v2873
        %v2875 = vpop.f32.mrb[0].mxu0
        %2876 = vmatprep.mubr.f32.mxu0 0.0
        %2877 = vmatmul.mubr.f32.gmra.mrb[0].mxu0 %v1297
        %v2878 = vpop.f32.mrb[0].mxu0
        %v2879 = vadd.f32 0.0, %v2878
        %v2880 = vpop.f32.mrb[0].mxu0
        %2881 = vmatprep.mubr.f32.mxu0 0.0
        %2882 = vmatmul.mubr.f32.gmra.mrb[0].mxu0 %v1300
        %v2883 = vpop.f32.mrb[0].mxu0
        %v2884 = vadd.f32 0.0, %v2883
        %v2885 = vpop.f32.mrb[0].mxu0
        %2886 = vmatprep.mubr.f32.mxu0 0.0
        %2887 = vmatmul.mubr.f32.gmra.mrb[0].mxu0 %v1303
        %v2888 = vpop.f32.mrb[0].mxu0
        %v2889 = vadd.f32 0.0, %v2888
        %v2890 = vpop.f32.mrb[0].mxu0
        %2891 = vmatprep.mubr.f32.mxu0 0.0
        %2892 = vmatmul.mubr.f32.gmra.mrb[0].mxu0 %v1306
        %v2893 = vpop.f32.mrb[0].mxu0
        %v2894 = vadd.f32 0.0, %v2893
        %v2895 = vpop.f32.mrb[0].mxu0
        %2896 = vmatprep.mubr.f32.mxu0 0.0
        %2897 = vmatmul.mubr.f32.gmra.mrb[0].mxu0 %v1309
        %v2898 = vpop.f32.mrb[0].mxu0
        %v2899 = vadd.f32 0.0, %v2898
        %v2900 = vpop.f32.mrb[0].mxu0
        %2901 = vdwg.mxu0
        %2902 = vmatprep.subr.mxu0 0.0
        %2903 = vmatpush1.msra.mxu0 %v1169
        %2904 = vmatprep.subr.mxu0 0.0
        %2905 = vmatpush1.msra.mxu0 %v1174
        %2906 = vmatprep.subr.mxu0 0.0
        %2907 = vmatpush1.msra.mxu0 %v1179
        %2908 = vmatprep.subr.mxu0 0.0
        %2909 = vmatpush1.msra.mxu0 %v1184
        %2910 = vmatprep.subr.mxu0 0.0
        %2911 = vmatpush1.msra.mxu0 %v1189
        %2912 = vmatprep.subr.mxu0 0.0
        %2913 = vmatpush1.msra.mxu0 %v1194
        %2914 = vmatprep.subr.mxu0 0.0
        %2915 = vmatpush1.msra.mxu0 0.0
        %2916 = vmatprep.subr.mxu0 0.0
        %2917 = vmatpush1.msra.mxu0 0.0
        %2918 = vmatprep.subr.mxu0 0.0
        %2919 = vmatpush1.msra.mxu0 0.0
        %2920 = vmatprep.subr.mxu0 0.0
        %2921 = vmatpush1.msra.mxu0 0.0
        %2922 = vmatprep.subr.mxu0 0.0
        %2923 = vmatpush1.msra.mxu0 0.0
        %2924 = vmatprep.subr.mxu0 0.0
        %2925 = vmatpush1.msra.mxu0 0.0
        %2926 = vmatprep.subr.mxu0 0.0
        %2927 = vmatpush1.msra.mxu0 0.0
        %2928 = vmatprep.subr.mxu0 0.0
        %2929 = vmatpush1.msra.mxu0 0.0
        %2930 = vmatprep.subr.mxu0 0.0
        %2931 = vmatpush1.msra.mxu0 0.0
        %2932 = vmatprep.subr.mxu0 0.0
        %2933 = vmatpush1.msra.mxu0 0.0
        %2934 = vmatprep.subr.mxu0 0.0
        %2935 = vmatpush1.msra.mxu0 0.0
        %2936 = vmatprep.subr.mxu0 0.0
        %2937 = vmatpush1.msra.mxu0 0.0
        %2938 = vmatprep.subr.mxu0 0.0
        %2939 = vmatpush1.msra.mxu0 0.0
        %2940 = vmatprep.subr.mxu0 0.0
        %2941 = vmatpush1.msra.mxu0 0.0
        %2942 = vmatprep.subr.mxu0 0.0
        %2943 = vmatpush1.msra.mxu0 0.0
        %2944 = vmatprep.subr.mxu0 0.0
        %2945 = vmatpush1.msra.mxu0 0.0
        %2946 = vmatprep.subr.mxu0 0.0
        %2947 = vmatpush1.msra.mxu0 0.0
        %2948 = vmatprep.subr.mxu0 0.0
        %2949 = vmatpush1.msra.mxu0 0.0
        %2950 = vmatprep.subr.mxu0 0.0
        %2951 = vmatpush1.msra.mxu0 0.0
        %2952 = vmatprep.subr.mxu0 0.0
        %2953 = vmatpush1.msra.mxu0 0.0
        %2954 = vmatprep.subr.mxu0 0.0
        %2955 = vmatpush1.msra.mxu0 0.0
        %2956 = vmatprep.subr.mxu0 0.0
        %2957 = vmatpush1.msra.mxu0 0.0
        %2958 = vmatprep.subr.mxu0 0.0
        %2959 = vmatpush1.msra.mxu0 0.0
        %2960 = vmatprep.subr.mxu0 0.0
        %2961 = vmatpush1.msra.mxu0 0.0
        %2962 = vmatprep.subr.mxu0 0.0
        %2963 = vmatpush1.msra.mxu0 0.0
        %2964 = vmatprep.subr.mxu0 0.0
        %2965 = vmatpush1.msra.mxu0 0.0
        %2966 = vmatprep.mubr.f32.mxu0 0.0
        %2967 = vmatmul.mubr.f32.gmra.mrb[0].mxu0 %v1294
        %v2968 = vpop.f32.mrb[0].mxu0
        %v2969 = vadd.f32 0.0, %v2968
        %v2970 = vpop.f32.mrb[0].mxu0
        %2971 = vmatprep.mubr.f32.mxu0 0.0
        %2972 = vmatmul.mubr.f32.gmra.mrb[0].mxu0 %v1297
        %v2973 = vpop.f32.mrb[0].mxu0
        %v2974 = vadd.f32 0.0, %v2973
        %v2975 = vpop.f32.mrb[0].mxu0
        %2976 = vmatprep.mubr.f32.mxu0 0.0
        %2977 = vmatmul.mubr.f32.gmra.mrb[0].mxu0 %v1300
        %v2978 = vpop.f32.mrb[0].mxu0
        %v2979 = vadd.f32 0.0, %v2978
        %v2980 = vpop.f32.mrb[0].mxu0
        %2981 = vmatprep.mubr.f32.mxu0 0.0
        %2982 = vmatmul.mubr.f32.gmra.mrb[0].mxu0 %v1303
        %v2983 = vpop.f32.mrb[0].mxu0
        %v2984 = vadd.f32 0.0, %v2983
        %v2985 = vpop.f32.mrb[0].mxu0
        %2986 = vmatprep.mubr.f32.mxu0 0.0
        %2987 = vmatmul.mubr.f32.gmra.mrb[0].mxu0 %v1306
        %v2988 = vpop.f32.mrb[0].mxu0
        %v2989 = vadd.f32 0.0, %v2988
        %v2990 = vpop.f32.mrb[0].mxu0
        %2991 = vmatprep.mubr.f32.mxu0 0.0
        %2992 = vmatmul.mubr.f32.gmra.mrb[0].mxu0 %v1309
        %v2993 = vpop.f32.mrb[0].mxu0
        %v2994 = vadd.f32 0.0, %v2993
        %v2995 = vpop.f32.mrb[0].mxu0
        %2996 = vdwg.mxu0
        %2997 = vmatprep.subr.mxu0 0.0
        %2998 = vmatpush1.msra.mxu0 %v1259
        %2999 = vmatprep.subr.mxu0 0.0
        %3000 = vmatpush1.msra.mxu0 %v1264
        %3001 = vmatprep.subr.mxu0 0.0
        %3002 = vmatpush1.msra.mxu0 %v1269
        %3003 = vmatprep.subr.mxu0 0.0
        %3004 = vmatpush1.msra.mxu0 %v1274
        %3005 = vmatprep.subr.mxu0 0.0
        %3006 = vmatpush1.msra.mxu0 %v1279
        %3007 = vmatprep.subr.mxu0 0.0
        %3008 = vmatpush1.msra.mxu0 %v1284
        %3009 = vmatprep.subr.mxu0 0.0
        %3010 = vmatpush1.msra.mxu0 0.0
        %3011 = vmatprep.subr.mxu0 0.0
        %3012 = vmatpush1.msra.mxu0 0.0
        %3013 = vmatprep.subr.mxu0 0.0
        %3014 = vmatpush1.msra.mxu0 0.0
        %3015 = vmatprep.subr.mxu0 0.0
        %3016 = vmatpush1.msra.mxu0 0.0
        %3017 = vmatprep.subr.mxu0 0.0
        %3018 = vmatpush1.msra.mxu0 0.0
        %3019 = vmatprep.subr.mxu0 0.0
        %3020 = vmatpush1.msra.mxu0 0.0
        %3021 = vmatprep.subr.mxu0 0.0
        %3022 = vmatpush1.msra.mxu0 0.0
        %3023 = vmatprep.subr.mxu0 0.0
        %3024 = vmatpush1.msra.mxu0 0.0
        %3025 = vmatprep.subr.mxu0 0.0
        %3026 = vmatpush1.msra.mxu0 0.0
        %3027 = vmatprep.subr.mxu0 0.0
        %3028 = vmatpush1.msra.mxu0 0.0
        %3029 = vmatprep.subr.mxu0 0.0
        %3030 = vmatpush1.msra.mxu0 0.0
        %3031 = vmatprep.subr.mxu0 0.0
        %3032 = vmatpush1.msra.mxu0 0.0
        %3033 = vmatprep.subr.mxu0 0.0
        %3034 = vmatpush1.msra.mxu0 0.0
        %3035 = vmatprep.subr.mxu0 0.0
        %3036 = vmatpush1.msra.mxu0 0.0
        %3037 = vmatprep.subr.mxu0 0.0
        %3038 = vmatpush1.msra.mxu0 0.0
        %3039 = vmatprep.subr.mxu0 0.0
        %3040 = vmatpush1.msra.mxu0 0.0
        %3041 = vmatprep.subr.mxu0 0.0
        %3042 = vmatpush1.msra.mxu0 0.0
        %3043 = vmatprep.subr.mxu0 0.0
        %3044 = vmatpush1.msra.mxu0 0.0
        %3045 = vmatprep.subr.mxu0 0.0
        %3046 = vmatpush1.msra.mxu0 0.0
        %3047 = vmatprep.subr.mxu0 0.0
        %3048 = vmatpush1.msra.mxu0 0.0
        %3049 = vmatprep.subr.mxu0 0.0
        %3050 = vmatpush1.msra.mxu0 0.0
        %3051 = vmatprep.subr.mxu0 0.0
        %3052 = vmatpush1.msra.mxu0 0.0
        %3053 = vmatprep.subr.mxu0 0.0
        %3054 = vmatpush1.msra.mxu0 0.0
        %3055 = vmatprep.subr.mxu0 0.0
        %3056 = vmatpush1.msra.mxu0 0.0
        %3057 = vmatprep.subr.mxu0 0.0
        %3058 = vmatpush1.msra.mxu0 0.0
        %3059 = vmatprep.subr.mxu0 0.0
        %3060 = vmatpush1.msra.mxu0 0.0
        %3061 = vmatprep.mubr.f32.mxu0 0.0
        %3062 = vmatmul.mubr.f32.gmra.mrb[0].mxu0 %v1294
        %v3063 = vpop.f32.mrb[0].mxu0
        %v3064 = vadd.f32 0.0, %v3063
        %v3065 = vpop.f32.mrb[0].mxu0
        %3066 = vmatprep.mubr.f32.mxu0 0.0
        %3067 = vmatmul.mubr.f32.gmra.mrb[0].mxu0 %v1297
        %v3068 = vpop.f32.mrb[0].mxu0
        %v3069 = vadd.f32 0.0, %v3068
        %v3070 = vpop.f32.mrb[0].mxu0
        %3071 = vmatprep.mubr.f32.mxu0 0.0
        %3072 = vmatmul.mubr.f32.gmra.mrb[0].mxu0 %v1300
        %v3073 = vpop.f32.mrb[0].mxu0
        %v3074 = vadd.f32 0.0, %v3073
        %v3075 = vpop.f32.mrb[0].mxu0
        %3076 = vmatprep.mubr.f32.mxu0 0.0
        %3077 = vmatmul.mubr.f32.gmra.mrb[0].mxu0 %v1303
        %v3078 = vpop.f32.mrb[0].mxu0
        %v3079 = vadd.f32 0.0, %v3078
        %v3080 = vpop.f32.mrb[0].mxu0
        %3081 = vmatprep.mubr.f32.mxu0 0.0
        %3082 = vmatmul.mubr.f32.gmra.mrb[0].mxu0 %v1306
        %v3083 = vpop.f32.mrb[0].mxu0
        %v3084 = vadd.f32 0.0, %v3083
        %v3085 = vpop.f32.mrb[0].mxu0
        %3086 = vmatprep.mubr.f32.mxu0 0.0
        %3087 = vmatmul.mubr.f32.gmra.mrb[0].mxu0 %v1309
        %v3088 = vpop.f32.mrb[0].mxu0
        %v3089 = vadd.f32 0.0, %v3088
        %v3090 = vpop.f32.mrb[0].mxu0
        %3091 = vdwg.mxu0
        %v3092 = vmul.f32 %v2684, %v2684
        %v3093 = vmul.f32 %v2689, %v2689
        %v3094 = vmul.f32 %v2694, %v2694
        %v3095 = vmul.f32 %v2699, %v2699
        %v3096 = vmul.f32 %v2704, %v2704
        %v3097 = vmul.f32 %v2709, %v2709
        %v3098 = vmul.f32 %v2779, %v2779
        %v3099 = vmul.f32 %v2784, %v2784
        %v3100 = vmul.f32 %v2789, %v2789
        %v3101 = vmul.f32 %v2794, %v2794
        %v3102 = vmul.f32 %v2799, %v2799
        %v3103 = vmul.f32 %v2804, %v2804
        %v3104 = vmul.f32 %v2684, %v2779
        %v3105 = vmul.f32 %v2689, %v2784
        %v3106 = vmul.f32 %v2694, %v2789
        %v3107 = vmul.f32 %v2699, %v2794
        %v3108 = vmul.f32 %v2704, %v2799
        %v3109 = vmul.f32 %v2709, %v2804
        %v3110 = vsub.f32 %v2874, %v3092
        %v3111 = vsub.f32 %v2879, %v3093
        %v3112 = vsub.f32 %v2884, %v3094
        %v3113 = vsub.f32 %v2889, %v3095
        %v3114 = vsub.f32 %v2894, %v3096
        %v3115 = vsub.f32 %v2899, %v3097
        %v3116 = vsub.f32 %v2969, %v3098
        %v3117 = vsub.f32 %v2974, %v3099
        %v3118 = vsub.f32 %v2979, %v3100
        %v3119 = vsub.f32 %v2984, %v3101
        %v3120 = vsub.f32 %v2989, %v3102
        %v3121 = vsub.f32 %v2994, %v3103
        %v3122 = vsub.f32 %v3064, %v3104
        %v3123 = vsub.f32 %v3069, %v3105
        %v3124 = vsub.f32 %v3074, %v3106
        %v3125 = vsub.f32 %v3079, %v3107
        %v3126 = vsub.f32 %v3084, %v3108
        %v3127 = vsub.f32 %v3089, %v3109
        %v3128 = vmul.f32 %v3122, 2.0
        %v3129 = vmul.f32 %v3123, 2.0
        %v3130 = vmul.f32 %v3124, 2.0
        %v3131 = vmul.f32 %v3125, 2.0
        %v3132 = vmul.f32 %v3126, 2.0
        %v3133 = vmul.f32 %v3127, 2.0
        %v3134 = vadd.f32 %v3128, 0.0009
        %v3135 = vadd.f32 %v3129, 0.0009
        %v3136 = vadd.f32 %v3130, 0.0009
        %v3137 = vadd.f32 %v3131, 0.0009
        %v3138 = vadd.f32 %v3132, 0.0009
        %v3139 = vadd.f32 %v3133, 0.0009
        %v3140 = vadd.f32 %v3110, %v3116
        %v3141 = vadd.f32 %v3111, %v3117
        %v3142 = vadd.f32 %v3112, %v3118
        %v3143 = vadd.f32 %v3113, %v3119
        %v3144 = vadd.f32 %v3114, %v3120
        %v3145 = vadd.f32 %v3115, %v3121
        %v3146 = vadd.f32 %v3140, 0.0009
        %v3147 = vadd.f32 %v3141, 0.0009
        %v3148 = vadd.f32 %v3142, 0.0009
        %v3149 = vadd.f32 %v3143, 0.0009
        %v3150 = vadd.f32 %v3144, 0.0009
        %v3151 = vadd.f32 %v3145, 0.0009
        %v3152 = vrcp.pop %v3146
        %v3153 = vrcp.pop %v3147
        %v3154 = vrcp.pop %v3148
        %v3155 = vrcp.pop %v3149
        %v3156 = vrcp.pop %v3150
        %v3157 = vrcp.pop %v3151
        %v3158 = vmul.f32 %v3134, %v3152
        %v3159 = vmul.f32 %v3135, %v3153
        %v3160 = vmul.f32 %v3136, %v3154
        %v3161 = vmul.f32 %v3137, %v3155
        %v3162 = vmul.f32 %v3138, %v3156
        %v3163 = vmul.f32 %v3139, %v3157
        %v3164 = vmul.f32 %v3104, 2.0
        %v3165 = vmul.f32 %v3105, 2.0
        %v3166 = vmul.f32 %v3106, 2.0
        %v3167 = vmul.f32 %v3107, 2.0
        %v3168 = vmul.f32 %v3108, 2.0
        %v3169 = vmul.f32 %v3109, 2.0
        %v3170 = vadd.f32 %v3164, 0.0001
        %v3171 = vadd.f32 %v3165, 0.0001
        %v3172 = vadd.f32 %v3166, 0.0001
        %v3173 = vadd.f32 %v3167, 0.0001
        %v3174 = vadd.f32 %v3168, 0.0001
        %v3175 = vadd.f32 %v3169, 0.0001
        %v3176 = vadd.f32 %v3092, %v3098
        %v3177 = vadd.f32 %v3093, %v3099
        %v3178 = vadd.f32 %v3094, %v3100
        %v3179 = vadd.f32 %v3095, %v3101
        %v3180 = vadd.f32 %v3096, %v3102
        %v3181 = vadd.f32 %v3097, %v3103
        %v3182 = vadd.f32 %v3176, 0.0001
        %v3183 = vadd.f32 %v3177, 0.0001
        %v3184 = vadd.f32 %v3178, 0.0001
        %v3185 = vadd.f32 %v3179, 0.0001
        %v3186 = vadd.f32 %v3180, 0.0001
        %v3187 = vadd.f32 %v3181, 0.0001
        %v3188 = vrcp.pop %v3182
        %v3189 = vrcp.pop %v3183
        %v3190 = vrcp.pop %v3184
        %v3191 = vrcp.pop %v3185
        %v3192 = vrcp.pop %v3186
        %v3193 = vrcp.pop %v3187
        %v3194 = vmul.f32 %v3170, %v3188
        %v3195 = vmul.f32 %v3171, %v3189
        %v3196 = vmul.f32 %v3172, %v3190
        %v3197 = vmul.f32 %v3173, %v3191
        %v3198 = vmul.f32 %v3174, %v3192
        %v3199 = vmul.f32 %v3175, %v3193
        %v3200 = vmul.f32 %v3194, %v3158
        %v3201 = vmul.f32 %v3195, %v3159
        %v3202 = vmul.f32 %v3196, %v3160
        %v3203 = vmul.f32 %v3197, %v3161
        %v3204 = vmul.f32 %v3198, %v3162
        %v3205 = vmul.f32 %v3199, %v3163
        %v3206 = vsel %vm1900, %v3200, 0.0
        %3207 = vadd.xlane.f32.xlu0 %v3206
        %v3208 = vpop.xlane.xlu0 %3207
        %v3209 = vsel %vm1900, %v3201, 0.0
        %3210 = vadd.xlane.f32.xlu0 %v3209
        %v3211 = vpop.xlane.xlu0 %3210
        %v3212 = vsel %vm1900, %v3202, 0.0
        %3213 = vadd.xlane.f32.xlu0 %v3212
        %v3214 = vpop.xlane.xlu0 %3213
        %v3215 = vsel %vm1900, %v3203, 0.0
        %3216 = vadd.xlane.f32.xlu0 %v3215
        %v3217 = vpop.xlane.xlu0 %3216
        %v3218 = vsel %vm1900, %v3204, 0.0
        %3219 = vadd.xlane.f32.xlu0 %v3218
        %v3220 = vpop.xlane.xlu0 %3219
        %v3221 = vsel %vm1916, %v3205, 0.0
        %3222 = vadd.xlane.f32.xlu0 %v3221
        %v3223 = vpop.xlane.xlu0 %3222
        %v3224 = vadd.f32 %v3208, %v3211
        %v3225 = vadd.f32 %v3224, %v3214
        %v3226 = vadd.f32 %v3225, %v3217
        %v3227 = vadd.f32 %v3226, %v3220
        %v3228 = vsel %vm1924, %v3223, 0.0
        %v3229 = vadd.f32 %v3227, %v3228
        %v3230 = vrot.slane %v3229, 4
        %v3231 = vadd.f32 %v3229, %v3230
        %v3232 = vrot.slane %v3231, 2
        %v3233 = vadd.f32 %v3231, %v3232
        %v3234 = vrot.slane %v3233, 1
        %v3235 = vadd.f32 %v3233, %v3234
        %v3236 = vsel %vm1900, %v3158, 0.0
        %3237 = vadd.xlane.f32.xlu0 %v3236
        %v3238 = vpop.xlane.xlu0 %3237
        %v3239 = vsel %vm1900, %v3159, 0.0
        %3240 = vadd.xlane.f32.xlu0 %v3239
        %v3241 = vpop.xlane.xlu0 %3240
        %v3242 = vsel %vm1900, %v3160, 0.0
        %3243 = vadd.xlane.f32.xlu0 %v3242
        %v3244 = vpop.xlane.xlu0 %3243
        %v3245 = vsel %vm1900, %v3161, 0.0
        %3246 = vadd.xlane.f32.xlu0 %v3245
        %v3247 = vpop.xlane.xlu0 %3246
        %v3248 = vsel %vm1900, %v3162, 0.0
        %3249 = vadd.xlane.f32.xlu0 %v3248
        %v3250 = vpop.xlane.xlu0 %3249
        %v3251 = vsel %vm1916, %v3163, 0.0
        %3252 = vadd.xlane.f32.xlu0 %v3251
        %v3253 = vpop.xlane.xlu0 %3252
        %v3254 = vadd.f32 %v3238, %v3241
        %v3255 = vadd.f32 %v3254, %v3244
        %v3256 = vadd.f32 %v3255, %v3247
        %v3257 = vadd.f32 %v3256, %v3250
        %v3258 = vsel %vm1924, %v3253, 0.0
        %v3259 = vadd.f32 %v3257, %v3258
        %v3260 = vrot.slane %v3259, 4
        %v3261 = vadd.f32 %v3259, %v3260
        %v3262 = vrot.slane %v3261, 2
        %v3263 = vadd.f32 %v3261, %v3262
        %v3264 = vrot.slane %v3263, 1
        %v3265 = vadd.f32 %v3263, %v3264
        %v3266 = vsel %vm1963, %v3235, %v3265
        %v3267 = vmul.f32 %v3266, 0.0004725898
        %v3269 = vrot.slane %v2616, 7
        %v3272 = vrot.slane %v3267, 6
        %vm3274 = vcmask 1040384
        %v3275 = vsel %vm3274, %v1965, %v3269
        %vm3276 = vcmask 1041408
        %v3277 = vsel %vm3276, %v3275, %v3272
        %vm3278 = vcmask 10240
        %3279 = vst.msk [vmem:[%s402] sm:$0x7] %vm3278, %v3277
        %v3280 = vld [vmem:[%s4] sm:$0xff]
        %v3281 = vld [vmem:[%s4 + $0x8] sm:$0xff]
        %v3282 = vld [vmem:[%s4 + $0x10] sm:$0xff]
        %v3283 = vld [vmem:[%s4 + $0x18] sm:$0xff]
        %v3284 = vld [vmem:[%s4 + $0x20] sm:$0xff]
        %v3285 = vld [vmem:[%s4 + $0x28] sm:$0xff]
        %v3286 = vld [vmem:[%s5] sm:$0xff]
        %v3287 = vld [vmem:[%s5 + $0x8] sm:$0xff]
        %v3288 = vld [vmem:[%s5 + $0x10] sm:$0xff]
        %3289 = vmatprep.subr.mxu0 0.0
        %3290 = vmatpush1.msra.mxu0 %v3280
        %3291 = vmatprep.subr.mxu0 0.0
        %3292 = vmatpush1.msra.mxu0 %v3281
        %3293 = vmatprep.subr.mxu0 0.0
        %3294 = vmatpush1.msra.mxu0 %v3282
        %3295 = vmatprep.subr.mxu0 0.0
        %3296 = vmatpush1.msra.mxu0 %v3283
        %3297 = vmatprep.subr.mxu0 0.0
        %3298 = vmatpush1.msra.mxu0 %v3284
        %3299 = vmatprep.subr.mxu0 0.0
        %3300 = vmatpush1.msra.mxu0 %v3285
        %3301 = vmatprep.subr.mxu0 0.0
        %3302 = vmatpush1.msra.mxu0 0.0
        %3303 = vmatprep.subr.mxu0 0.0
        %3304 = vmatpush1.msra.mxu0 0.0
        %3305 = vmatprep.subr.mxu0 0.0
        %3306 = vmatpush1.msra.mxu0 0.0
        %3307 = vmatprep.subr.mxu0 0.0
        %3308 = vmatpush1.msra.mxu0 0.0
        %3309 = vmatprep.subr.mxu0 0.0
        %3310 = vmatpush1.msra.mxu0 0.0
        %3311 = vmatprep.subr.mxu0 0.0
        %3312 = vmatpush1.msra.mxu0 0.0
        %3313 = vmatprep.subr.mxu0 0.0
        %3314 = vmatpush1.msra.mxu0 0.0
        %3315 = vmatprep.subr.mxu0 0.0
        %3316 = vmatpush1.msra.mxu0 0.0
        %3317 = vmatprep.subr.mxu0 0.0
        %3318 = vmatpush1.msra.mxu0 0.0
        %3319 = vmatprep.subr.mxu0 0.0
        %3320 = vmatpush1.msra.mxu0 0.0
        %3321 = vmatprep.subr.mxu0 0.0
        %3322 = vmatpush1.msra.mxu0 0.0
        %3323 = vmatprep.subr.mxu0 0.0
        %3324 = vmatpush1.msra.mxu0 0.0
        %3325 = vmatprep.subr.mxu0 0.0
        %3326 = vmatpush1.msra.mxu0 0.0
        %3327 = vmatprep.subr.mxu0 0.0
        %3328 = vmatpush1.msra.mxu0 0.0
        %3329 = vmatprep.subr.mxu0 0.0
        %3330 = vmatpush1.msra.mxu0 0.0
        %3331 = vmatprep.subr.mxu0 0.0
        %3332 = vmatpush1.msra.mxu0 0.0
        %3333 = vmatprep.subr.mxu0 0.0
        %3334 = vmatpush1.msra.mxu0 0.0
        %3335 = vmatprep.subr.mxu0 0.0
        %3336 = vmatpush1.msra.mxu0 0.0
        %3337 = vmatprep.subr.mxu0 0.0
        %3338 = vmatpush1.msra.mxu0 0.0
        %3339 = vmatprep.subr.mxu0 0.0
        %3340 = vmatpush1.msra.mxu0 0.0
        %3341 = vmatprep.subr.mxu0 0.0
        %3342 = vmatpush1.msra.mxu0 0.0
        %3343 = vmatprep.subr.mxu0 0.0
        %3344 = vmatpush1.msra.mxu0 0.0
        %3345 = vmatprep.subr.mxu0 0.0
        %3346 = vmatpush1.msra.mxu0 0.0
        %3347 = vmatprep.subr.mxu0 0.0
        %3348 = vmatpush1.msra.mxu0 0.0
        %3349 = vmatprep.subr.mxu0 0.0
        %3350 = vmatpush1.msra.mxu0 0.0
        %3351 = vmatprep.subr.mxu0 0.0
        %3352 = vmatpush1.msra.mxu0 0.0
        %3353 = vmatprep.mubr.f32.mxu0 0.0
        %3354 = vmatmul.mubr.f32.gmra.mrb[0].mxu0 %v503
        %v3355 = vpop.f32.mrb[0].mxu0
        %v3356 = vadd.f32 0.0, %v3355
        %v3357 = vpop.f32.mrb[0].mxu0
        %3358 = vmatprep.mubr.f32.mxu0 0.0
        %3359 = vmatmul.mubr.f32.gmra.mrb[0].mxu0 %v506
        %v3360 = vpop.f32.mrb[0].mxu0
        %v3361 = vadd.f32 0.0, %v3360
        %v3362 = vpop.f32.mrb[0].mxu0
        %3363 = vmatprep.mubr.f32.mxu0 0.0
        %3364 = vmatmul.mubr.f32.gmra.mrb[0].mxu0 %v509
        %v3365 = vpop.f32.mrb[0].mxu0
        %v3366 = vadd.f32 0.0, %v3365
        %v3367 = vpop.f32.mrb[0].mxu0
        %3368 = vmatprep.mubr.f32.mxu0 0.0
        %3369 = vmatmul.mubr.f32.gmra.mrb[0].mxu0 %v512
        %v3370 = vpop.f32.mrb[0].mxu0
        %v3371 = vadd.f32 0.0, %v3370
        %v3372 = vpop.f32.mrb[0].mxu0
        %3373 = vmatprep.mubr.f32.mxu0 0.0
        %3374 = vmatmul.mubr.f32.gmra.mrb[0].mxu0 %v515
        %v3375 = vpop.f32.mrb[0].mxu0
        %v3376 = vadd.f32 0.0, %v3375
        %v3377 = vpop.f32.mrb[0].mxu0
        %3378 = vmatprep.mubr.f32.mxu0 0.0
        %3379 = vmatmul.mubr.f32.gmra.mrb[0].mxu0 %v518
        %v3380 = vpop.f32.mrb[0].mxu0
        %v3381 = vadd.f32 0.0, %v3380
        %v3382 = vpop.f32.mrb[0].mxu0
        %3383 = vmatprep.mubr.f32.mxu0 0.0
        %3384 = vmatmul.mubr.f32.gmra.mrb[0].mxu0 %v521
        %v3385 = vpop.f32.mrb[0].mxu0
        %v3386 = vadd.f32 0.0, %v3385
        %v3387 = vpop.f32.mrb[0].mxu0
        %3388 = vmatprep.mubr.f32.mxu0 0.0
        %3389 = vmatmul.mubr.f32.gmra.mrb[0].mxu0 %v524
        %v3390 = vpop.f32.mrb[0].mxu0
        %v3391 = vadd.f32 0.0, %v3390
        %v3392 = vpop.f32.mrb[0].mxu0
        %3393 = vmatprep.mubr.f32.mxu0 0.0
        %3394 = vmatmul.mubr.f32.gmra.mrb[0].mxu0 %v527
        %v3395 = vpop.f32.mrb[0].mxu0
        %v3396 = vadd.f32 0.0, %v3395
        %v3397 = vpop.f32.mrb[0].mxu0
        %3398 = vmatprep.mubr.f32.mxu0 0.0
        %3399 = vmatmul.mubr.f32.gmra.mrb[0].mxu0 %v530
        %v3400 = vpop.f32.mrb[0].mxu0
        %v3401 = vadd.f32 0.0, %v3400
        %v3402 = vpop.f32.mrb[0].mxu0
        %3403 = vmatprep.mubr.f32.mxu0 0.0
        %3404 = vmatmul.mubr.f32.gmra.mrb[0].mxu0 %v533
        %v3405 = vpop.f32.mrb[0].mxu0
        %v3406 = vadd.f32 0.0, %v3405
        %v3407 = vpop.f32.mrb[0].mxu0
        %3408 = vmatprep.mubr.f32.mxu0 0.0
        %3409 = vmatmul.mubr.f32.gmra.mrb[0].mxu0 %v536
        %v3410 = vpop.f32.mrb[0].mxu0
        %v3411 = vadd.f32 0.0, %v3410
        %v3412 = vpop.f32.mrb[0].mxu0
        %3413 = vmatprep.mubr.f32.mxu0 0.0
        %3414 = vmatmul.mubr.f32.gmra.mrb[0].mxu0 %v539
        %v3415 = vpop.f32.mrb[0].mxu0
        %v3416 = vadd.f32 0.0, %v3415
        %v3417 = vpop.f32.mrb[0].mxu0
        %3418 = vmatprep.mubr.f32.mxu0 0.0
        %3419 = vmatmul.mubr.f32.gmra.mrb[0].mxu0 %v542
        %v3420 = vpop.f32.mrb[0].mxu0
        %v3421 = vadd.f32 0.0, %v3420
        %v3422 = vpop.f32.mrb[0].mxu0
        %3423 = vmatprep.mubr.f32.mxu0 0.0
        %3424 = vmatmul.mubr.f32.gmra.mrb[0].mxu0 %v545
        %v3425 = vpop.f32.mrb[0].mxu0
        %v3426 = vadd.f32 0.0, %v3425
        %v3427 = vpop.f32.mrb[0].mxu0
        %3428 = vmatprep.mubr.f32.mxu0 0.0
        %3429 = vmatmul.mubr.f32.gmra.mrb[0].mxu0 %v548
        %v3430 = vpop.f32.mrb[0].mxu0
        %v3431 = vadd.f32 0.0, %v3430
        %v3432 = vpop.f32.mrb[0].mxu0
        %3433 = vmatprep.mubr.f32.mxu0 0.0
        %3434 = vmatmul.mubr.f32.gmra.mrb[0].mxu0 %v551
        %v3435 = vpop.f32.mrb[0].mxu0
        %v3436 = vadd.f32 0.0, %v3435
        %v3437 = vpop.f32.mrb[0].mxu0
        %3438 = vmatprep.mubr.f32.mxu0 0.0
        %3439 = vmatmul.mubr.f32.gmra.mrb[0].mxu0 %v554
        %v3440 = vpop.f32.mrb[0].mxu0
        %v3441 = vadd.f32 0.0, %v3440
        %v3442 = vpop.f32.mrb[0].mxu0
        %3443 = vmatprep.mubr.f32.mxu0 0.0
        %3444 = vmatmul.mubr.f32.gmra.mrb[0].mxu0 %v557
        %v3445 = vpop.f32.mrb[0].mxu0
        %v3446 = vadd.f32 0.0, %v3445
        %v3447 = vpop.f32.mrb[0].mxu0
        %3448 = vmatprep.mubr.f32.mxu0 0.0
        %3449 = vmatmul.mubr.f32.gmra.mrb[0].mxu0 %v560
        %v3450 = vpop.f32.mrb[0].mxu0
        %v3451 = vadd.f32 0.0, %v3450
        %v3452 = vpop.f32.mrb[0].mxu0
        %3453 = vmatprep.mubr.f32.mxu0 0.0
        %3454 = vmatmul.mubr.f32.gmra.mrb[0].mxu0 %v563
        %v3455 = vpop.f32.mrb[0].mxu0
        %v3456 = vadd.f32 0.0, %v3455
        %v3457 = vpop.f32.mrb[0].mxu0
        %3458 = vmatprep.mubr.f32.mxu0 0.0
        %3459 = vmatmul.mubr.f32.gmra.mrb[0].mxu0 %v566
        %v3460 = vpop.f32.mrb[0].mxu0
        %v3461 = vadd.f32 0.0, %v3460
        %v3462 = vpop.f32.mrb[0].mxu0
        %3463 = vmatprep.mubr.f32.mxu0 0.0
        %3464 = vmatmul.mubr.f32.gmra.mrb[0].mxu0 %v569
        %v3465 = vpop.f32.mrb[0].mxu0
        %v3466 = vadd.f32 0.0, %v3465
        %v3467 = vpop.f32.mrb[0].mxu0
        %3468 = vmatprep.mubr.f32.mxu0 0.0
        %3469 = vmatmul.mubr.f32.gmra.mrb[0].mxu0 %v572
        %v3470 = vpop.f32.mrb[0].mxu0
        %v3471 = vadd.f32 0.0, %v3470
        %v3472 = vpop.f32.mrb[0].mxu0
        %3473 = vmatprep.mubr.f32.mxu0 0.0
        %3474 = vmatmul.mubr.f32.gmra.mrb[0].mxu0 %v575
        %v3475 = vpop.f32.mrb[0].mxu0
        %v3476 = vadd.f32 0.0, %v3475
        %v3477 = vpop.f32.mrb[0].mxu0
        %3478 = vmatprep.mubr.f32.mxu0 0.0
        %3479 = vmatmul.mubr.f32.gmra.mrb[0].mxu0 %v578
        %v3480 = vpop.f32.mrb[0].mxu0
        %v3481 = vadd.f32 0.0, %v3480
        %v3482 = vpop.f32.mrb[0].mxu0
        %3483 = vmatprep.mubr.f32.mxu0 0.0
        %3484 = vmatmul.mubr.f32.gmra.mrb[0].mxu0 %v581
        %v3485 = vpop.f32.mrb[0].mxu0
        %v3486 = vadd.f32 0.0, %v3485
        %v3487 = vpop.f32.mrb[0].mxu0
        %3488 = vmatprep.mubr.f32.mxu0 0.0
        %3489 = vmatmul.mubr.f32.gmra.mrb[0].mxu0 %v584
        %v3490 = vpop.f32.mrb[0].mxu0
        %v3491 = vadd.f32 0.0, %v3490
        %v3492 = vpop.f32.mrb[0].mxu0
        %3493 = vmatprep.mubr.f32.mxu0 0.0
        %3494 = vmatmul.mubr.f32.gmra.mrb[0].mxu0 %v587
        %v3495 = vpop.f32.mrb[0].mxu0
        %v3496 = vadd.f32 0.0, %v3495
        %v3497 = vpop.f32.mrb[0].mxu0
        %3498 = vmatprep.mubr.f32.mxu0 0.0
        %3499 = vmatmul.mubr.f32.gmra.mrb[0].mxu0 %v590
        %v3500 = vpop.f32.mrb[0].mxu0
        %v3501 = vadd.f32 0.0, %v3500
        %v3502 = vpop.f32.mrb[0].mxu0
        %3503 = vmatprep.mubr.f32.mxu0 0.0
        %3504 = vmatmul.mubr.f32.gmra.mrb[0].mxu0 %v593
        %v3505 = vpop.f32.mrb[0].mxu0
        %v3506 = vadd.f32 0.0, %v3505
        %v3507 = vpop.f32.mrb[0].mxu0
        %3508 = vmatprep.mubr.f32.mxu0 0.0
        %3509 = vmatmul.mubr.f32.gmra.mrb[0].mxu0 %v596
        %v3510 = vpop.f32.mrb[0].mxu0
        %v3511 = vadd.f32 0.0, %v3510
        %v3512 = vpop.f32.mrb[0].mxu0
        %3513 = vmatprep.mubr.f32.mxu0 0.0
        %3514 = vmatmul.mubr.f32.gmra.mrb[0].mxu0 %v599
        %v3515 = vpop.f32.mrb[0].mxu0
        %v3516 = vadd.f32 0.0, %v3515
        %v3517 = vpop.f32.mrb[0].mxu0
        %3518 = vmatprep.mubr.f32.mxu0 0.0
        %3519 = vmatmul.mubr.f32.gmra.mrb[0].mxu0 %v602
        %v3520 = vpop.f32.mrb[0].mxu0
        %v3521 = vadd.f32 0.0, %v3520
        %v3522 = vpop.f32.mrb[0].mxu0
        %3523 = vmatprep.mubr.f32.mxu0 0.0
        %3524 = vmatmul.mubr.f32.gmra.mrb[0].mxu0 %v605
        %v3525 = vpop.f32.mrb[0].mxu0
        %v3526 = vadd.f32 0.0, %v3525
        %v3527 = vpop.f32.mrb[0].mxu0
        %3528 = vmatprep.mubr.f32.mxu0 0.0
        %3529 = vmatmul.mubr.f32.gmra.mrb[0].mxu0 %v608
        %v3530 = vpop.f32.mrb[0].mxu0
        %v3531 = vadd.f32 0.0, %v3530
        %v3532 = vpop.f32.mrb[0].mxu0
        %3533 = vdwg.mxu0
        %v3535 = vsel %vm501, %v3286, 0
        %v3538 = vsel %vm501, %v3287, 0
        %v3541 = vsel %vm501, %v3288, 0
        %3543 = vmatprep.subr.mxu0 0.0
        %3544 = vmatpush1.msra.mxu0 %v3356
        %3545 = vmatprep.subr.mxu0 0.0
        %3546 = vmatpush1.msra.mxu0 %v3361
        %3547 = vmatprep.subr.mxu0 0.0
        %3548 = vmatpush1.msra.mxu0 %v3366
        %3549 = vmatprep.subr.mxu0 0.0
        %3550 = vmatpush1.msra.mxu0 %v3371
        %3551 = vmatprep.subr.mxu0 0.0
        %3552 = vmatpush1.msra.mxu0 %v3376
        %3553 = vmatprep.subr.mxu0 0.0
        %3554 = vmatpush1.msra.mxu0 %v3381
        %3555 = vmatprep.subr.mxu0 0.0
        %3556 = vmatpush1.msra.mxu0 0.0
        %3557 = vmatprep.subr.mxu0 0.0
        %3558 = vmatpush1.msra.mxu0 0.0
        %3559 = vmatprep.subr.mxu0 0.0
        %3560 = vmatpush1.msra.mxu0 0.0
        %3561 = vmatprep.subr.mxu0 0.0
        %3562 = vmatpush1.msra.mxu0 0.0
        %3563 = vmatprep.subr.mxu0 0.0
        %3564 = vmatpush1.msra.mxu0 0.0
        %3565 = vmatprep.subr.mxu0 0.0
        %3566 = vmatpush1.msra.mxu0 0.0
        %3567 = vmatprep.subr.mxu0 0.0
        %3568 = vmatpush1.msra.mxu0 0.0
        %3569 = vmatprep.subr.mxu0 0.0
        %3570 = vmatpush1.msra.mxu0 0.0
        %3571 = vmatprep.subr.mxu0 0.0
        %3572 = vmatpush1.msra.mxu0 0.0
        %3573 = vmatprep.subr.mxu0 0.0
        %3574 = vmatpush1.msra.mxu0 0.0
        %3575 = vmatprep.subr.mxu0 0.0
        %3576 = vmatpush1.msra.mxu0 0.0
        %3577 = vmatprep.subr.mxu0 0.0
        %3578 = vmatpush1.msra.mxu0 0.0
        %3579 = vmatprep.subr.mxu0 0.0
        %3580 = vmatpush1.msra.mxu0 0.0
        %3581 = vmatprep.subr.mxu0 0.0
        %3582 = vmatpush1.msra.mxu0 0.0
        %3583 = vmatprep.subr.mxu0 0.0
        %3584 = vmatpush1.msra.mxu0 0.0
        %3585 = vmatprep.subr.mxu0 0.0
        %3586 = vmatpush1.msra.mxu0 0.0
        %3587 = vmatprep.subr.mxu0 0.0
        %3588 = vmatpush1.msra.mxu0 0.0
        %3589 = vmatprep.subr.mxu0 0.0
        %3590 = vmatpush1.msra.mxu0 0.0
        %3591 = vmatprep.subr.mxu0 0.0
        %3592 = vmatpush1.msra.mxu0 0.0
        %3593 = vmatprep.subr.mxu0 0.0
        %3594 = vmatpush1.msra.mxu0 0.0
        %3595 = vmatprep.subr.mxu0 0.0
        %3596 = vmatpush1.msra.mxu0 0.0
        %3597 = vmatprep.subr.mxu0 0.0
        %3598 = vmatpush1.msra.mxu0 0.0
        %3599 = vmatprep.subr.mxu0 0.0
        %3600 = vmatpush1.msra.mxu0 0.0
        %3601 = vmatprep.subr.mxu0 0.0
        %3602 = vmatpush1.msra.mxu0 0.0
        %3603 = vmatprep.subr.mxu0 0.0
        %3604 = vmatpush1.msra.mxu0 0.0
        %3605 = vmatprep.subr.mxu0 0.0
        %3606 = vmatpush1.msra.mxu0 0.0
        %3607 = vmatprep.mubr.f32.mxu0 0.0
        %3608 = vmatmul.mubr.f32.gmra.mrb[0].mxu0 %v3535
        %v3609 = vpop.f32.mrb[0].mxu0
        %v3610 = vadd.f32 0.0, %v3609
        %v3611 = vpop.f32.mrb[0].mxu0
        %3612 = vmatprep.mubr.f32.mxu0 0.0
        %3613 = vmatmul.mubr.f32.gmra.mrb[0].mxu0 %v3538
        %v3614 = vpop.f32.mrb[0].mxu0
        %v3615 = vadd.f32 0.0, %v3614
        %v3616 = vpop.f32.mrb[0].mxu0
        %3617 = vmatprep.mubr.f32.mxu0 0.0
        %3618 = vmatmul.mubr.f32.gmra.mrb[0].mxu0 %v3541
        %v3619 = vpop.f32.mrb[0].mxu0
        %v3620 = vadd.f32 0.0, %v3619
        %v3621 = vpop.f32.mrb[0].mxu0
        %3622 = vdwg.mxu0
        %v3623 = vmul.f32 %v3610, 0.25
        %v3624 = vmul.f32 %v3615, 0.25
        %v3625 = vmul.f32 %v3620, 0.25
        %vm3626 = vcmask 195584
        %3627 = vst.msk [vmem:[%s389] sm:$0xff] %vm3626, %v3623
        %3628 = vst.msk [vmem:[%s389 + $0x8] sm:$0xff] %vm3626, %v3624
        %3629 = vst.msk [vmem:[%s389 + $0x10] sm:$0xff] %vm3626, %v3625
        %3630 = vmatprep.subr.mxu0 0.0
        %3631 = vmatpush1.msra.mxu0 %v3446
        %3632 = vmatprep.subr.mxu0 0.0
        %3633 = vmatpush1.msra.mxu0 %v3451
        %3634 = vmatprep.subr.mxu0 0.0
        %3635 = vmatpush1.msra.mxu0 %v3456
        %3636 = vmatprep.subr.mxu0 0.0
        %3637 = vmatpush1.msra.mxu0 %v3461
        %3638 = vmatprep.subr.mxu0 0.0
        %3639 = vmatpush1.msra.mxu0 %v3466
        %3640 = vmatprep.subr.mxu0 0.0
        %3641 = vmatpush1.msra.mxu0 %v3471
        %3642 = vmatprep.subr.mxu0 0.0
        %3643 = vmatpush1.msra.mxu0 0.0
        %3644 = vmatprep.subr.mxu0 0.0
        %3645 = vmatpush1.msra.mxu0 0.0
        %3646 = vmatprep.subr.mxu0 0.0
        %3647 = vmatpush1.msra.mxu0 0.0
        %3648 = vmatprep.subr.mxu0 0.0
        %3649 = vmatpush1.msra.mxu0 0.0
        %3650 = vmatprep.subr.mxu0 0.0
        %3651 = vmatpush1.msra.mxu0 0.0
        %3652 = vmatprep.subr.mxu0 0.0
        %3653 = vmatpush1.msra.mxu0 0.0
        %3654 = vmatprep.subr.mxu0 0.0
        %3655 = vmatpush1.msra.mxu0 0.0
        %3656 = vmatprep.subr.mxu0 0.0
        %3657 = vmatpush1.msra.mxu0 0.0
        %3658 = vmatprep.subr.mxu0 0.0
        %3659 = vmatpush1.msra.mxu0 0.0
        %3660 = vmatprep.subr.mxu0 0.0
        %3661 = vmatpush1.msra.mxu0 0.0
        %3662 = vmatprep.subr.mxu0 0.0
        %3663 = vmatpush1.msra.mxu0 0.0
        %3664 = vmatprep.subr.mxu0 0.0
        %3665 = vmatpush1.msra.mxu0 0.0
        %3666 = vmatprep.subr.mxu0 0.0
        %3667 = vmatpush1.msra.mxu0 0.0
        %3668 = vmatprep.subr.mxu0 0.0
        %3669 = vmatpush1.msra.mxu0 0.0
        %3670 = vmatprep.subr.mxu0 0.0
        %3671 = vmatpush1.msra.mxu0 0.0
        %3672 = vmatprep.subr.mxu0 0.0
        %3673 = vmatpush1.msra.mxu0 0.0
        %3674 = vmatprep.subr.mxu0 0.0
        %3675 = vmatpush1.msra.mxu0 0.0
        %3676 = vmatprep.subr.mxu0 0.0
        %3677 = vmatpush1.msra.mxu0 0.0
        %3678 = vmatprep.subr.mxu0 0.0
        %3679 = vmatpush1.msra.mxu0 0.0
        %3680 = vmatprep.subr.mxu0 0.0
        %3681 = vmatpush1.msra.mxu0 0.0
        %3682 = vmatprep.subr.mxu0 0.0
        %3683 = vmatpush1.msra.mxu0 0.0
        %3684 = vmatprep.subr.mxu0 0.0
        %3685 = vmatpush1.msra.mxu0 0.0
        %3686 = vmatprep.subr.mxu0 0.0
        %3687 = vmatpush1.msra.mxu0 0.0
        %3688 = vmatprep.subr.mxu0 0.0
        %3689 = vmatpush1.msra.mxu0 0.0
        %3690 = vmatprep.subr.mxu0 0.0
        %3691 = vmatpush1.msra.mxu0 0.0
        %3692 = vmatprep.subr.mxu0 0.0
        %3693 = vmatpush1.msra.mxu0 0.0
        %3694 = vmatprep.mubr.f32.mxu0 0.0
        %3695 = vmatmul.mubr.f32.gmra.mrb[0].mxu0 %v3535
        %v3696 = vpop.f32.mrb[0].mxu0
        %v3697 = vadd.f32 0.0, %v3696
        %v3698 = vpop.f32.mrb[0].mxu0
        %3699 = vmatprep.mubr.f32.mxu0 0.0
        %3700 = vmatmul.mubr.f32.gmra.mrb[0].mxu0 %v3538
        %v3701 = vpop.f32.mrb[0].mxu0
        %v3702 = vadd.f32 0.0, %v3701
        %v3703 = vpop.f32.mrb[0].mxu0
        %3704 = vmatprep.mubr.f32.mxu0 0.0
        %3705 = vmatmul.mubr.f32.gmra.mrb[0].mxu0 %v3541
        %v3706 = vpop.f32.mrb[0].mxu0
        %v3707 = vadd.f32 0.0, %v3706
        %v3708 = vpop.f32.mrb[0].mxu0
        %3709 = vdwg.mxu0
        %v3710 = vmul.f32 %v3697, 0.25
        %v3711 = vmul.f32 %v3702, 0.25
        %v3712 = vmul.f32 %v3707, 0.25
        %3713 = vst.msk [vmem:[%s396] sm:$0xff] %vm3626, %v3710
        %3714 = vst.msk [vmem:[%s396 + $0x8] sm:$0xff] %vm3626, %v3711
        %3715 = vst.msk [vmem:[%s396 + $0x10] sm:$0xff] %vm3626, %v3712
        %3716 = vmatprep.subr.mxu0 0.0
        %3717 = vmatpush1.msra.mxu0 %v3386
        %3718 = vmatprep.subr.mxu0 0.0
        %3719 = vmatpush1.msra.mxu0 %v3391
        %3720 = vmatprep.subr.mxu0 0.0
        %3721 = vmatpush1.msra.mxu0 %v3396
        %3722 = vmatprep.subr.mxu0 0.0
        %3723 = vmatpush1.msra.mxu0 %v3401
        %3724 = vmatprep.subr.mxu0 0.0
        %3725 = vmatpush1.msra.mxu0 %v3406
        %3726 = vmatprep.subr.mxu0 0.0
        %3727 = vmatpush1.msra.mxu0 %v3411
        %3728 = vmatprep.subr.mxu0 0.0
        %3729 = vmatpush1.msra.mxu0 0.0
        %3730 = vmatprep.subr.mxu0 0.0
        %3731 = vmatpush1.msra.mxu0 0.0
        %3732 = vmatprep.subr.mxu0 0.0
        %3733 = vmatpush1.msra.mxu0 0.0
        %3734 = vmatprep.subr.mxu0 0.0
        %3735 = vmatpush1.msra.mxu0 0.0
        %3736 = vmatprep.subr.mxu0 0.0
        %3737 = vmatpush1.msra.mxu0 0.0
        %3738 = vmatprep.subr.mxu0 0.0
        %3739 = vmatpush1.msra.mxu0 0.0
        %3740 = vmatprep.subr.mxu0 0.0
        %3741 = vmatpush1.msra.mxu0 0.0
        %3742 = vmatprep.subr.mxu0 0.0
        %3743 = vmatpush1.msra.mxu0 0.0
        %3744 = vmatprep.subr.mxu0 0.0
        %3745 = vmatpush1.msra.mxu0 0.0
        %3746 = vmatprep.subr.mxu0 0.0
        %3747 = vmatpush1.msra.mxu0 0.0
        %3748 = vmatprep.subr.mxu0 0.0
        %3749 = vmatpush1.msra.mxu0 0.0
        %3750 = vmatprep.subr.mxu0 0.0
        %3751 = vmatpush1.msra.mxu0 0.0
        %3752 = vmatprep.subr.mxu0 0.0
        %3753 = vmatpush1.msra.mxu0 0.0
        %3754 = vmatprep.subr.mxu0 0.0
        %3755 = vmatpush1.msra.mxu0 0.0
        %3756 = vmatprep.subr.mxu0 0.0
        %3757 = vmatpush1.msra.mxu0 0.0
        %3758 = vmatprep.subr.mxu0 0.0
        %3759 = vmatpush1.msra.mxu0 0.0
        %3760 = vmatprep.subr.mxu0 0.0
        %3761 = vmatpush1.msra.mxu0 0.0
        %3762 = vmatprep.subr.mxu0 0.0
        %3763 = vmatpush1.msra.mxu0 0.0
        %3764 = vmatprep.subr.mxu0 0.0
        %3765 = vmatpush1.msra.mxu0 0.0
        %3766 = vmatprep.subr.mxu0 0.0
        %3767 = vmatpush1.msra.mxu0 0.0
        %3768 = vmatprep.subr.mxu0 0.0
        %3769 = vmatpush1.msra.mxu0 0.0
        %3770 = vmatprep.subr.mxu0 0.0
        %3771 = vmatpush1.msra.mxu0 0.0
        %3772 = vmatprep.subr.mxu0 0.0
        %3773 = vmatpush1.msra.mxu0 0.0
        %3774 = vmatprep.subr.mxu0 0.0
        %3775 = vmatpush1.msra.mxu0 0.0
        %3776 = vmatprep.subr.mxu0 0.0
        %3777 = vmatpush1.msra.mxu0 0.0
        %3778 = vmatprep.subr.mxu0 0.0
        %3779 = vmatpush1.msra.mxu0 0.0
        %3780 = vmatprep.mubr.f32.mxu0 0.0
        %3781 = vmatmul.mubr.f32.gmra.mrb[0].mxu0 %v3535
        %v3782 = vpop.f32.mrb[0].mxu0
        %v3783 = vadd.f32 0.0, %v3782
        %v3784 = vpop.f32.mrb[0].mxu0
        %3785 = vmatprep.mubr.f32.mxu0 0.0
        %3786 = vmatmul.mubr.f32.gmra.mrb[0].mxu0 %v3538
        %v3787 = vpop.f32.mrb[0].mxu0
        %v3788 = vadd.f32 0.0, %v3787
        %v3789 = vpop.f32.mrb[0].mxu0
        %3790 = vmatprep.mubr.f32.mxu0 0.0
        %3791 = vmatmul.mubr.f32.gmra.mrb[0].mxu0 %v3541
        %v3792 = vpop.f32.mrb[0].mxu0
        %v3793 = vadd.f32 0.0, %v3792
        %v3794 = vpop.f32.mrb[0].mxu0
        %3795 = vdwg.mxu0
        %v3796 = vmul.f32 %v3783, 0.25
        %v3797 = vmul.f32 %v3788, 0.25
        %v3798 = vmul.f32 %v3793, 0.25
        %s3799 = scalar_lea.vmem %s389, 24 [#allocation8]
        %3800 = vst.msk [vmem:[%s3799] sm:$0xff] %vm3626, %v3796
        %3801 = vst.msk [vmem:[%s3799 + $0x8] sm:$0xff] %vm3626, %v3797
        %3802 = vst.msk [vmem:[%s3799 + $0x10] sm:$0xff] %vm3626, %v3798
        %3803 = vmatprep.subr.mxu0 0.0
        %3804 = vmatpush1.msra.mxu0 %v3476
        %3805 = vmatprep.subr.mxu0 0.0
        %3806 = vmatpush1.msra.mxu0 %v3481
        %3807 = vmatprep.subr.mxu0 0.0
        %3808 = vmatpush1.msra.mxu0 %v3486
        %3809 = vmatprep.subr.mxu0 0.0
        %3810 = vmatpush1.msra.mxu0 %v3491
        %3811 = vmatprep.subr.mxu0 0.0
        %3812 = vmatpush1.msra.mxu0 %v3496
        %3813 = vmatprep.subr.mxu0 0.0
        %3814 = vmatpush1.msra.mxu0 %v3501
        %3815 = vmatprep.subr.mxu0 0.0
        %3816 = vmatpush1.msra.mxu0 0.0
        %3817 = vmatprep.subr.mxu0 0.0
        %3818 = vmatpush1.msra.mxu0 0.0
        %3819 = vmatprep.subr.mxu0 0.0
        %3820 = vmatpush1.msra.mxu0 0.0
        %3821 = vmatprep.subr.mxu0 0.0
        %3822 = vmatpush1.msra.mxu0 0.0
        %3823 = vmatprep.subr.mxu0 0.0
        %3824 = vmatpush1.msra.mxu0 0.0
        %3825 = vmatprep.subr.mxu0 0.0
        %3826 = vmatpush1.msra.mxu0 0.0
        %3827 = vmatprep.subr.mxu0 0.0
        %3828 = vmatpush1.msra.mxu0 0.0
        %3829 = vmatprep.subr.mxu0 0.0
        %3830 = vmatpush1.msra.mxu0 0.0
        %3831 = vmatprep.subr.mxu0 0.0
        %3832 = vmatpush1.msra.mxu0 0.0
        %3833 = vmatprep.subr.mxu0 0.0
        %3834 = vmatpush1.msra.mxu0 0.0
        %3835 = vmatprep.subr.mxu0 0.0
        %3836 = vmatpush1.msra.mxu0 0.0
        %3837 = vmatprep.subr.mxu0 0.0
        %3838 = vmatpush1.msra.mxu0 0.0
        %3839 = vmatprep.subr.mxu0 0.0
        %3840 = vmatpush1.msra.mxu0 0.0
        %3841 = vmatprep.subr.mxu0 0.0
        %3842 = vmatpush1.msra.mxu0 0.0
        %3843 = vmatprep.subr.mxu0 0.0
        %3844 = vmatpush1.msra.mxu0 0.0
        %3845 = vmatprep.subr.mxu0 0.0
        %3846 = vmatpush1.msra.mxu0 0.0
        %3847 = vmatprep.subr.mxu0 0.0
        %3848 = vmatpush1.msra.mxu0 0.0
        %3849 = vmatprep.subr.mxu0 0.0
        %3850 = vmatpush1.msra.mxu0 0.0
        %3851 = vmatprep.subr.mxu0 0.0
        %3852 = vmatpush1.msra.mxu0 0.0
        %3853 = vmatprep.subr.mxu0 0.0
        %3854 = vmatpush1.msra.mxu0 0.0
        %3855 = vmatprep.subr.mxu0 0.0
        %3856 = vmatpush1.msra.mxu0 0.0
        %3857 = vmatprep.subr.mxu0 0.0
        %3858 = vmatpush1.msra.mxu0 0.0
        %3859 = vmatprep.subr.mxu0 0.0
        %3860 = vmatpush1.msra.mxu0 0.0
        %3861 = vmatprep.subr.mxu0 0.0
        %3862 = vmatpush1.msra.mxu0 0.0
        %3863 = vmatprep.subr.mxu0 0.0
        %3864 = vmatpush1.msra.mxu0 0.0
        %3865 = vmatprep.subr.mxu0 0.0
        %3866 = vmatpush1.msra.mxu0 0.0
        %3867 = vmatprep.mubr.f32.mxu0 0.0
        %3868 = vmatmul.mubr.f32.gmra.mrb[0].mxu0 %v3535
        %v3869 = vpop.f32.mrb[0].mxu0
        %v3870 = vadd.f32 0.0, %v3869
        %v3871 = vpop.f32.mrb[0].mxu0
        %3872 = vmatprep.mubr.f32.mxu0 0.0
        %3873 = vmatmul.mubr.f32.gmra.mrb[0].mxu0 %v3538
        %v3874 = vpop.f32.mrb[0].mxu0
        %v3875 = vadd.f32 0.0, %v3874
        %v3876 = vpop.f32.mrb[0].mxu0
        %3877 = vmatprep.mubr.f32.mxu0 0.0
        %3878 = vmatmul.mubr.f32.gmra.mrb[0].mxu0 %v3541
        %v3879 = vpop.f32.mrb[0].mxu0
        %v3880 = vadd.f32 0.0, %v3879
        %v3881 = vpop.f32.mrb[0].mxu0
        %3882 = vdwg.mxu0
        %v3883 = vmul.f32 %v3870, 0.25
        %v3884 = vmul.f32 %v3875, 0.25
        %v3885 = vmul.f32 %v3880, 0.25
        %s3886 = scalar_lea.vmem %s396, 24 [#allocation9]
        %3887 = vst.msk [vmem:[%s3886] sm:$0xff] %vm3626, %v3883
        %3888 = vst.msk [vmem:[%s3886 + $0x8] sm:$0xff] %vm3626, %v3884
        %3889 = vst.msk [vmem:[%s3886 + $0x10] sm:$0xff] %vm3626, %v3885
        %3890 = vmatprep.subr.mxu0 0.0
        %3891 = vmatpush1.msra.mxu0 %v3416
        %3892 = vmatprep.subr.mxu0 0.0
        %3893 = vmatpush1.msra.mxu0 %v3421
        %3894 = vmatprep.subr.mxu0 0.0
        %3895 = vmatpush1.msra.mxu0 %v3426
        %3896 = vmatprep.subr.mxu0 0.0
        %3897 = vmatpush1.msra.mxu0 %v3431
        %3898 = vmatprep.subr.mxu0 0.0
        %3899 = vmatpush1.msra.mxu0 %v3436
        %3900 = vmatprep.subr.mxu0 0.0
        %3901 = vmatpush1.msra.mxu0 %v3441
        %3902 = vmatprep.subr.mxu0 0.0
        %3903 = vmatpush1.msra.mxu0 0.0
        %3904 = vmatprep.subr.mxu0 0.0
        %3905 = vmatpush1.msra.mxu0 0.0
        %3906 = vmatprep.subr.mxu0 0.0
        %3907 = vmatpush1.msra.mxu0 0.0
        %3908 = vmatprep.subr.mxu0 0.0
        %3909 = vmatpush1.msra.mxu0 0.0
        %3910 = vmatprep.subr.mxu0 0.0
        %3911 = vmatpush1.msra.mxu0 0.0
        %3912 = vmatprep.subr.mxu0 0.0
        %3913 = vmatpush1.msra.mxu0 0.0
        %3914 = vmatprep.subr.mxu0 0.0
        %3915 = vmatpush1.msra.mxu0 0.0
        %3916 = vmatprep.subr.mxu0 0.0
        %3917 = vmatpush1.msra.mxu0 0.0
        %3918 = vmatprep.subr.mxu0 0.0
        %3919 = vmatpush1.msra.mxu0 0.0
        %3920 = vmatprep.subr.mxu0 0.0
        %3921 = vmatpush1.msra.mxu0 0.0
        %3922 = vmatprep.subr.mxu0 0.0
        %3923 = vmatpush1.msra.mxu0 0.0
        %3924 = vmatprep.subr.mxu0 0.0
        %3925 = vmatpush1.msra.mxu0 0.0
        %3926 = vmatprep.subr.mxu0 0.0
        %3927 = vmatpush1.msra.mxu0 0.0
        %3928 = vmatprep.subr.mxu0 0.0
        %3929 = vmatpush1.msra.mxu0 0.0
        %3930 = vmatprep.subr.mxu0 0.0
        %3931 = vmatpush1.msra.mxu0 0.0
        %3932 = vmatprep.subr.mxu0 0.0
        %3933 = vmatpush1.msra.mxu0 0.0
        %3934 = vmatprep.subr.mxu0 0.0
        %3935 = vmatpush1.msra.mxu0 0.0
        %3936 = vmatprep.subr.mxu0 0.0
        %3937 = vmatpush1.msra.mxu0 0.0
        %3938 = vmatprep.subr.mxu0 0.0
        %3939 = vmatpush1.msra.mxu0 0.0
        %3940 = vmatprep.subr.mxu0 0.0
        %3941 = vmatpush1.msra.mxu0 0.0
        %3942 = vmatprep.subr.mxu0 0.0
        %3943 = vmatpush1.msra.mxu0 0.0
        %3944 = vmatprep.subr.mxu0 0.0
        %3945 = vmatpush1.msra.mxu0 0.0
        %3946 = vmatprep.subr.mxu0 0.0
        %3947 = vmatpush1.msra.mxu0 0.0
        %3948 = vmatprep.subr.mxu0 0.0
        %3949 = vmatpush1.msra.mxu0 0.0
        %3950 = vmatprep.subr.mxu0 0.0
        %3951 = vmatpush1.msra.mxu0 0.0
        %3952 = vmatprep.subr.mxu0 0.0
        %3953 = vmatpush1.msra.mxu0 0.0
        %3954 = vmatprep.mubr.f32.mxu0 0.0
        %3955 = vmatmul.mubr.f32.gmra.mrb[0].mxu0 %v3535
        %v3956 = vpop.f32.mrb[0].mxu0
        %v3957 = vadd.f32 0.0, %v3956
        %v3958 = vpop.f32.mrb[0].mxu0
        %3959 = vmatprep.mubr.f32.mxu0 0.0
        %3960 = vmatmul.mubr.f32.gmra.mrb[0].mxu0 %v3538
        %v3961 = vpop.f32.mrb[0].mxu0
        %v3962 = vadd.f32 0.0, %v3961
        %v3963 = vpop.f32.mrb[0].mxu0
        %3964 = vmatprep.mubr.f32.mxu0 0.0
        %3965 = vmatmul.mubr.f32.gmra.mrb[0].mxu0 %v3541
        %v3966 = vpop.f32.mrb[0].mxu0
        %v3967 = vadd.f32 0.0, %v3966
        %v3968 = vpop.f32.mrb[0].mxu0
        %3969 = vdwg.mxu0
        %v3970 = vmul.f32 %v3957, 0.25
        %v3971 = vmul.f32 %v3962, 0.25
        %v3972 = vmul.f32 %v3967, 0.25
        %s3973 = scalar_lea.vmem %s389, 48 [#allocation8]
        %3974 = vst.msk [vmem:[%s3973] sm:$0xff] %vm3626, %v3970
        %3975 = vst.msk [vmem:[%s3973 + $0x8] sm:$0xff] %vm3626, %v3971
        %3976 = vst.msk [vmem:[%s3973 + $0x10] sm:$0xff] %vm3626, %v3972
        %3977 = vmatprep.subr.mxu0 0.0
        %3978 = vmatpush1.msra.mxu0 %v3506
        %3979 = vmatprep.subr.mxu0 0.0
        %3980 = vmatpush1.msra.mxu0 %v3511
        %3981 = vmatprep.subr.mxu0 0.0
        %3982 = vmatpush1.msra.mxu0 %v3516
        %3983 = vmatprep.subr.mxu0 0.0
        %3984 = vmatpush1.msra.mxu0 %v3521
        %3985 = vmatprep.subr.mxu0 0.0
        %3986 = vmatpush1.msra.mxu0 %v3526
        %3987 = vmatprep.subr.mxu0 0.0
        %3988 = vmatpush1.msra.mxu0 %v3531
        %3989 = vmatprep.subr.mxu0 0.0
        %3990 = vmatpush1.msra.mxu0 0.0
        %3991 = vmatprep.subr.mxu0 0.0
        %3992 = vmatpush1.msra.mxu0 0.0
        %3993 = vmatprep.subr.mxu0 0.0
        %3994 = vmatpush1.msra.mxu0 0.0
        %3995 = vmatprep.subr.mxu0 0.0
        %3996 = vmatpush1.msra.mxu0 0.0
        %3997 = vmatprep.subr.mxu0 0.0
        %3998 = vmatpush1.msra.mxu0 0.0
        %3999 = vmatprep.subr.mxu0 0.0
        %4000 = vmatpush1.msra.mxu0 0.0
        %4001 = vmatprep.subr.mxu0 0.0
        %4002 = vmatpush1.msra.mxu0 0.0
        %4003 = vmatprep.subr.mxu0 0.0
        %4004 = vmatpush1.msra.mxu0 0.0
        %4005 = vmatprep.subr.mxu0 0.0
        %4006 = vmatpush1.msra.mxu0 0.0
        %4007 = vmatprep.subr.mxu0 0.0
        %4008 = vmatpush1.msra.mxu0 0.0
        %4009 = vmatprep.subr.mxu0 0.0
        %4010 = vmatpush1.msra.mxu0 0.0
        %4011 = vmatprep.subr.mxu0 0.0
        %4012 = vmatpush1.msra.mxu0 0.0
        %4013 = vmatprep.subr.mxu0 0.0
        %4014 = vmatpush1.msra.mxu0 0.0
        %4015 = vmatprep.subr.mxu0 0.0
        %4016 = vmatpush1.msra.mxu0 0.0
        %4017 = vmatprep.subr.mxu0 0.0
        %4018 = vmatpush1.msra.mxu0 0.0
        %4019 = vmatprep.subr.mxu0 0.0
        %4020 = vmatpush1.msra.mxu0 0.0
        %4021 = vmatprep.subr.mxu0 0.0
        %4022 = vmatpush1.msra.mxu0 0.0
        %4023 = vmatprep.subr.mxu0 0.0
        %4024 = vmatpush1.msra.mxu0 0.0
        %4025 = vmatprep.subr.mxu0 0.0
        %4026 = vmatpush1.msra.mxu0 0.0
        %4027 = vmatprep.subr.mxu0 0.0
        %4028 = vmatpush1.msra.mxu0 0.0
        %4029 = vmatprep.subr.mxu0 0.0
        %4030 = vmatpush1.msra.mxu0 0.0
        %4031 = vmatprep.subr.mxu0 0.0
        %4032 = vmatpush1.msra.mxu0 0.0
        %4033 = vmatprep.subr.mxu0 0.0
        %4034 = vmatpush1.msra.mxu0 0.0
        %4035 = vmatprep.subr.mxu0 0.0
        %4036 = vmatpush1.msra.mxu0 0.0
        %4037 = vmatprep.subr.mxu0 0.0
        %4038 = vmatpush1.msra.mxu0 0.0
        %4039 = vmatprep.subr.mxu0 0.0
        %4040 = vmatpush1.msra.mxu0 0.0
        %4041 = vmatprep.mubr.f32.mxu0 0.0
        %4042 = vmatmul.mubr.f32.gmra.mrb[0].mxu0 %v3535
        %v4043 = vpop.f32.mrb[0].mxu0
        %v4044 = vadd.f32 0.0, %v4043
        %v4045 = vpop.f32.mrb[0].mxu0
        %4046 = vmatprep.mubr.f32.mxu0 0.0
        %4047 = vmatmul.mubr.f32.gmra.mrb[0].mxu0 %v3538
        %v4048 = vpop.f32.mrb[0].mxu0
        %v4049 = vadd.f32 0.0, %v4048
        %v4050 = vpop.f32.mrb[0].mxu0
        %4051 = vmatprep.mubr.f32.mxu0 0.0
        %4052 = vmatmul.mubr.f32.gmra.mrb[0].mxu0 %v3541
        %v4053 = vpop.f32.mrb[0].mxu0
        %v4054 = vadd.f32 0.0, %v4053
        %v4055 = vpop.f32.mrb[0].mxu0
        %4056 = vdwg.mxu0
        %v4057 = vmul.f32 %v4044, 0.25
        %v4058 = vmul.f32 %v4049, 0.25
        %v4059 = vmul.f32 %v4054, 0.25
        %s4060 = scalar_lea.vmem %s396, 48 [#allocation9]
        %4061 = vst.msk [vmem:[%s4060] sm:$0xff] %vm3626, %v4057
        %4062 = vst.msk [vmem:[%s4060 + $0x8] sm:$0xff] %vm3626, %v4058
        %4063 = vst.msk [vmem:[%s4060 + $0x10] sm:$0xff] %vm3626, %v4059
        %p4064 = scmp.lt.s32.totalorder %s32, 1
        %s4065 = scalar_select %p4064, %s32, 1
        %s4066 = smul.addr %s4065, 4
        %s4067 = scalar_lea.vmem %s6, %s4066
        %s4068 = sand.u32 %s202, 1
        %s4069 = scalar_lea.sflag [#allocation4], %s4068
        %s4070 = sand.u32 %s202, 1
        %s4071 = smul.addr %s4070, 72
        %s4072 = scalar_lea.vmem [#allocation8], %s4071
        %s4073 = sand.u32 %s228, 1
        %s4074 = scalar_lea.sflag [#allocation10], %s4073
        %s4075 = sand.u32 %s228, 1
        %s4076 = smul.addr %s4075, 72
        %s4077 = scalar_lea.vmem [#allocation9], %s4076
        // Predicated region
        $region57: #{tpu_custom_call.1} parent=43 // pred_check
          %p4078 = pneg %p186
        $region58: #{tpu_custom_call.1} parent=43 // pred_check_branch
          %4080 = sbr.rel (%p4078) target = $region60
        $region59: #{tpu_custom_call.1} parent=43 // pred_region
          _
        $region60: #{tpu_custom_call.1} parent=43 // pred_fallthru
          _
        // Predicated region
        $region61: #{tpu_custom_call.1} parent=43 // pred_check
          %p4081 = pneg %p212
        $region62: #{tpu_custom_call.1} parent=43 // pred_check_branch
          %4083 = sbr.rel (%p4081) target = $region64
        $region63: #{tpu_custom_call.1} parent=43 // pred_region
          %s4084 = smul.u32 3, %s32
          %s4086 = ssub.s32 1152, 1152
          %4087 = vsyncadd %s4069, %s4086
          %s4088 = smul.addr %s4084, 3
          %s4089 = smul.addr %s4088, 128
          %s4090 = scalar_lea.hbm %s7, %s4089
          %s4091 = sshll.u32 %s4072, 4
          %s4092 = int_to_ptr.vmem [resolvable:$true] %s4091
          %4097 = dma.vmem_to_hbm [thread:$0]  %s4092, 1152, %s4090, %s4069, 128, 128, 8
        $region64: #{tpu_custom_call.1} parent=43 // pred_fallthru
          _
        // Predicated region
        $region65: #{tpu_custom_call.1} parent=43 // pred_check
          %p4098 = pneg %p238
        $region66: #{tpu_custom_call.1} parent=43 // pred_check_branch
          %4100 = sbr.rel (%p4098) target = $region68
        $region67: #{tpu_custom_call.1} parent=43 // pred_region
          %s4101 = smul.u32 3, %s32
          %s4103 = ssub.s32 1152, 1152
          %4104 = vsyncadd %s4074, %s4103
          %s4105 = smul.addr %s4101, 3
          %s4106 = smul.addr %s4105, 128
          %s4107 = scalar_lea.hbm %s8, %s4106
          %s4108 = sshll.u32 %s4077, 4
          %s4109 = int_to_ptr.vmem [resolvable:$true] %s4108
          %4114 = dma.vmem_to_hbm [thread:$0]  %s4109, 1152, %s4107, %s4074, 128, 128, 8
        $region68: #{tpu_custom_call.1} parent=43 // pred_fallthru
          _
      $region44: #{tpu_custom_call.1} parent=5 // pred_fallthru
        _
      %p4115 = scmp.le.s32.totalorder 2, %s27
      // Predicated region
      $region69: #{tpu_custom_call.1} parent=5 // pred_check
        %p4116 = pneg %p4115
      $region70: #{tpu_custom_call.1} parent=5 // pred_check_branch
        %4118 = sbr.rel (%p4116) target = $region72
      $region71: #{tpu_custom_call.1} parent=5 // pred_region
        %s4119 = ssub.s32 %s27, 2
        // Predicated region
        $region73: #{tpu_custom_call.1} parent=71 // pred_check
          %p4120 = pneg %p192
        $region74: #{tpu_custom_call.1} parent=71 // pred_check_branch
          %4122 = sbr.rel (%p4120) target = $region76
        $region75: #{tpu_custom_call.1} parent=71 // pred_region
          %p4123 = scmp.lt.s32.totalorder %s33, 1
          %s4124 = scalar_select %p4123, %s33, 1
          %s4125 = smul.addr %s4124, 4
          %s4126 = scalar_lea.vmem %s6, %s4125
        $region76: #{tpu_custom_call.1} parent=71 // pred_fallthru
          _
        // Predicated region
        $region77: #{tpu_custom_call.1} parent=71 // pred_check
          %p4127 = pneg %p218
        $region78: #{tpu_custom_call.1} parent=71 // pred_check_branch
          %4129 = sbr.rel (%p4127) target = $region80
        $region79: #{tpu_custom_call.1} parent=71 // pred_region
          %s4130 = sand.u32 %s203, 1
          %s4131 = scalar_lea.sflag [#allocation4], %s4130
          %s4132 = sand.u32 %s203, 1
          %s4133 = smul.addr %s4132, 72
          %s4134 = scalar_lea.vmem [#allocation8], %s4133
          %4135 = dma.done %s4131, 1152
        $region80: #{tpu_custom_call.1} parent=71 // pred_fallthru
          _
        // Predicated region
        $region81: #{tpu_custom_call.1} parent=71 // pred_check
          %p4136 = pneg %p244
        $region82: #{tpu_custom_call.1} parent=71 // pred_check_branch
          %4138 = sbr.rel (%p4136) target = $region84
        $region83: #{tpu_custom_call.1} parent=71 // pred_region
          %s4139 = sand.u32 %s229, 1
          %s4140 = scalar_lea.sflag [#allocation10], %s4139
          %s4141 = sand.u32 %s229, 1
          %s4142 = smul.addr %s4141, 72
          %s4143 = scalar_lea.vmem [#allocation9], %s4142
          %4144 = dma.done %s4140, 1152
        $region84: #{tpu_custom_call.1} parent=71 // pred_fallthru
          _
      $region72: #{tpu_custom_call.1} parent=5 // pred_fallthru
        _
    $region6: #{tpu_custom_call.1} parent=1 // loop_footer
      %s31 = sadd.s32 1, %s27
    $region7: #{tpu_custom_call.1} parent=1 // loop_footer_branch
      %26 = sbr.rel target = $region3
    $region8: #{tpu_custom_call.1} parent=1 // loop_exit
      _
    %4145 = vsyncpa [#allocation3], 1
    %s4146 = scalar_lea.sflag [#allocation3], 1
    %4147 = vsyncpa %s4146, 1
    %4148 = vsyncpa [#allocation6], 1
    %s4149 = scalar_lea.sflag [#allocation6], 1
    %4150 = vsyncpa %s4149, 1
    %4151 = vsyncpa [#allocation4], 1
    %s4152 = scalar_lea.sflag [#allocation4], 1
    %4153 = vsyncpa %s4152, 1
    %4154 = vsyncpa [#allocation10], 1
    %s4155 = scalar_lea.sflag [#allocation10], 1
    %4156 = vsyncpa %s4155, 1

</llo_original>
